<compile_context>
chip_gen: v7x
topology: tpu7x:2x2x1
jax: 0.10.0
libtpu: 0.0.40
codegen_flags: <defaults>
</compile_context>

<pallas_src>
import jax
import jax.numpy as jnp
from jax.experimental import pallas as pl
from jax.experimental.pallas import tpu as pltpu

NHEAD = 8
LN_EPS = 1e-5


# ----------------------------------------------------------------------------
# Pallas kernel: one full TransformerEncoderLayer for ONE sequence (grid step).
# x block: (1, S, D).  All weights resident in VMEM (constant index maps).
# ----------------------------------------------------------------------------
def encoder_layer_kernel(x_ref,
                         wq_ref, bq_ref, wk_ref, bk_ref, wv_ref, bv_ref,
                         wo_ref, bo_ref, g1_ref, be1_ref,
                         w1_ref, bf1_ref, w2_ref, bf2_ref, g2_ref, be2_ref,
                         o_ref):
    x = x_ref[0]                                   # (S, D) f32
    S, D = x.shape
    H = NHEAD
    hd = D // H
    scale = 1.0 / jnp.sqrt(jnp.float32(hd))

    xb = x.astype(jnp.bfloat16)
    xh = jnp.broadcast_to(xb[None], (H, S, D))     # (H, S, D) bf16

    # Per-head QKV projections: (H,S,D) @ (H,D,hd) -> (H,S,hd), f32 accum.
    # Total FLOPs identical to the fused (S,D)@(D,D) projection.
    q = jnp.einsum('hsd,hde->hse', xh, wq_ref[...],
                   preferred_element_type=jnp.float32) + bq_ref[...]
    k = jnp.einsum('hsd,hde->hse', xh, wk_ref[...],
                   preferred_element_type=jnp.float32) + bk_ref[...]
    v = jnp.einsum('hsd,hde->hse', xh, wv_ref[...],
                   preferred_element_type=jnp.float32) + bv_ref[...]

    # Attention scores per head, contraction over hd only (no mask needed --
    # each grid step is a single sequence).
    s = jnp.einsum('hqe,hke->hqk', q.astype(jnp.bfloat16),
                   k.astype(jnp.bfloat16),
                   preferred_element_type=jnp.float32) * scale    # (H, S, S)

    # Softmax over keys (f32 statistics), EUP reciprocal for the denominator.
    s = s - jnp.max(s, axis=-1, keepdims=True)
    p = jnp.exp(s)
    p = p * pl.reciprocal(jnp.sum(p, axis=-1, keepdims=True), approx=True)

    # P @ V per head.
    ctx = jnp.einsum('hqk,hke->hqe', p.astype(jnp.bfloat16),
                     v.astype(jnp.bfloat16),
                     preferred_element_type=jnp.float32)          # (H, S, hd)

    # Output projection: sum over heads of ctx_h @ Wo_h  ==  concat(ctx) @ Wo.
    attn_h = jnp.einsum('hse,hed->hsd', ctx.astype(jnp.bfloat16), wo_ref[...],
                        preferred_element_type=jnp.float32)       # (H, S, D)
    attn = jnp.sum(attn_h, axis=0) + bo_ref[...]                  # (S, D)

    def layernorm(y, g, b):
        mu = jnp.mean(y, axis=-1, keepdims=True)
        var = jnp.mean((y - mu) ** 2, axis=-1, keepdims=True)
        return (y - mu) * jax.lax.rsqrt(var + LN_EPS) * g + b

    x1 = layernorm(x + attn, g1_ref[...], be1_ref[...])

    # Feed-forward (ReLU activation, as in the PyTorch default).
    h1 = jnp.dot(x1.astype(jnp.bfloat16), w1_ref[...],
                 preferred_element_type=jnp.float32) + bf1_ref[...]
    h1 = jnp.maximum(h1, 0.0)
    h2 = jnp.dot(h1.astype(jnp.bfloat16), w2_ref[...],
                 preferred_element_type=jnp.float32) + bf2_ref[...]

    o_ref[0] = layernorm(x1 + h2, g2_ref[...], be2_ref[...])


_PARAM_ORDER = ("wq", "bq", "wk", "bk", "wv", "bv", "wo", "bo",
                "g1", "be1", "w1", "bf1", "w2", "bf2", "g2", "be2")


# ----------------------------------------------------------------------------
# One-time host/XLA-side parameter relayout (call at init/load time, NOT per
# forward): transpose nn.Linear weights (out,in)->(in,out), split Q/K/V/O into
# per-head layouts, cast matmul operands to bf16.  LN params / biases stay f32.
# ----------------------------------------------------------------------------
def prepare_layer_params(p):
    D = p["wq"].shape[0]
    F = p["w1"].shape[0]
    hd = D // NHEAD
    bf16 = jnp.bfloat16
    f32 = jnp.float32

    def qkv_heads(w):          # torch (out=D, in=D) -> (H, D, hd)
        return jnp.transpose(w.T.reshape(D, NHEAD, hd), (1, 0, 2)).astype(bf16)

    return {
        "wq": qkv_heads(p["wq"]),
        "bq": p["bq"].reshape(NHEAD, 1, hd).astype(f32),
        "wk": qkv_heads(p["wk"]),
        "bk": p["bk"].reshape(NHEAD, 1, hd).astype(f32),
        "wv": qkv_heads(p["wv"]),
        "bv": p["bv"].reshape(NHEAD, 1, hd).astype(f32),
        "wo": p["wo"].T.reshape(NHEAD, hd, D).astype(bf16),   # (H, hd, D)
        "bo": p["bo"].reshape(1, D).astype(f32),
        "g1": p["g1"].reshape(1, D).astype(f32),
        "be1": p["be1"].reshape(1, D).astype(f32),
        "w1": p["w1"].T.astype(bf16),                         # (D, F)
        "bf1": p["bf1"].reshape(1, F).astype(f32),
        "w2": p["w2"].T.astype(bf16),                         # (F, D)
        "bf2": p["bf2"].reshape(1, D).astype(f32),
        "g2": p["g2"].reshape(1, D).astype(f32),
        "be2": p["be2"].reshape(1, D).astype(f32),
    }


def prepare_params(layer_params):
    return [prepare_layer_params(p) for p in layer_params]


def _vmem_limit_bytes(param_args, seq_len, d_model):
    weight_bytes = sum(int(a.size) * a.dtype.itemsize for a in param_args)
    act_bytes = 4 * seq_len * d_model * 4                       # x/out tiles, 2x buffered
    interm = 16 * NHEAD * seq_len * max(seq_len, d_model) * 4   # headroom for intermediates
    want = 2 * weight_bytes + act_bytes + interm + (8 << 20)
    # Stay well under v7x's 64 MiB physical VMEM; above every default scoped limit.
    return int(min(48 << 20, max(24 << 20, want)))


def encoder_layer(x, prepped):
    """x: (B, S, D) f32 -> (B, S, D) f32.  Grid over the batch axis."""
    B, S, D = x.shape
    assert D % NHEAD == 0

    args = [prepped[name] for name in _PARAM_ORDER]

    def resident_spec(arr):
        zeros = (0,) * arr.ndim
        return pl.BlockSpec(arr.shape, lambda b: zeros)

    in_specs = [pl.BlockSpec((1, S, D), lambda b: (b, 0, 0))]
    in_specs += [resident_spec(a) for a in args]
    out_specs = pl.BlockSpec((1, S, D), lambda b: (b, 0, 0))

    # NOTE: D=32 < 128 lanes means stores are lane-masked; at production
    # d_model (multiple of 128) the output is already lane-dense.
    return pl.pallas_call(
        encoder_layer_kernel,
        out_shape=jax.ShapeDtypeStruct((B, S, D), jnp.float32),
        grid=(B,),
        in_specs=in_specs,
        out_specs=out_specs,
        compiler_params=pltpu.CompilerParams(
            dimension_semantics=("parallel",),
            vmem_limit_bytes=_vmem_limit_bytes(args, S, D)),
    )(x, *args)


# ----------------------------------------------------------------------------
# Parameter init (deterministic, synthetic — not a checkpoint load).
# Weights use the PyTorch nn.Linear convention (out_features, in_features).
# ----------------------------------------------------------------------------
def init_layer_params(key, d_model, dim_ff):
    ks = jax.random.split(key, 6)
    sc = 0.02
    f32 = jnp.float32
    return {
        "wq": sc * jax.random.normal(ks[0], (d_model, d_model), f32),
        "bq": jnp.zeros((d_model,), f32),
        "wk": sc * jax.random.normal(ks[1], (d_model, d_model), f32),
        "bk": jnp.zeros((d_model,), f32),
        "wv": sc * jax.random.normal(ks[2], (d_model, d_model), f32),
        "bv": jnp.zeros((d_model,), f32),
        "wo": sc * jax.random.normal(ks[3], (d_model, d_model), f32),
        "bo": jnp.zeros((d_model,), f32),
        "g1": jnp.ones((d_model,), f32),
        "be1": jnp.zeros((d_model,), f32),
        "w1": sc * jax.random.normal(ks[4], (dim_ff, d_model), f32),
        "bf1": jnp.zeros((dim_ff,), f32),
        "w2": sc * jax.random.normal(ks[5], (d_model, dim_ff), f32),
        "bf2": jnp.zeros((d_model,), f32),
        "g2": jnp.ones((d_model,), f32),
        "be2": jnp.zeros((d_model,), f32),
    }


def init_params(key, n_layers, d_model, dim_ff):
    keys = jax.random.split(key, n_layers)
    return [init_layer_params(k, d_model, dim_ff) for k in keys]


# ----------------------------------------------------------------------------
# Core forward (glue in plain JAX, hot path in Pallas).  `prepped_layers`
# comes from prepare_params() done once at init time.
# ----------------------------------------------------------------------------
def core_forward(embedded_scalar, embedded_entity, embedded_spatial,
                 prepped_layers, batch_size, sequence_length):
    x = jnp.concatenate([embedded_scalar, embedded_entity, embedded_spatial],
                        axis=-1)
    d_model = x.shape[-1]
    x = x.reshape(batch_size, sequence_length, d_model)
    for p in prepped_layers:
        x = encoder_layer(x, p)
    return x.reshape(batch_size * sequence_length, d_model)


# ----------------------------------------------------------------------------
# Pure-JAX f32 reference (same math, no Pallas) for a sanity check.
# ----------------------------------------------------------------------------
def _ref_layer(x, p):
    B, S, D = x.shape
    hd = D // NHEAD
    scale = 1.0 / jnp.sqrt(jnp.float32(hd))

    def ln(y, g, b):
        mu = jnp.mean(y, axis=-1, keepdims=True)
        var = jnp.mean((y - mu) ** 2, axis=-1, keepdims=True)
        return (y - mu) * jax.lax.rsqrt(var + LN_EPS) * g + b

    q = x @ p["wq"].T + p["bq"]
    k = x @ p["wk"].T + p["bk"]
    v = x @ p["wv"].T + p["bv"]
    q = q.reshape(B, S, NHEAD, hd).transpose(0, 2, 1, 3)
    k = k.reshape(B, S, NHEAD, hd).transpose(0, 2, 1, 3)
    v = v.reshape(B, S, NHEAD, hd).transpose(0, 2, 1, 3)
    s = jnp.einsum("bhqd,bhkd->bhqk", q, k) * scale
    pmat = jax.nn.softmax(s, axis=-1)
    attn = jnp.einsum("bhqk,bhkd->bhqd", pmat, v)
    attn = attn.transpose(0, 2, 1, 3).reshape(B, S, D)
    attn = attn @ p["wo"].T + p["bo"]
    x1 = ln(x + attn, p["g1"], p["be1"])
    h = jnp.maximum(x1 @ p["w1"].T + p["bf1"], 0.0)
    h = h @ p["w2"].T + p["bf2"]
    return ln(x1 + h, p["g2"], p["be2"])


def core_ref(es, ee, esp, layer_params, batch_size, sequence_length):
    x = jnp.concatenate([es, ee, esp], axis=-1)
    d_model = x.shape[-1]
    x = x.reshape(batch_size, sequence_length, d_model)
    for p in layer_params:
        x = _ref_layer(x, p)
    return x.reshape(batch_size * sequence_length, d_model)


if __name__ == "__main__":
    B, S = 2, 8                       # batch_size, sequence_length
    D_SCALAR, D_ENTITY, D_SPATIAL = 8, 16, 8
    D_MODEL = D_SCALAR + D_ENTITY + D_SPATIAL   # 32 (divisible by nhead=8)
    DIM_FF = 64
    N_LAYERS = 2

    key = jax.random.PRNGKey(0)
    k1, k2, k3, kp = jax.random.split(key, 4)
    embedded_scalar = jax.random.normal(k1, (B * S, D_SCALAR), jnp.float32)
    embedded_entity = jax.random.normal(k2, (B * S, D_ENTITY), jnp.float32)
    embedded_spatial = jax.random.normal(k3, (B * S, D_SPATIAL), jnp.float32)

    params = init_params(kp, N_LAYERS, D_MODEL, DIM_FF)
    prepped = prepare_params(params)          # one-time relayout at init time

    out = core_forward(embedded_scalar, embedded_entity, embedded_spatial,
                       prepped, B, S)
    out = jax.block_until_ready(out)

    ref = core_ref(embedded_scalar, embedded_entity, embedded_spatial,
                   params, B, S)
    assert out.shape == (B * S, D_MODEL)
    # bf16 MXU operands (f32 accumulation) vs. pure-f32 reference -> loosened tol.
    max_diff = float(jnp.max(jnp.abs(out - ref)))
    assert jnp.allclose(out, ref, rtol=2e-2, atol=2e-2), max_diff

    print("KERNEL_OK")
</pallas_src>

<mosaic_0001>
module attributes {stable_mosaic.version = 11 : i64} {
  func.func @encoder_layer_kernel(%arg0: i32, %arg1: memref<1x8x32xf32, #tpu.memory_space<vmem>>, %arg2: memref<8x32x4xbf16, #tpu.memory_space<vmem>>, %arg3: memref<8x1x4xf32, #tpu.memory_space<vmem>>, %arg4: memref<8x32x4xbf16, #tpu.memory_space<vmem>>, %arg5: memref<8x1x4xf32, #tpu.memory_space<vmem>>, %arg6: memref<8x32x4xbf16, #tpu.memory_space<vmem>>, %arg7: memref<8x1x4xf32, #tpu.memory_space<vmem>>, %arg8: memref<8x4x32xbf16, #tpu.memory_space<vmem>>, %arg9: memref<1x32xf32, #tpu.memory_space<vmem>>, %arg10: memref<1x32xf32, #tpu.memory_space<vmem>>, %arg11: memref<1x32xf32, #tpu.memory_space<vmem>>, %arg12: memref<32x64xbf16, #tpu.memory_space<vmem>>, %arg13: memref<1x64xf32, #tpu.memory_space<vmem>>, %arg14: memref<64x32xbf16, #tpu.memory_space<vmem>>, %arg15: memref<1x32xf32, #tpu.memory_space<vmem>>, %arg16: memref<1x32xf32, #tpu.memory_space<vmem>>, %arg17: memref<1x32xf32, #tpu.memory_space<vmem>>, %arg18: memref<1x8x32xf32, #tpu.memory_space<vmem>>) attributes {dimension_semantics = [#tpu.dimension_semantics<parallel>], iteration_bounds = array<i64: 2>, scalar_prefetch = 0 : i64, scratch_operands = 0 : i64, tpu.core_type = #tpu.core_type<tc>, window_params = [{transform_indices = @transform_0, window_bounds = array<i64: 1, 8, 32>}, {pipeline_mode = #tpu.pipeline_mode<synchronous>, transform_indices = @transform_1, window_bounds = array<i64: 8, 32, 4>}, {pipeline_mode = #tpu.pipeline_mode<synchronous>, transform_indices = @transform_2, window_bounds = array<i64: 8, 1, 4>}, {pipeline_mode = #tpu.pipeline_mode<synchronous>, transform_indices = @transform_3, window_bounds = array<i64: 8, 32, 4>}, {pipeline_mode = #tpu.pipeline_mode<synchronous>, transform_indices = @transform_4, window_bounds = array<i64: 8, 1, 4>}, {pipeline_mode = #tpu.pipeline_mode<synchronous>, transform_indices = @transform_5, window_bounds = array<i64: 8, 32, 4>}, {pipeline_mode = #tpu.pipeline_mode<synchronous>, transform_indices = @transform_6, window_bounds = array<i64: 8, 1, 4>}, {pipeline_mode = #tpu.pipeline_mode<synchronous>, transform_indices = @transform_7, window_bounds = array<i64: 8, 4, 32>}, {pipeline_mode = #tpu.pipeline_mode<synchronous>, transform_indices = @transform_8, window_bounds = array<i64: 1, 32>}, {pipeline_mode = #tpu.pipeline_mode<synchronous>, transform_indices = @transform_9, window_bounds = array<i64: 1, 32>}, {pipeline_mode = #tpu.pipeline_mode<synchronous>, transform_indices = @transform_10, window_bounds = array<i64: 1, 32>}, {pipeline_mode = #tpu.pipeline_mode<synchronous>, transform_indices = @transform_11, window_bounds = array<i64: 32, 64>}, {pipeline_mode = #tpu.pipeline_mode<synchronous>, transform_indices = @transform_12, window_bounds = array<i64: 1, 64>}, {pipeline_mode = #tpu.pipeline_mode<synchronous>, transform_indices = @transform_13, window_bounds = array<i64: 64, 32>}, {pipeline_mode = #tpu.pipeline_mode<synchronous>, transform_indices = @transform_14, window_bounds = array<i64: 1, 32>}, {pipeline_mode = #tpu.pipeline_mode<synchronous>, transform_indices = @transform_15, window_bounds = array<i64: 1, 32>}, {pipeline_mode = #tpu.pipeline_mode<synchronous>, transform_indices = @transform_16, window_bounds = array<i64: 1, 32>}, {transform_indices = @transform_17, window_bounds = array<i64: 1, 8, 32>}]} {
    %c0 = arith.constant 0 : index
    %c0_0 = arith.constant 0 : index
    %c0_1 = arith.constant 0 : index
    %0 = vector.load %arg1[%c0, %c0_0, %c0_1] : memref<1x8x32xf32, #tpu.memory_space<vmem>>, vector<1x8x32xf32>
    %1 = vector.shape_cast %0 : vector<1x8x32xf32> to vector<8x32xf32>
    %cst = arith.constant 4.000000e+00 : f32
    %2 = math.sqrt %cst : f32
    %cst_2 = arith.constant 1.000000e+00 : f32
    %3 = arith.divf %cst_2, %2 : f32
    %4 = arith.truncf %1 : vector<8x32xf32> to vector<8x32xbf16>
    %5 = vector.shape_cast %4 : vector<8x32xbf16> to vector<1x8x32xbf16>
    %6 = vector.shape_cast %5 : vector<1x8x32xbf16> to vector<1x8x32xbf16>
    %7 = vector.broadcast %6 : vector<1x8x32xbf16> to vector<8x8x32xbf16>
    %c0_3 = arith.constant 0 : index
    %c0_4 = arith.constant 0 : index
    %c0_5 = arith.constant 0 : index
    %8 = vector.load %arg2[%c0_3, %c0_4, %c0_5] : memref<8x32x4xbf16, #tpu.memory_space<vmem>>, vector<8x32x4xbf16>
    "tpu.trace_start"() <{level = 10 : i32, message = "hsd,hde->hse"}> : () -> ()
    %cst_6 = arith.constant dense<0.000000e+00> : vector<8x8x4xf32>
    %9 = tpu.matmul %7, %8, %cst_6 {dimension_numbers = #tpu.dot_dimension_numbers<[2], [1], [1], [2], [0, 0, 0, 1, 1, 2], [0], [0]>} : vector<8x8x32xbf16>, vector<8x32x4xbf16>, vector<8x8x4xf32> -> vector<8x8x4xf32>
    "tpu.trace_stop"() : () -> ()
    %c0_7 = arith.constant 0 : index
    %c0_8 = arith.constant 0 : index
    %c0_9 = arith.constant 0 : index
    %10 = vector.load %arg3[%c0_7, %c0_8, %c0_9] : memref<8x1x4xf32, #tpu.memory_space<vmem>>, vector<8x1x4xf32>
    %11 = vector.broadcast %10 : vector<8x1x4xf32> to vector<8x8x4xf32>
    %12 = arith.addf %9, %11 : vector<8x8x4xf32>
    %c0_10 = arith.constant 0 : index
    %c0_11 = arith.constant 0 : index
    %c0_12 = arith.constant 0 : index
    %13 = vector.load %arg4[%c0_10, %c0_11, %c0_12] : memref<8x32x4xbf16, #tpu.memory_space<vmem>>, vector<8x32x4xbf16>
    "tpu.trace_start"() <{level = 10 : i32, message = "hsd,hde->hse"}> : () -> ()
    %cst_13 = arith.constant dense<0.000000e+00> : vector<8x8x4xf32>
    %14 = tpu.matmul %7, %13, %cst_13 {dimension_numbers = #tpu.dot_dimension_numbers<[2], [1], [1], [2], [0, 0, 0, 1, 1, 2], [0], [0]>} : vector<8x8x32xbf16>, vector<8x32x4xbf16>, vector<8x8x4xf32> -> vector<8x8x4xf32>
    "tpu.trace_stop"() : () -> ()
    %c0_14 = arith.constant 0 : index
    %c0_15 = arith.constant 0 : index
    %c0_16 = arith.constant 0 : index
    %15 = vector.load %arg5[%c0_14, %c0_15, %c0_16] : memref<8x1x4xf32, #tpu.memory_space<vmem>>, vector<8x1x4xf32>
    %16 = vector.broadcast %15 : vector<8x1x4xf32> to vector<8x8x4xf32>
    %17 = arith.addf %14, %16 : vector<8x8x4xf32>
    %c0_17 = arith.constant 0 : index
    %c0_18 = arith.constant 0 : index
    %c0_19 = arith.constant 0 : index
    %18 = vector.load %arg6[%c0_17, %c0_18, %c0_19] : memref<8x32x4xbf16, #tpu.memory_space<vmem>>, vector<8x32x4xbf16>
    "tpu.trace_start"() <{level = 10 : i32, message = "hsd,hde->hse"}> : () -> ()
    %cst_20 = arith.constant dense<0.000000e+00> : vector<8x8x4xf32>
    %19 = tpu.matmul %7, %18, %cst_20 {dimension_numbers = #tpu.dot_dimension_numbers<[2], [1], [1], [2], [0, 0, 0, 1, 1, 2], [0], [0]>} : vector<8x8x32xbf16>, vector<8x32x4xbf16>, vector<8x8x4xf32> -> vector<8x8x4xf32>
    "tpu.trace_stop"() : () -> ()
    %c0_21 = arith.constant 0 : index
    %c0_22 = arith.constant 0 : index
    %c0_23 = arith.constant 0 : index
    %20 = vector.load %arg7[%c0_21, %c0_22, %c0_23] : memref<8x1x4xf32, #tpu.memory_space<vmem>>, vector<8x1x4xf32>
    %21 = vector.broadcast %20 : vector<8x1x4xf32> to vector<8x8x4xf32>
    %22 = arith.addf %19, %21 : vector<8x8x4xf32>
    %23 = arith.truncf %12 : vector<8x8x4xf32> to vector<8x8x4xbf16>
    %24 = arith.truncf %17 : vector<8x8x4xf32> to vector<8x8x4xbf16>
    "tpu.trace_start"() <{level = 10 : i32, message = "hqe,hke->hqk"}> : () -> ()
    %cst_24 = arith.constant dense<0.000000e+00> : vector<8x8x8xf32>
    %25 = tpu.matmul %23, %24, %cst_24 {dimension_numbers = #tpu.dot_dimension_numbers<[2], [2], [1], [1], [0, 0, 0, 1, 1, 1], [0], [0]>} : vector<8x8x4xbf16>, vector<8x8x4xbf16>, vector<8x8x8xf32> -> vector<8x8x8xf32>
    "tpu.trace_stop"() : () -> ()
    %26 = vector.broadcast %3 : f32 to vector<8x8x8xf32>
    %27 = arith.mulf %25, %26 : vector<8x8x8xf32>
    %cst_25 = arith.constant dense<0xFF800000> : vector<8x8xf32>
    %28 = vector.multi_reduction <maximumf>, %27, %cst_25 [2] : vector<8x8x8xf32> to vector<8x8xf32>
    %29 = vector.shape_cast %28 : vector<8x8xf32> to vector<8x8x1xf32>
    %30 = vector.broadcast %29 : vector<8x8x1xf32> to vector<8x8x8xf32>
    %31 = arith.subf %27, %30 : vector<8x8x8xf32>
    %32 = math.exp %31 : vector<8x8x8xf32>
    %cst_26 = arith.constant dense<0.000000e+00> : vector<8x8xf32>
    %33 = vector.multi_reduction <add>, %32, %cst_26 [2] : vector<8x8x8xf32> to vector<8x8xf32>
    %34 = vector.shape_cast %33 : vector<8x8xf32> to vector<8x8x1xf32>
    %35 = tpu.reciprocal %34 {approx = true} : vector<8x8x1xf32> -> vector<8x8x1xf32>
    %36 = vector.broadcast %35 : vector<8x8x1xf32> to vector<8x8x8xf32>
    %37 = arith.mulf %32, %36 : vector<8x8x8xf32>
    %38 = arith.truncf %37 : vector<8x8x8xf32> to vector<8x8x8xbf16>
    %39 = arith.truncf %22 : vector<8x8x4xf32> to vector<8x8x4xbf16>
    "tpu.trace_start"() <{level = 10 : i32, message = "hqk,hke->hqe"}> : () -> ()
    %cst_27 = arith.constant dense<0.000000e+00> : vector<8x8x4xf32>
    %40 = tpu.matmul %38, %39, %cst_27 {dimension_numbers = #tpu.dot_dimension_numbers<[2], [1], [1], [2], [0, 0, 0, 1, 1, 2], [0], [0]>} : vector<8x8x8xbf16>, vector<8x8x4xbf16>, vector<8x8x4xf32> -> vector<8x8x4xf32>
    "tpu.trace_stop"() : () -> ()
    %41 = arith.truncf %40 : vector<8x8x4xf32> to vector<8x8x4xbf16>
    %c0_28 = arith.constant 0 : index
    %c0_29 = arith.constant 0 : index
    %c0_30 = arith.constant 0 : index
    %42 = vector.load %arg8[%c0_28, %c0_29, %c0_30] : memref<8x4x32xbf16, #tpu.memory_space<vmem>>, vector<8x4x32xbf16>
    "tpu.trace_start"() <{level = 10 : i32, message = "hse,hed->hsd"}> : () -> ()
    %cst_31 = arith.constant dense<0.000000e+00> : vector<8x8x32xf32>
    %43 = tpu.matmul %41, %42, %cst_31 {dimension_numbers = #tpu.dot_dimension_numbers<[2], [1], [1], [2], [0, 0, 0, 1, 1, 2], [0], [0]>} : vector<8x8x4xbf16>, vector<8x4x32xbf16>, vector<8x8x32xf32> -> vector<8x8x32xf32>
    "tpu.trace_stop"() : () -> ()
    %cst_32 = arith.constant dense<0.000000e+00> : vector<8x32xf32>
    %44 = vector.multi_reduction <add>, %43, %cst_32 [0] : vector<8x8x32xf32> to vector<8x32xf32>
    %c0_33 = arith.constant 0 : index
    %c0_34 = arith.constant 0 : index
    %45 = vector.load %arg9[%c0_33, %c0_34] : memref<1x32xf32, #tpu.memory_space<vmem>>, vector<1x32xf32>
    %46 = vector.broadcast %45 : vector<1x32xf32> to vector<8x32xf32>
    %47 = arith.addf %44, %46 : vector<8x32xf32>
    %48 = arith.addf %1, %47 : vector<8x32xf32>
    %c0_35 = arith.constant 0 : index
    %c0_36 = arith.constant 0 : index
    %49 = vector.load %arg10[%c0_35, %c0_36] : memref<1x32xf32, #tpu.memory_space<vmem>>, vector<1x32xf32>
    %c0_37 = arith.constant 0 : index
    %c0_38 = arith.constant 0 : index
    %50 = vector.load %arg11[%c0_37, %c0_38] : memref<1x32xf32, #tpu.memory_space<vmem>>, vector<1x32xf32>
    %cst_39 = arith.constant dense<0.000000e+00> : vector<8xf32>
    %51 = vector.multi_reduction <add>, %48, %cst_39 [1] : vector<8x32xf32> to vector<8xf32>
    %52 = vector.shape_cast %51 : vector<8xf32> to vector<8x1xf32>
    %cst_40 = arith.constant 3.200000e+01 : f32
    %53 = vector.broadcast %cst_40 : f32 to vector<8x1xf32>
    %54 = arith.divf %52, %53 : vector<8x1xf32>
    %55 = vector.broadcast %54 : vector<8x1xf32> to vector<8x32xf32>
    %56 = arith.subf %48, %55 : vector<8x32xf32>
    %57 = arith.mulf %56, %56 : vector<8x32xf32>
    %cst_41 = arith.constant dense<0.000000e+00> : vector<8xf32>
    %58 = vector.multi_reduction <add>, %57, %cst_41 [1] : vector<8x32xf32> to vector<8xf32>
    %59 = vector.shape_cast %58 : vector<8xf32> to vector<8x1xf32>
    %cst_42 = arith.constant 3.200000e+01 : f32
    %60 = vector.broadcast %cst_42 : f32 to vector<8x1xf32>
    %61 = arith.divf %59, %60 : vector<8x1xf32>
    %62 = vector.broadcast %54 : vector<8x1xf32> to vector<8x32xf32>
    %63 = arith.subf %48, %62 : vector<8x32xf32>
    %cst_43 = arith.constant 9.99999974E-6 : f32
    %64 = vector.broadcast %cst_43 : f32 to vector<8x1xf32>
    %65 = arith.addf %61, %64 : vector<8x1xf32>
    %66 = math.rsqrt %65 : vector<8x1xf32>
    %67 = vector.broadcast %66 : vector<8x1xf32> to vector<8x32xf32>
    %68 = arith.mulf %63, %67 : vector<8x32xf32>
    %69 = vector.broadcast %49 : vector<1x32xf32> to vector<8x32xf32>
    %70 = arith.mulf %68, %69 : vector<8x32xf32>
    %71 = vector.broadcast %50 : vector<1x32xf32> to vector<8x32xf32>
    %72 = arith.addf %70, %71 : vector<8x32xf32>
    %73 = arith.truncf %72 : vector<8x32xf32> to vector<8x32xbf16>
    %c0_44 = arith.constant 0 : index
    %c0_45 = arith.constant 0 : index
    %74 = vector.load %arg12[%c0_44, %c0_45] : memref<32x64xbf16, #tpu.memory_space<vmem>>, vector<32x64xbf16>
    %cst_46 = arith.constant dense<0.000000e+00> : vector<8x64xf32>
    %75 = tpu.matmul %73, %74, %cst_46 {dimension_numbers = #tpu.dot_dimension_numbers<[1], [0], [0], [1], [0, 0, 1, 1], [], []>} : vector<8x32xbf16>, vector<32x64xbf16>, vector<8x64xf32> -> vector<8x64xf32>
    %c0_47 = arith.constant 0 : index
    %c0_48 = arith.constant 0 : index
    %76 = vector.load %arg13[%c0_47, %c0_48] : memref<1x64xf32, #tpu.memory_space<vmem>>, vector<1x64xf32>
    %77 = vector.broadcast %76 : vector<1x64xf32> to vector<8x64xf32>
    %78 = arith.addf %75, %77 : vector<8x64xf32>
    %cst_49 = arith.constant 0.000000e+00 : f32
    %79 = vector.broadcast %cst_49 : f32 to vector<8x64xf32>
    %80 = arith.maximumf %78, %79 : vector<8x64xf32>
    %81 = arith.truncf %80 : vector<8x64xf32> to vector<8x64xbf16>
    %c0_50 = arith.constant 0 : index
    %c0_51 = arith.constant 0 : index
    %82 = vector.load %arg14[%c0_50, %c0_51] : memref<64x32xbf16, #tpu.memory_space<vmem>>, vector<64x32xbf16>
    %cst_52 = arith.constant dense<0.000000e+00> : vector<8x32xf32>
    %83 = tpu.matmul %81, %82, %cst_52 {dimension_numbers = #tpu.dot_dimension_numbers<[1], [0], [0], [1], [0, 0, 1, 1], [], []>} : vector<8x64xbf16>, vector<64x32xbf16>, vector<8x32xf32> -> vector<8x32xf32>
    %c0_53 = arith.constant 0 : index
    %c0_54 = arith.constant 0 : index
    %84 = vector.load %arg15[%c0_53, %c0_54] : memref<1x32xf32, #tpu.memory_space<vmem>>, vector<1x32xf32>
    %85 = vector.broadcast %84 : vector<1x32xf32> to vector<8x32xf32>
    %86 = arith.addf %83, %85 : vector<8x32xf32>
    %87 = arith.addf %72, %86 : vector<8x32xf32>
    %c0_55 = arith.constant 0 : index
    %c0_56 = arith.constant 0 : index
    %88 = vector.load %arg16[%c0_55, %c0_56] : memref<1x32xf32, #tpu.memory_space<vmem>>, vector<1x32xf32>
    %c0_57 = arith.constant 0 : index
    %c0_58 = arith.constant 0 : index
    %89 = vector.load %arg17[%c0_57, %c0_58] : memref<1x32xf32, #tpu.memory_space<vmem>>, vector<1x32xf32>
    %cst_59 = arith.constant dense<0.000000e+00> : vector<8xf32>
    %90 = vector.multi_reduction <add>, %87, %cst_59 [1] : vector<8x32xf32> to vector<8xf32>
    %91 = vector.shape_cast %90 : vector<8xf32> to vector<8x1xf32>
    %cst_60 = arith.constant 3.200000e+01 : f32
    %92 = vector.broadcast %cst_60 : f32 to vector<8x1xf32>
    %93 = arith.divf %91, %92 : vector<8x1xf32>
    %94 = vector.broadcast %93 : vector<8x1xf32> to vector<8x32xf32>
    %95 = arith.subf %87, %94 : vector<8x32xf32>
    %96 = arith.mulf %95, %95 : vector<8x32xf32>
    %cst_61 = arith.constant dense<0.000000e+00> : vector<8xf32>
    %97 = vector.multi_reduction <add>, %96, %cst_61 [1] : vector<8x32xf32> to vector<8xf32>
    %98 = vector.shape_cast %97 : vector<8xf32> to vector<8x1xf32>
    %cst_62 = arith.constant 3.200000e+01 : f32
    %99 = vector.broadcast %cst_62 : f32 to vector<8x1xf32>
    %100 = arith.divf %98, %99 : vector<8x1xf32>
    %101 = vector.broadcast %93 : vector<8x1xf32> to vector<8x32xf32>
    %102 = arith.subf %87, %101 : vector<8x32xf32>
    %cst_63 = arith.constant 9.99999974E-6 : f32
    %103 = vector.broadcast %cst_63 : f32 to vector<8x1xf32>
    %104 = arith.addf %100, %103 : vector<8x1xf32>
    %105 = math.rsqrt %104 : vector<8x1xf32>
    %106 = vector.broadcast %105 : vector<8x1xf32> to vector<8x32xf32>
    %107 = arith.mulf %102, %106 : vector<8x32xf32>
    %108 = vector.broadcast %88 : vector<1x32xf32> to vector<8x32xf32>
    %109 = arith.mulf %107, %108 : vector<8x32xf32>
    %110 = vector.broadcast %89 : vector<1x32xf32> to vector<8x32xf32>
    %111 = arith.addf %109, %110 : vector<8x32xf32>
    %c0_64 = arith.constant 0 : index
    %c0_65 = arith.constant 0 : index
    %c0_66 = arith.constant 0 : index
    %112 = vector.load %arg18[%c0_64, %c0_65, %c0_66] : memref<1x8x32xf32, #tpu.memory_space<vmem>>, vector<1x8x32xf32>
    %113 = vector.shape_cast %112 : vector<1x8x32xf32> to vector<8x32xf32>
    %114 = vector.shape_cast %111 : vector<8x32xf32> to vector<1x8x32xf32>
    tpu.vector_store %arg18[%c0_64, %c0_65, %c0_66], %114 {strides = array<i32>} : memref<1x8x32xf32, #tpu.memory_space<vmem>>, vector<1x8x32xf32>,
    return
  }
  func.func @transform_0(%arg0: i32) -> (i32, i32, i32) {
    %c0_i32 = arith.constant 0 : i32
    %c0_i32_0 = arith.constant 0 : i32
    %c0_i32_1 = arith.constant 0 : i32
    return %arg0, %c0_i32, %c0_i32_0 : i32, i32, i32
  }
  func.func @transform_1(%arg0: i32) -> (i32, i32, i32) {
    %c0_i32 = arith.constant 0 : i32
    %c0_i32_0 = arith.constant 0 : i32
    %c0_i32_1 = arith.constant 0 : i32
    %c0_i32_2 = arith.constant 0 : i32
    return %c0_i32, %c0_i32_0, %c0_i32_1 : i32, i32, i32
  }
  func.func @transform_2(%arg0: i32) -> (i32, i32, i32) {
    %c0_i32 = arith.constant 0 : i32
    %c0_i32_0 = arith.constant 0 : i32
    %c0_i32_1 = arith.constant 0 : i32
    %c0_i32_2 = arith.constant 0 : i32
    return %c0_i32, %c0_i32_0, %c0_i32_1 : i32, i32, i32
  }
  func.func @transform_3(%arg0: i32) -> (i32, i32, i32) {
    %c0_i32 = arith.constant 0 : i32
    %c0_i32_0 = arith.constant 0 : i32
    %c0_i32_1 = arith.constant 0 : i32
    %c0_i32_2 = arith.constant 0 : i32
    return %c0_i32, %c0_i32_0, %c0_i32_1 : i32, i32, i32
  }
  func.func @transform_4(%arg0: i32) -> (i32, i32, i32) {
    %c0_i32 = arith.constant 0 : i32
    %c0_i32_0 = arith.constant 0 : i32
    %c0_i32_1 = arith.constant 0 : i32
    %c0_i32_2 = arith.constant 0 : i32
    return %c0_i32, %c0_i32_0, %c0_i32_1 : i32, i32, i32
  }
  func.func @transform_5(%arg0: i32) -> (i32, i32, i32) {
    %c0_i32 = arith.constant 0 : i32
    %c0_i32_0 = arith.constant 0 : i32
    %c0_i32_1 = arith.constant 0 : i32
    %c0_i32_2 = arith.constant 0 : i32
    return %c0_i32, %c0_i32_0, %c0_i32_1 : i32, i32, i32
  }
  func.func @transform_6(%arg0: i32) -> (i32, i32, i32) {
    %c0_i32 = arith.constant 0 : i32
    %c0_i32_0 = arith.constant 0 : i32
    %c0_i32_1 = arith.constant 0 : i32
    %c0_i32_2 = arith.constant 0 : i32
    return %c0_i32, %c0_i32_0, %c0_i32_1 : i32, i32, i32
  }
  func.func @transform_7(%arg0: i32) -> (i32, i32, i32) {
    %c0_i32 = arith.constant 0 : i32
    %c0_i32_0 = arith.constant 0 : i32
    %c0_i32_1 = arith.constant 0 : i32
    %c0_i32_2 = arith.constant 0 : i32
    return %c0_i32, %c0_i32_0, %c0_i32_1 : i32, i32, i32
  }
  func.func @transform_8(%arg0: i32) -> (i32, i32) {
    %c0_i32 = arith.constant 0 : i32
    %c0_i32_0 = arith.constant 0 : i32
    %c0_i32_1 = arith.constant 0 : i32
    return %c0_i32, %c0_i32_0 : i32, i32
  }
  func.func @transform_9(%arg0: i32) -> (i32, i32) {
    %c0_i32 = arith.constant 0 : i32
    %c0_i32_0 = arith.constant 0 : i32
    %c0_i32_1 = arith.constant 0 : i32
    return %c0_i32, %c0_i32_0 : i32, i32
  }
  func.func @transform_10(%arg0: i32) -> (i32, i32) {
    %c0_i32 = arith.constant 0 : i32
    %c0_i32_0 = arith.constant 0 : i32
    %c0_i32_1 = arith.constant 0 : i32
    return %c0_i32, %c0_i32_0 : i32, i32
  }
  func.func @transform_11(%arg0: i32) -> (i32, i32) {
    %c0_i32 = arith.constant 0 : i32
    %c0_i32_0 = arith.constant 0 : i32
    %c0_i32_1 = arith.constant 0 : i32
    return %c0_i32, %c0_i32_0 : i32, i32
  }
  func.func @transform_12(%arg0: i32) -> (i32, i32) {
    %c0_i32 = arith.constant 0 : i32
    %c0_i32_0 = arith.constant 0 : i32
    %c0_i32_1 = arith.constant 0 : i32
    return %c0_i32, %c0_i32_0 : i32, i32
  }
  func.func @transform_13(%arg0: i32) -> (i32, i32) {
    %c0_i32 = arith.constant 0 : i32
    %c0_i32_0 = arith.constant 0 : i32
    %c0_i32_1 = arith.constant 0 : i32
    return %c0_i32, %c0_i32_0 : i32, i32
  }
  func.func @transform_14(%arg0: i32) -> (i32, i32) {
    %c0_i32 = arith.constant 0 : i32
    %c0_i32_0 = arith.constant 0 : i32
    %c0_i32_1 = arith.constant 0 : i32
    return %c0_i32, %c0_i32_0 : i32, i32
  }
  func.func @transform_15(%arg0: i32) -> (i32, i32) {
    %c0_i32 = arith.constant 0 : i32
    %c0_i32_0 = arith.constant 0 : i32
    %c0_i32_1 = arith.constant 0 : i32
    return %c0_i32, %c0_i32_0 : i32, i32
  }
  func.func @transform_16(%arg0: i32) -> (i32, i32) {
    %c0_i32 = arith.constant 0 : i32
    %c0_i32_0 = arith.constant 0 : i32
    %c0_i32_1 = arith.constant 0 : i32
    return %c0_i32, %c0_i32_0 : i32, i32
  }
  func.func @transform_17(%arg0: i32) -> (i32, i32, i32) {
    %c0_i32 = arith.constant 0 : i32
    %c0_i32_0 = arith.constant 0 : i32
    %c0_i32_1 = arith.constant 0 : i32
    return %arg0, %c0_i32, %c0_i32_0 : i32, i32, i32
  }
}

</mosaic_0001>

<llo_original>
// kernel: tpu_custom_call.1
$region0: #{tpu_custom_call.1}
  #allocation0 [shape = 'u32[]', space=smem, size = 0x4, offset = 0x4, fixed_abs, tag = 'smem constant byte address 0x4 - core index']
  #allocation1 [shape = 'u32[144,128]{1,0:T(1,128)}', space=vmem, size = 0x12000, scoped, tag = 'internal scratch']
  %s0 = inlined_call_operand.vmem [shape: f32[2,8,32], index: 0, kind: input, shape index: {}]
  %s1 = inlined_call_operand.vmem [shape: bf16[8,32,4], index: 1, kind: input, shape index: {}]
  %s2 = inlined_call_operand.vmem [shape: f32[8,1,4], index: 2, kind: input, shape index: {}]
  %s3 = inlined_call_operand.vmem [shape: bf16[8,32,4], index: 3, kind: input, shape index: {}]
  %s4 = inlined_call_operand.vmem [shape: f32[8,1,4], index: 4, kind: input, shape index: {}]
  %s5 = inlined_call_operand.vmem [shape: bf16[8,32,4], index: 5, kind: input, shape index: {}]
  %s6 = inlined_call_operand.vmem [shape: f32[8,1,4], index: 6, kind: input, shape index: {}]
  %s7 = inlined_call_operand.vmem [shape: bf16[8,4,32], index: 7, kind: input, shape index: {}]
  %s8 = inlined_call_operand.vmem [shape: f32[1,32], index: 8, kind: input, shape index: {}]
  %s9 = inlined_call_operand.vmem [shape: f32[1,32], index: 9, kind: input, shape index: {}]
  %s10 = inlined_call_operand.vmem [shape: f32[1,32], index: 10, kind: input, shape index: {}]
  %s11 = inlined_call_operand.vmem [shape: bf16[32,64], index: 11, kind: input, shape index: {}]
  %s12 = inlined_call_operand.vmem [shape: f32[1,64], index: 12, kind: input, shape index: {}]
  %s13 = inlined_call_operand.vmem [shape: bf16[64,32], index: 13, kind: input, shape index: {}]
  %s14 = inlined_call_operand.vmem [shape: f32[1,32], index: 14, kind: input, shape index: {}]
  %s15 = inlined_call_operand.vmem [shape: f32[1,32], index: 15, kind: input, shape index: {}]
  %s16 = inlined_call_operand.vmem [shape: f32[1,32], index: 16, kind: input, shape index: {}]
  %s17 = inlined_call_operand.hbm [shape: f32[2,8,32], index: 17, kind: output, shape index: {}]
  %s18 = sld [smem:[#allocation0]]
  $region101: #{tpu_custom_call.1} parent=0
    _
  %s20 = ssub.s32 1, %s18
  %s21 = scalar_select 0, %s20, %s18
  $region1: #{tpu_custom_call.1} parent=0
    #allocation2 [shape = 'u8[8192]{0}', space=vmem, size = 0x2000, scoped, tag = 'output window, operand 0']
    #allocation3 [shape = 's32[2]{0}', space=sflag, size = 0x8, scoped, tag = 'scoped memory for tpu_custom_call.1']
    %22 = vsyncpa [#allocation3], 0
    %s23 = scalar_lea.sflag [#allocation3], 1
    %24 = vsyncpa %s23, 0
    loop: start=0, step=1, limit=4
    $region2: #{tpu_custom_call.1} parent=1 // loop_pre_header
      _
    $region3: #{tpu_custom_call.1} parent=1 // loop_header
      %s26 = sphi 0, %s30
      %p27 = scmp.ge.s32.totalorder %s26, 4
      %s36 = sphi 0, %s38
      %s39 = sphi 0, %s36
      %s40 = sphi 0, %s39
      %s56 = sphi 0, %s40
      %s60 = sphi 0, %s60
      %s62 = sphi 0, %s60
      %s63 = sphi 0, %s62
      %s77 = sphi 0, %s63
      %s81 = sphi 0, %s81
      %s83 = sphi 0, %s81
      %s84 = sphi 0, %s83
      %s98 = sphi 0, %s84
      %s102 = sphi 0, %s102
      %s104 = sphi 0, %s102
      %s105 = sphi 0, %s104
      %s119 = sphi 0, %s105
      %s123 = sphi 0, %s123
      %s125 = sphi 0, %s123
      %s126 = sphi 0, %s125
      %s140 = sphi 0, %s126
      %s144 = sphi 0, %s144
      %s146 = sphi 0, %s144
      %s147 = sphi 0, %s146
      %s161 = sphi 0, %s147
      %s165 = sphi 0, %s165
      %s167 = sphi 0, %s165
      %s168 = sphi 0, %s167
      %s182 = sphi 0, %s168
      %s186 = sphi 0, %s186
      %s188 = sphi 0, %s186
      %s189 = sphi 0, %s188
      %s203 = sphi 0, %s189
      %s207 = sphi 0, %s207
      %s209 = sphi 0, %s207
      %s210 = sphi 0, %s209
      %s224 = sphi 0, %s210
      %s228 = sphi 0, %s228
      %s230 = sphi 0, %s228
      %s231 = sphi 0, %s230
      %s245 = sphi 0, %s231
      %s249 = sphi 0, %s249
      %s251 = sphi 0, %s249
      %s252 = sphi 0, %s251
      %s266 = sphi 0, %s252
      %s270 = sphi 0, %s270
      %s272 = sphi 0, %s270
      %s273 = sphi 0, %s272
      %s287 = sphi 0, %s273
      %s291 = sphi 0, %s291
      %s293 = sphi 0, %s291
      %s294 = sphi 0, %s293
      %s308 = sphi 0, %s294
      %s312 = sphi 0, %s312
      %s314 = sphi 0, %s312
      %s315 = sphi 0, %s314
      %s329 = sphi 0, %s315
      %s333 = sphi 0, %s333
      %s335 = sphi 0, %s333
      %s336 = sphi 0, %s335
      %s350 = sphi 0, %s336
      %s354 = sphi 0, %s354
      %s356 = sphi 0, %s354
      %s357 = sphi 0, %s356
      %s371 = sphi 0, %s357
      %s375 = sphi 0, %s375
      %s377 = sphi 0, %s375
      %s378 = sphi 0, %s377
      %s392 = sphi 0, %s378
      %s398 = sphi 0, %s400
      %s401 = sphi 0, %s398
      %s402 = sphi 0, %s401
      %s418 = sphi 0, %s402
    $region4: #{tpu_custom_call.1} parent=1 // loop_header_branch
      %29 = sbr.rel (%p27) target = $region8
    $region5: #{tpu_custom_call.1} parent=1 // loop_body
      %s31 = ssub.s32 %s26, 1
      %s32 = ssub.s32 %s26, 2
      %s33 = sadd.s32 %s26, 1
      %s34 = ssub.s32 %s26, %s33
      %p35 = scmp.eq.s32.totalorder %s34, 0
      %s37 = sadd.s32 %s36, 1
      %s38 = scalar_select %p35, %s36, %s37
      %p41 = pneg %p35
      %p42 = scmp.eq.s32.totalorder %s26, 1
      %p43 = por %p41, %p42
      %p44 = scmp.ne.s32.totalorder %s36, %s39
      %p45 = scmp.eq.s32.totalorder %s26, 0
      %p46 = por %p44, %p45
      %p47 = scmp.ne.s32.totalorder %s36, %s39
      %p48 = scmp.eq.s32.totalorder %s31, 1
      %p49 = por %p47, %p48
      %p50 = scmp.ne.s32.totalorder %s39, %s40
      %p51 = scmp.eq.s32.totalorder %s31, 0
      %p52 = por %p50, %p51
      %p53 = scmp.ne.s32.totalorder %s39, %s40
      %p54 = scmp.eq.s32.totalorder %s32, 1
      %p55 = por %p53, %p54
      %p57 = scmp.ne.s32.totalorder %s40, %s56
      %p58 = scmp.eq.s32.totalorder %s32, 0
      %p59 = por %p57, %p58
      %s61 = sadd.s32 %s60, 1
      %p64 = scmp.eq.s32.totalorder %s26, 1
      %p65 = scmp.ne.s32.totalorder %s60, %s62
      %p66 = scmp.eq.s32.totalorder %s26, 0
      %p67 = por %p65, %p66
      %p68 = scmp.ne.s32.totalorder %s60, %s62
      %p69 = scmp.eq.s32.totalorder %s31, 1
      %p70 = por %p68, %p69
      %p71 = scmp.ne.s32.totalorder %s62, %s63
      %p72 = scmp.eq.s32.totalorder %s31, 0
      %p73 = por %p71, %p72
      %p74 = scmp.ne.s32.totalorder %s62, %s63
      %p75 = scmp.eq.s32.totalorder %s32, 1
      %p76 = por %p74, %p75
      %p78 = scmp.ne.s32.totalorder %s63, %s77
      %p79 = scmp.eq.s32.totalorder %s32, 0
      %p80 = por %p78, %p79
      %s82 = sadd.s32 %s81, 1
      %p85 = scmp.eq.s32.totalorder %s26, 1
      %p86 = scmp.ne.s32.totalorder %s81, %s83
      %p87 = scmp.eq.s32.totalorder %s26, 0
      %p88 = por %p86, %p87
      %p89 = scmp.ne.s32.totalorder %s81, %s83
      %p90 = scmp.eq.s32.totalorder %s31, 1
      %p91 = por %p89, %p90
      %p92 = scmp.ne.s32.totalorder %s83, %s84
      %p93 = scmp.eq.s32.totalorder %s31, 0
      %p94 = por %p92, %p93
      %p95 = scmp.ne.s32.totalorder %s83, %s84
      %p96 = scmp.eq.s32.totalorder %s32, 1
      %p97 = por %p95, %p96
      %p99 = scmp.ne.s32.totalorder %s84, %s98
      %p100 = scmp.eq.s32.totalorder %s32, 0
      %p101 = por %p99, %p100
      %s103 = sadd.s32 %s102, 1
      %p106 = scmp.eq.s32.totalorder %s26, 1
      %p107 = scmp.ne.s32.totalorder %s102, %s104
      %p108 = scmp.eq.s32.totalorder %s26, 0
      %p109 = por %p107, %p108
      %p110 = scmp.ne.s32.totalorder %s102, %s104
      %p111 = scmp.eq.s32.totalorder %s31, 1
      %p112 = por %p110, %p111
      %p113 = scmp.ne.s32.totalorder %s104, %s105
      %p114 = scmp.eq.s32.totalorder %s31, 0
      %p115 = por %p113, %p114
      %p116 = scmp.ne.s32.totalorder %s104, %s105
      %p117 = scmp.eq.s32.totalorder %s32, 1
      %p118 = por %p116, %p117
      %p120 = scmp.ne.s32.totalorder %s105, %s119
      %p121 = scmp.eq.s32.totalorder %s32, 0
      %p122 = por %p120, %p121
      %s124 = sadd.s32 %s123, 1
      %p127 = scmp.eq.s32.totalorder %s26, 1
      %p128 = scmp.ne.s32.totalorder %s123, %s125
      %p129 = scmp.eq.s32.totalorder %s26, 0
      %p130 = por %p128, %p129
      %p131 = scmp.ne.s32.totalorder %s123, %s125
      %p132 = scmp.eq.s32.totalorder %s31, 1
      %p133 = por %p131, %p132
      %p134 = scmp.ne.s32.totalorder %s125, %s126
      %p135 = scmp.eq.s32.totalorder %s31, 0
      %p136 = por %p134, %p135
      %p137 = scmp.ne.s32.totalorder %s125, %s126
      %p138 = scmp.eq.s32.totalorder %s32, 1
      %p139 = por %p137, %p138
      %p141 = scmp.ne.s32.totalorder %s126, %s140
      %p142 = scmp.eq.s32.totalorder %s32, 0
      %p143 = por %p141, %p142
      %s145 = sadd.s32 %s144, 1
      %p148 = scmp.eq.s32.totalorder %s26, 1
      %p149 = scmp.ne.s32.totalorder %s144, %s146
      %p150 = scmp.eq.s32.totalorder %s26, 0
      %p151 = por %p149, %p150
      %p152 = scmp.ne.s32.totalorder %s144, %s146
      %p153 = scmp.eq.s32.totalorder %s31, 1
      %p154 = por %p152, %p153
      %p155 = scmp.ne.s32.totalorder %s146, %s147
      %p156 = scmp.eq.s32.totalorder %s31, 0
      %p157 = por %p155, %p156
      %p158 = scmp.ne.s32.totalorder %s146, %s147
      %p159 = scmp.eq.s32.totalorder %s32, 1
      %p160 = por %p158, %p159
      %p162 = scmp.ne.s32.totalorder %s147, %s161
      %p163 = scmp.eq.s32.totalorder %s32, 0
      %p164 = por %p162, %p163
      %s166 = sadd.s32 %s165, 1
      %p169 = scmp.eq.s32.totalorder %s26, 1
      %p170 = scmp.ne.s32.totalorder %s165, %s167
      %p171 = scmp.eq.s32.totalorder %s26, 0
      %p172 = por %p170, %p171
      %p173 = scmp.ne.s32.totalorder %s165, %s167
      %p174 = scmp.eq.s32.totalorder %s31, 1
      %p175 = por %p173, %p174
      %p176 = scmp.ne.s32.totalorder %s167, %s168
      %p177 = scmp.eq.s32.totalorder %s31, 0
      %p178 = por %p176, %p177
      %p179 = scmp.ne.s32.totalorder %s167, %s168
      %p180 = scmp.eq.s32.totalorder %s32, 1
      %p181 = por %p179, %p180
      %p183 = scmp.ne.s32.totalorder %s168, %s182
      %p184 = scmp.eq.s32.totalorder %s32, 0
      %p185 = por %p183, %p184
      %s187 = sadd.s32 %s186, 1
      %p190 = scmp.eq.s32.totalorder %s26, 1
      %p191 = scmp.ne.s32.totalorder %s186, %s188
      %p192 = scmp.eq.s32.totalorder %s26, 0
      %p193 = por %p191, %p192
      %p194 = scmp.ne.s32.totalorder %s186, %s188
      %p195 = scmp.eq.s32.totalorder %s31, 1
      %p196 = por %p194, %p195
      %p197 = scmp.ne.s32.totalorder %s188, %s189
      %p198 = scmp.eq.s32.totalorder %s31, 0
      %p199 = por %p197, %p198
      %p200 = scmp.ne.s32.totalorder %s188, %s189
      %p201 = scmp.eq.s32.totalorder %s32, 1
      %p202 = por %p200, %p201
      %p204 = scmp.ne.s32.totalorder %s189, %s203
      %p205 = scmp.eq.s32.totalorder %s32, 0
      %p206 = por %p204, %p205
      %s208 = sadd.s32 %s207, 1
      %p211 = scmp.eq.s32.totalorder %s26, 1
      %p212 = scmp.ne.s32.totalorder %s207, %s209
      %p213 = scmp.eq.s32.totalorder %s26, 0
      %p214 = por %p212, %p213
      %p215 = scmp.ne.s32.totalorder %s207, %s209
      %p216 = scmp.eq.s32.totalorder %s31, 1
      %p217 = por %p215, %p216
      %p218 = scmp.ne.s32.totalorder %s209, %s210
      %p219 = scmp.eq.s32.totalorder %s31, 0
      %p220 = por %p218, %p219
      %p221 = scmp.ne.s32.totalorder %s209, %s210
      %p222 = scmp.eq.s32.totalorder %s32, 1
      %p223 = por %p221, %p222
      %p225 = scmp.ne.s32.totalorder %s210, %s224
      %p226 = scmp.eq.s32.totalorder %s32, 0
      %p227 = por %p225, %p226
      %s229 = sadd.s32 %s228, 1
      %p232 = scmp.eq.s32.totalorder %s26, 1
      %p233 = scmp.ne.s32.totalorder %s228, %s230
      %p234 = scmp.eq.s32.totalorder %s26, 0
      %p235 = por %p233, %p234
      %p236 = scmp.ne.s32.totalorder %s228, %s230
      %p237 = scmp.eq.s32.totalorder %s31, 1
      %p238 = por %p236, %p237
      %p239 = scmp.ne.s32.totalorder %s230, %s231
      %p240 = scmp.eq.s32.totalorder %s31, 0
      %p241 = por %p239, %p240
      %p242 = scmp.ne.s32.totalorder %s230, %s231
      %p243 = scmp.eq.s32.totalorder %s32, 1
      %p244 = por %p242, %p243
      %p246 = scmp.ne.s32.totalorder %s231, %s245
      %p247 = scmp.eq.s32.totalorder %s32, 0
      %p248 = por %p246, %p247
      %s250 = sadd.s32 %s249, 1
      %p253 = scmp.eq.s32.totalorder %s26, 1
      %p254 = scmp.ne.s32.totalorder %s249, %s251
      %p255 = scmp.eq.s32.totalorder %s26, 0
      %p256 = por %p254, %p255
      %p257 = scmp.ne.s32.totalorder %s249, %s251
      %p258 = scmp.eq.s32.totalorder %s31, 1
      %p259 = por %p257, %p258
      %p260 = scmp.ne.s32.totalorder %s251, %s252
      %p261 = scmp.eq.s32.totalorder %s31, 0
      %p262 = por %p260, %p261
      %p263 = scmp.ne.s32.totalorder %s251, %s252
      %p264 = scmp.eq.s32.totalorder %s32, 1
      %p265 = por %p263, %p264
      %p267 = scmp.ne.s32.totalorder %s252, %s266
      %p268 = scmp.eq.s32.totalorder %s32, 0
      %p269 = por %p267, %p268
      %s271 = sadd.s32 %s270, 1
      %p274 = scmp.eq.s32.totalorder %s26, 1
      %p275 = scmp.ne.s32.totalorder %s270, %s272
      %p276 = scmp.eq.s32.totalorder %s26, 0
      %p277 = por %p275, %p276
      %p278 = scmp.ne.s32.totalorder %s270, %s272
      %p279 = scmp.eq.s32.totalorder %s31, 1
      %p280 = por %p278, %p279
      %p281 = scmp.ne.s32.totalorder %s272, %s273
      %p282 = scmp.eq.s32.totalorder %s31, 0
      %p283 = por %p281, %p282
      %p284 = scmp.ne.s32.totalorder %s272, %s273
      %p285 = scmp.eq.s32.totalorder %s32, 1
      %p286 = por %p284, %p285
      %p288 = scmp.ne.s32.totalorder %s273, %s287
      %p289 = scmp.eq.s32.totalorder %s32, 0
      %p290 = por %p288, %p289
      %s292 = sadd.s32 %s291, 1
      %p295 = scmp.eq.s32.totalorder %s26, 1
      %p296 = scmp.ne.s32.totalorder %s291, %s293
      %p297 = scmp.eq.s32.totalorder %s26, 0
      %p298 = por %p296, %p297
      %p299 = scmp.ne.s32.totalorder %s291, %s293
      %p300 = scmp.eq.s32.totalorder %s31, 1
      %p301 = por %p299, %p300
      %p302 = scmp.ne.s32.totalorder %s293, %s294
      %p303 = scmp.eq.s32.totalorder %s31, 0
      %p304 = por %p302, %p303
      %p305 = scmp.ne.s32.totalorder %s293, %s294
      %p306 = scmp.eq.s32.totalorder %s32, 1
      %p307 = por %p305, %p306
      %p309 = scmp.ne.s32.totalorder %s294, %s308
      %p310 = scmp.eq.s32.totalorder %s32, 0
      %p311 = por %p309, %p310
      %s313 = sadd.s32 %s312, 1
      %p316 = scmp.eq.s32.totalorder %s26, 1
      %p317 = scmp.ne.s32.totalorder %s312, %s314
      %p318 = scmp.eq.s32.totalorder %s26, 0
      %p319 = por %p317, %p318
      %p320 = scmp.ne.s32.totalorder %s312, %s314
      %p321 = scmp.eq.s32.totalorder %s31, 1
      %p322 = por %p320, %p321
      %p323 = scmp.ne.s32.totalorder %s314, %s315
      %p324 = scmp.eq.s32.totalorder %s31, 0
      %p325 = por %p323, %p324
      %p326 = scmp.ne.s32.totalorder %s314, %s315
      %p327 = scmp.eq.s32.totalorder %s32, 1
      %p328 = por %p326, %p327
      %p330 = scmp.ne.s32.totalorder %s315, %s329
      %p331 = scmp.eq.s32.totalorder %s32, 0
      %p332 = por %p330, %p331
      %s334 = sadd.s32 %s333, 1
      %p337 = scmp.eq.s32.totalorder %s26, 1
      %p338 = scmp.ne.s32.totalorder %s333, %s335
      %p339 = scmp.eq.s32.totalorder %s26, 0
      %p340 = por %p338, %p339
      %p341 = scmp.ne.s32.totalorder %s333, %s335
      %p342 = scmp.eq.s32.totalorder %s31, 1
      %p343 = por %p341, %p342
      %p344 = scmp.ne.s32.totalorder %s335, %s336
      %p345 = scmp.eq.s32.totalorder %s31, 0
      %p346 = por %p344, %p345
      %p347 = scmp.ne.s32.totalorder %s335, %s336
      %p348 = scmp.eq.s32.totalorder %s32, 1
      %p349 = por %p347, %p348
      %p351 = scmp.ne.s32.totalorder %s336, %s350
      %p352 = scmp.eq.s32.totalorder %s32, 0
      %p353 = por %p351, %p352
      %s355 = sadd.s32 %s354, 1
      %p358 = scmp.eq.s32.totalorder %s26, 1
      %p359 = scmp.ne.s32.totalorder %s354, %s356
      %p360 = scmp.eq.s32.totalorder %s26, 0
      %p361 = por %p359, %p360
      %p362 = scmp.ne.s32.totalorder %s354, %s356
      %p363 = scmp.eq.s32.totalorder %s31, 1
      %p364 = por %p362, %p363
      %p365 = scmp.ne.s32.totalorder %s356, %s357
      %p366 = scmp.eq.s32.totalorder %s31, 0
      %p367 = por %p365, %p366
      %p368 = scmp.ne.s32.totalorder %s356, %s357
      %p369 = scmp.eq.s32.totalorder %s32, 1
      %p370 = por %p368, %p369
      %p372 = scmp.ne.s32.totalorder %s357, %s371
      %p373 = scmp.eq.s32.totalorder %s32, 0
      %p374 = por %p372, %p373
      %s376 = sadd.s32 %s375, 1
      %p379 = scmp.eq.s32.totalorder %s26, 1
      %p380 = scmp.ne.s32.totalorder %s375, %s377
      %p381 = scmp.eq.s32.totalorder %s26, 0
      %p382 = por %p380, %p381
      %p383 = scmp.ne.s32.totalorder %s375, %s377
      %p384 = scmp.eq.s32.totalorder %s31, 1
      %p385 = por %p383, %p384
      %p386 = scmp.ne.s32.totalorder %s377, %s378
      %p387 = scmp.eq.s32.totalorder %s31, 0
      %p388 = por %p386, %p387
      %p389 = scmp.ne.s32.totalorder %s377, %s378
      %p390 = scmp.eq.s32.totalorder %s32, 1
      %p391 = por %p389, %p390
      %p393 = scmp.ne.s32.totalorder %s378, %s392
      %p394 = scmp.eq.s32.totalorder %s32, 0
      %p395 = por %p393, %p394
      %s396 = ssub.s32 %s26, %s33
      %p397 = scmp.eq.s32.totalorder %s396, 0
      %s399 = sadd.s32 %s398, 1
      %s400 = scalar_select %p397, %s398, %s399
      %p403 = pneg %p397
      %p404 = scmp.eq.s32.totalorder %s26, 1
      %p405 = por %p403, %p404
      %p406 = scmp.ne.s32.totalorder %s398, %s401
      %p407 = scmp.eq.s32.totalorder %s26, 0
      %p408 = por %p406, %p407
      %p409 = scmp.ne.s32.totalorder %s398, %s401
      %p410 = scmp.eq.s32.totalorder %s31, 1
      %p411 = por %p409, %p410
      %p412 = scmp.ne.s32.totalorder %s401, %s402
      %p413 = scmp.eq.s32.totalorder %s31, 0
      %p414 = por %p412, %p413
      %p415 = scmp.ne.s32.totalorder %s401, %s402
      %p416 = scmp.eq.s32.totalorder %s32, 1
      %p417 = por %p415, %p416
      %p419 = scmp.ne.s32.totalorder %s402, %s418
      %p420 = scmp.eq.s32.totalorder %s32, 0
      %p421 = por %p419, %p420
      %p422 = scmp.le.s32.totalorder 1, %s26
      %p423 = scmp.lt.s32.totalorder %s26, 3
      %p424 = pnand %p422, %p423
      %p425 = pneg %p424
      // Predicated region
      $region9: #{tpu_custom_call.1} parent=5 // pred_check
        _
      $region10: #{tpu_custom_call.1} parent=5 // pred_check_branch
        %427 = sbr.rel (%p424) target = $region12
      $region11: #{tpu_custom_call.1} parent=5 // pred_region
        %s428 = ssub.s32 %s26, 1
        // Predicated region
        $region13: #{tpu_custom_call.1} parent=11 // pred_check
          %p429 = pneg %p73
        $region14: #{tpu_custom_call.1} parent=11 // pred_check_branch
          %431 = sbr.rel (%p429) target = $region16
        $region15: #{tpu_custom_call.1} parent=11 // pred_region
          _
        $region16: #{tpu_custom_call.1} parent=11 // pred_fallthru
          _
        // Predicated region
        $region17: #{tpu_custom_call.1} parent=11 // pred_check
          %p432 = pneg %p94
        $region18: #{tpu_custom_call.1} parent=11 // pred_check_branch
          %434 = sbr.rel (%p432) target = $region20
        $region19: #{tpu_custom_call.1} parent=11 // pred_region
          _
        $region20: #{tpu_custom_call.1} parent=11 // pred_fallthru
          _
        // Predicated region
        $region21: #{tpu_custom_call.1} parent=11 // pred_check
          %p435 = pneg %p115
        $region22: #{tpu_custom_call.1} parent=11 // pred_check_branch
          %437 = sbr.rel (%p435) target = $region24
        $region23: #{tpu_custom_call.1} parent=11 // pred_region
          _
        $region24: #{tpu_custom_call.1} parent=11 // pred_fallthru
          _
        // Predicated region
        $region25: #{tpu_custom_call.1} parent=11 // pred_check
          %p438 = pneg %p136
        $region26: #{tpu_custom_call.1} parent=11 // pred_check_branch
          %440 = sbr.rel (%p438) target = $region28
        $region27: #{tpu_custom_call.1} parent=11 // pred_region
          _
        $region28: #{tpu_custom_call.1} parent=11 // pred_fallthru
          _
        // Predicated region
        $region29: #{tpu_custom_call.1} parent=11 // pred_check
          %p441 = pneg %p157
        $region30: #{tpu_custom_call.1} parent=11 // pred_check_branch
          %443 = sbr.rel (%p441) target = $region32
        $region31: #{tpu_custom_call.1} parent=11 // pred_region
          _
        $region32: #{tpu_custom_call.1} parent=11 // pred_fallthru
          _
        // Predicated region
        $region33: #{tpu_custom_call.1} parent=11 // pred_check
          %p444 = pneg %p178
        $region34: #{tpu_custom_call.1} parent=11 // pred_check_branch
          %446 = sbr.rel (%p444) target = $region36
        $region35: #{tpu_custom_call.1} parent=11 // pred_region
          _
        $region36: #{tpu_custom_call.1} parent=11 // pred_fallthru
          _
        // Predicated region
        $region37: #{tpu_custom_call.1} parent=11 // pred_check
          %p447 = pneg %p199
        $region38: #{tpu_custom_call.1} parent=11 // pred_check_branch
          %449 = sbr.rel (%p447) target = $region40
        $region39: #{tpu_custom_call.1} parent=11 // pred_region
          _
        $region40: #{tpu_custom_call.1} parent=11 // pred_fallthru
          _
        // Predicated region
        $region41: #{tpu_custom_call.1} parent=11 // pred_check
          %p450 = pneg %p220
        $region42: #{tpu_custom_call.1} parent=11 // pred_check_branch
          %452 = sbr.rel (%p450) target = $region44
        $region43: #{tpu_custom_call.1} parent=11 // pred_region
          _
        $region44: #{tpu_custom_call.1} parent=11 // pred_fallthru
          _
        // Predicated region
        $region45: #{tpu_custom_call.1} parent=11 // pred_check
          %p453 = pneg %p241
        $region46: #{tpu_custom_call.1} parent=11 // pred_check_branch
          %455 = sbr.rel (%p453) target = $region48
        $region47: #{tpu_custom_call.1} parent=11 // pred_region
          _
        $region48: #{tpu_custom_call.1} parent=11 // pred_fallthru
          _
        // Predicated region
        $region49: #{tpu_custom_call.1} parent=11 // pred_check
          %p456 = pneg %p262
        $region50: #{tpu_custom_call.1} parent=11 // pred_check_branch
          %458 = sbr.rel (%p456) target = $region52
        $region51: #{tpu_custom_call.1} parent=11 // pred_region
          _
        $region52: #{tpu_custom_call.1} parent=11 // pred_fallthru
          _
        // Predicated region
        $region53: #{tpu_custom_call.1} parent=11 // pred_check
          %p459 = pneg %p283
        $region54: #{tpu_custom_call.1} parent=11 // pred_check_branch
          %461 = sbr.rel (%p459) target = $region56
        $region55: #{tpu_custom_call.1} parent=11 // pred_region
          _
        $region56: #{tpu_custom_call.1} parent=11 // pred_fallthru
          _
        // Predicated region
        $region57: #{tpu_custom_call.1} parent=11 // pred_check
          %p462 = pneg %p304
        $region58: #{tpu_custom_call.1} parent=11 // pred_check_branch
          %464 = sbr.rel (%p462) target = $region60
        $region59: #{tpu_custom_call.1} parent=11 // pred_region
          _
        $region60: #{tpu_custom_call.1} parent=11 // pred_fallthru
          _
        // Predicated region
        $region61: #{tpu_custom_call.1} parent=11 // pred_check
          %p465 = pneg %p325
        $region62: #{tpu_custom_call.1} parent=11 // pred_check_branch
          %467 = sbr.rel (%p465) target = $region64
        $region63: #{tpu_custom_call.1} parent=11 // pred_region
          _
        $region64: #{tpu_custom_call.1} parent=11 // pred_fallthru
          _
        // Predicated region
        $region65: #{tpu_custom_call.1} parent=11 // pred_check
          %p468 = pneg %p346
        $region66: #{tpu_custom_call.1} parent=11 // pred_check_branch
          %470 = sbr.rel (%p468) target = $region68
        $region67: #{tpu_custom_call.1} parent=11 // pred_region
          _
        $region68: #{tpu_custom_call.1} parent=11 // pred_fallthru
          _
        // Predicated region
        $region69: #{tpu_custom_call.1} parent=11 // pred_check
          %p471 = pneg %p367
        $region70: #{tpu_custom_call.1} parent=11 // pred_check_branch
          %473 = sbr.rel (%p471) target = $region72
        $region71: #{tpu_custom_call.1} parent=11 // pred_region
          _
        $region72: #{tpu_custom_call.1} parent=11 // pred_fallthru
          _
        // Predicated region
        $region73: #{tpu_custom_call.1} parent=11 // pred_check
          %p474 = pneg %p388
        $region74: #{tpu_custom_call.1} parent=11 // pred_check_branch
          %476 = sbr.rel (%p474) target = $region76
        $region75: #{tpu_custom_call.1} parent=11 // pred_region
          _
        $region76: #{tpu_custom_call.1} parent=11 // pred_fallthru
          _
      $region12: #{tpu_custom_call.1} parent=5 // pred_fallthru
        _
      %p477 = scmp.lt.s32.totalorder %s26, 2
      // Predicated region
      $region77: #{tpu_custom_call.1} parent=5 // pred_check
        %p478 = pneg %p477
      $region78: #{tpu_custom_call.1} parent=5 // pred_check_branch
        %480 = sbr.rel (%p478) target = $region80
      $region79: #{tpu_custom_call.1} parent=5 // pred_region
        // Predicated region
        $region81: #{tpu_custom_call.1} parent=79 // pred_check
          %p481 = pneg %p46
        $region82: #{tpu_custom_call.1} parent=79 // pred_check_branch
          %483 = sbr.rel (%p481) target = $region84
        $region83: #{tpu_custom_call.1} parent=79 // pred_region
          %p484 = scmp.lt.s32.totalorder %s26, 1
          %s485 = scalar_select %p484, %s26, 1
          %s486 = smul.addr %s485, 8
          %s487 = scalar_lea.vmem %s0, %s486
        $region84: #{tpu_custom_call.1} parent=79 // pred_fallthru
          _
      $region80: #{tpu_custom_call.1} parent=5 // pred_fallthru
        _
      %p488 = scmp.le.s32.totalorder 1, %s26
      %p489 = scmp.lt.s32.totalorder %s26, 3
      %p490 = pnand %p488, %p489
      %p491 = pneg %p490
      // Predicated region
      $region85: #{tpu_custom_call.1} parent=5 // pred_check
        _
      $region86: #{tpu_custom_call.1} parent=5 // pred_check_branch
        %493 = sbr.rel (%p490) target = $region88
      $region87: #{tpu_custom_call.1} parent=5 // pred_region
        %s494 = ssub.s32 %s26, 1
        %p495 = scmp.lt.s32.totalorder %s31, 1
        %s496 = scalar_select %p495, %s31, 1
        %s497 = smul.addr %s496, 8
        %s498 = scalar_lea.vmem %s0, %s497
        %p499 = pneg %p52
        %p500 = pneg %p49
        %p501 = pneg %p73
        %p502 = pneg %p70
        %p503 = pneg %p94
        %p504 = pneg %p91
        %p505 = pneg %p115
        %p506 = pneg %p112
        %p507 = pneg %p136
        %p508 = pneg %p133
        %p509 = pneg %p157
        %p510 = pneg %p154
        %p511 = pneg %p178
        %p512 = pneg %p175
        %p513 = pneg %p199
        %p514 = pneg %p196
        %p515 = pneg %p220
        %p516 = pneg %p217
        %p517 = pneg %p241
        %p518 = pneg %p238
        %p519 = pneg %p262
        %p520 = pneg %p259
        %p521 = pneg %p283
        %p522 = pneg %p280
        %p523 = pneg %p304
        %p524 = pneg %p301
        %p525 = pneg %p325
        %p526 = pneg %p322
        %p527 = pneg %p346
        %p528 = pneg %p343
        %p529 = pneg %p367
        %p530 = pneg %p364
        %p531 = pneg %p388
        %p532 = pneg %p385
        %p533 = pneg %p414
        %p534 = pneg %p411
        %s535 = sand.u32 %s401, 1
        %s536 = scalar_lea.sflag [#allocation3], %s535
        %s537 = sand.u32 %s401, 1
        %s538 = smul.addr %s537, 8
        %s539 = scalar_lea.vmem [#allocation2], %s538
        %p540 = scmp.lt.s32.totalorder %s31, 1
        %s541 = scalar_select %p540, %s31, 1
        %s542 = smul.addr %s541, 8
        %s543 = scalar_lea.vmem %s0, %s542
        %v545 = vld [vmem:[%s543] sm:$0xff]
        %v546 = vpack.c.bf16 %v545, %v545
        %v547 = vld [vmem:[%s1] sm:$0xf]
        %v548 = vld [vmem:[%s1 + $0x4] sm:$0xf]
        %v549 = vld [vmem:[%s1 + $0x8] sm:$0xf]
        %v550 = vld [vmem:[%s1 + $0xc] sm:$0xf]
        %v551 = vld [vmem:[%s1 + $0x10] sm:$0xf]
        %v552 = vld [vmem:[%s1 + $0x14] sm:$0xf]
        %v553 = vld [vmem:[%s1 + $0x18] sm:$0xf]
        %v554 = vld [vmem:[%s1 + $0x1c] sm:$0xf]
        %v555 = vld [vmem:[%s1 + $0x20] sm:$0xf]
        %v556 = vld [vmem:[%s1 + $0x24] sm:$0xf]
        %v557 = vld [vmem:[%s1 + $0x28] sm:$0xf]
        %v558 = vld [vmem:[%s1 + $0x2c] sm:$0xf]
        %v559 = vld [vmem:[%s1 + $0x30] sm:$0xf]
        %v560 = vld [vmem:[%s1 + $0x34] sm:$0xf]
        %v561 = vld [vmem:[%s1 + $0x38] sm:$0xf]
        %v562 = vld [vmem:[%s1 + $0x3c] sm:$0xf]
        %v563 = vld [vmem:[%s1 + $0x40] sm:$0xf]
        %v564 = vld [vmem:[%s1 + $0x44] sm:$0xf]
        %v565 = vld [vmem:[%s1 + $0x48] sm:$0xf]
        %v566 = vld [vmem:[%s1 + $0x4c] sm:$0xf]
        %v567 = vld [vmem:[%s1 + $0x50] sm:$0xf]
        %v568 = vld [vmem:[%s1 + $0x54] sm:$0xf]
        %v569 = vld [vmem:[%s1 + $0x58] sm:$0xf]
        %v570 = vld [vmem:[%s1 + $0x5c] sm:$0xf]
        %v571 = vld [vmem:[%s1 + $0x60] sm:$0xf]
        %v572 = vld [vmem:[%s1 + $0x64] sm:$0xf]
        %v573 = vld [vmem:[%s1 + $0x68] sm:$0xf]
        %v574 = vld [vmem:[%s1 + $0x6c] sm:$0xf]
        %v575 = vld [vmem:[%s1 + $0x70] sm:$0xf]
        %v576 = vld [vmem:[%s1 + $0x74] sm:$0xf]
        %v577 = vld [vmem:[%s1 + $0x78] sm:$0xf]
        %v578 = vld [vmem:[%s1 + $0x7c] sm:$0xf]
        %v579 = vld [vmem:[%s2] sm:$0x1]
        %v580 = vld [vmem:[%s2 + $0x1] sm:$0x1]
        %v581 = vld [vmem:[%s2 + $0x2] sm:$0x1]
        %v582 = vld [vmem:[%s2 + $0x3] sm:$0x1]
        %v583 = vld [vmem:[%s2 + $0x4] sm:$0x1]
        %v584 = vld [vmem:[%s2 + $0x5] sm:$0x1]
        %v585 = vld [vmem:[%s2 + $0x6] sm:$0x1]
        %v586 = vld [vmem:[%s2 + $0x7] sm:$0x1]
        %v595 = vlaneseq
        %v596 = vshrl.u32 %v595, 7
        %v597 = vsub.s32 0, %v596
        %v598 = vrot.slane %v579, %v597
        %v599 = vlaneseq
        %v600 = vshrl.u32 %v599, 7
        %v601 = vsub.s32 0, %v600
        %v602 = vrot.slane %v580, %v601
        %v603 = vlaneseq
        %v604 = vshrl.u32 %v603, 7
        %v605 = vsub.s32 0, %v604
        %v606 = vrot.slane %v581, %v605
        %v607 = vlaneseq
        %v608 = vshrl.u32 %v607, 7
        %v609 = vsub.s32 0, %v608
        %v610 = vrot.slane %v582, %v609
        %v611 = vlaneseq
        %v612 = vshrl.u32 %v611, 7
        %v613 = vsub.s32 0, %v612
        %v614 = vrot.slane %v583, %v613
        %v615 = vlaneseq
        %v616 = vshrl.u32 %v615, 7
        %v617 = vsub.s32 0, %v616
        %v618 = vrot.slane %v584, %v617
        %v619 = vlaneseq
        %v620 = vshrl.u32 %v619, 7
        %v621 = vsub.s32 0, %v620
        %v622 = vrot.slane %v585, %v621
        %v623 = vlaneseq
        %v624 = vshrl.u32 %v623, 7
        %v625 = vsub.s32 0, %v624
        %v626 = vrot.slane %v586, %v625
        %v639 = vunpack.c.l.b16 %v547
        %v640 = vunpack.c.l.b16 %v548
        %v641 = vunpack.c.l.b16 %v549
        %v642 = vunpack.c.l.b16 %v550
        %v643 = vpack.c.b16 %v640, %v639
        %v644 = vpack.c.b16 %v642, %v641
        %vm647 = vcmask 261120
        %v649 = vsel %vm647, %v546, 0
        %651 = vmatprep.subr.bf16.mxu0 0
        %652 = vmatpush1.bf16.msra.mxu0 %v643
        %653 = vmatprep.subr.bf16.mxu0 0
        %654 = vmatpush1.bf16.msra.mxu0 %v644
        %655 = vmatprep.subr.bf16.mxu0 0
        %656 = vmatpush1.bf16.msra.mxu0 0
        %657 = vmatprep.subr.bf16.mxu0 0
        %658 = vmatpush1.bf16.msra.mxu0 0
        %659 = vmatprep.subr.bf16.mxu0 0
        %660 = vmatpush1.bf16.msra.mxu0 0
        %661 = vmatprep.subr.bf16.mxu0 0
        %662 = vmatpush1.bf16.msra.mxu0 0
        %663 = vmatprep.subr.bf16.mxu0 0
        %664 = vmatpush1.bf16.msra.mxu0 0
        %665 = vmatprep.subr.bf16.mxu0 0
        %666 = vmatpush1.bf16.msra.mxu0 0
        %667 = vmatprep.subr.bf16.mxu0 0
        %668 = vmatpush1.bf16.msra.mxu0 0
        %669 = vmatprep.subr.bf16.mxu0 0
        %670 = vmatpush1.bf16.msra.mxu0 0
        %671 = vmatprep.subr.bf16.mxu0 0
        %672 = vmatpush1.bf16.msra.mxu0 0
        %673 = vmatprep.subr.bf16.mxu0 0
        %674 = vmatpush1.bf16.msra.mxu0 0
        %675 = vmatprep.subr.bf16.mxu0 0
        %676 = vmatpush1.bf16.msra.mxu0 0
        %677 = vmatprep.subr.bf16.mxu0 0
        %678 = vmatpush1.bf16.msra.mxu0 0
        %679 = vmatprep.subr.bf16.mxu0 0
        %680 = vmatpush1.bf16.msra.mxu0 0
        %681 = vmatprep.subr.bf16.mxu0 0
        %682 = vmatpush1.bf16.msra.mxu0 0
        %683 = vmatprep.mubr.bf16.mxu0 0
        %684 = vmatmul.mubr.bf16.gmra.mrb[0].mxu0 %v649
        %v685 = vpop.f32.mrb[0].mxu0
        %v686 = vadd.f32 %v598, %v685
        %v687 = vpop.f32.mrb[0].mxu0
        %v688 = vpop.f32.mrb[0].mxu0
        %v689 = vpop.f32.mrb[0].mxu0
        %690 = vdwg.mxu0
        %v695 = vunpack.c.l.b16 %v551
        %v696 = vunpack.c.l.b16 %v552
        %v697 = vunpack.c.l.b16 %v553
        %v698 = vunpack.c.l.b16 %v554
        %v699 = vpack.c.b16 %v696, %v695
        %v700 = vpack.c.b16 %v698, %v697
        %703 = vmatprep.subr.bf16.mxu0 0
        %704 = vmatpush1.bf16.msra.mxu0 %v699
        %705 = vmatprep.subr.bf16.mxu0 0
        %706 = vmatpush1.bf16.msra.mxu0 %v700
        %707 = vmatprep.subr.bf16.mxu0 0
        %708 = vmatpush1.bf16.msra.mxu0 0
        %709 = vmatprep.subr.bf16.mxu0 0
        %710 = vmatpush1.bf16.msra.mxu0 0
        %711 = vmatprep.subr.bf16.mxu0 0
        %712 = vmatpush1.bf16.msra.mxu0 0
        %713 = vmatprep.subr.bf16.mxu0 0
        %714 = vmatpush1.bf16.msra.mxu0 0
        %715 = vmatprep.subr.bf16.mxu0 0
        %716 = vmatpush1.bf16.msra.mxu0 0
        %717 = vmatprep.subr.bf16.mxu0 0
        %718 = vmatpush1.bf16.msra.mxu0 0
        %719 = vmatprep.subr.bf16.mxu0 0
        %720 = vmatpush1.bf16.msra.mxu0 0
        %721 = vmatprep.subr.bf16.mxu0 0
        %722 = vmatpush1.bf16.msra.mxu0 0
        %723 = vmatprep.subr.bf16.mxu0 0
        %724 = vmatpush1.bf16.msra.mxu0 0
        %725 = vmatprep.subr.bf16.mxu0 0
        %726 = vmatpush1.bf16.msra.mxu0 0
        %727 = vmatprep.subr.bf16.mxu0 0
        %728 = vmatpush1.bf16.msra.mxu0 0
        %729 = vmatprep.subr.bf16.mxu0 0
        %730 = vmatpush1.bf16.msra.mxu0 0
        %731 = vmatprep.subr.bf16.mxu0 0
        %732 = vmatpush1.bf16.msra.mxu0 0
        %733 = vmatprep.subr.bf16.mxu0 0
        %734 = vmatpush1.bf16.msra.mxu0 0
        %735 = vmatprep.mubr.bf16.mxu0 0
        %736 = vmatmul.mubr.bf16.gmra.mrb[0].mxu0 %v649
        %v737 = vpop.f32.mrb[0].mxu0
        %v738 = vadd.f32 %v602, %v737
        %v739 = vpop.f32.mrb[0].mxu0
        %v740 = vpop.f32.mrb[0].mxu0
        %v741 = vpop.f32.mrb[0].mxu0
        %742 = vdwg.mxu0
        %v747 = vunpack.c.l.b16 %v555
        %v748 = vunpack.c.l.b16 %v556
        %v749 = vunpack.c.l.b16 %v557
        %v750 = vunpack.c.l.b16 %v558
        %v751 = vpack.c.b16 %v748, %v747
        %v752 = vpack.c.b16 %v750, %v749
        %755 = vmatprep.subr.bf16.mxu0 0
        %756 = vmatpush1.bf16.msra.mxu0 %v751
        %757 = vmatprep.subr.bf16.mxu0 0
        %758 = vmatpush1.bf16.msra.mxu0 %v752
        %759 = vmatprep.subr.bf16.mxu0 0
        %760 = vmatpush1.bf16.msra.mxu0 0
        %761 = vmatprep.subr.bf16.mxu0 0
        %762 = vmatpush1.bf16.msra.mxu0 0
        %763 = vmatprep.subr.bf16.mxu0 0
        %764 = vmatpush1.bf16.msra.mxu0 0
        %765 = vmatprep.subr.bf16.mxu0 0
        %766 = vmatpush1.bf16.msra.mxu0 0
        %767 = vmatprep.subr.bf16.mxu0 0
        %768 = vmatpush1.bf16.msra.mxu0 0
        %769 = vmatprep.subr.bf16.mxu0 0
        %770 = vmatpush1.bf16.msra.mxu0 0
        %771 = vmatprep.subr.bf16.mxu0 0
        %772 = vmatpush1.bf16.msra.mxu0 0
        %773 = vmatprep.subr.bf16.mxu0 0
        %774 = vmatpush1.bf16.msra.mxu0 0
        %775 = vmatprep.subr.bf16.mxu0 0
        %776 = vmatpush1.bf16.msra.mxu0 0
        %777 = vmatprep.subr.bf16.mxu0 0
        %778 = vmatpush1.bf16.msra.mxu0 0
        %779 = vmatprep.subr.bf16.mxu0 0
        %780 = vmatpush1.bf16.msra.mxu0 0
        %781 = vmatprep.subr.bf16.mxu0 0
        %782 = vmatpush1.bf16.msra.mxu0 0
        %783 = vmatprep.subr.bf16.mxu0 0
        %784 = vmatpush1.bf16.msra.mxu0 0
        %785 = vmatprep.subr.bf16.mxu0 0
        %786 = vmatpush1.bf16.msra.mxu0 0
        %787 = vmatprep.mubr.bf16.mxu0 0
        %788 = vmatmul.mubr.bf16.gmra.mrb[0].mxu0 %v649
        %v789 = vpop.f32.mrb[0].mxu0
        %v790 = vadd.f32 %v606, %v789
        %v791 = vpop.f32.mrb[0].mxu0
        %v792 = vpop.f32.mrb[0].mxu0
        %v793 = vpop.f32.mrb[0].mxu0
        %794 = vdwg.mxu0
        %v799 = vunpack.c.l.b16 %v559
        %v800 = vunpack.c.l.b16 %v560
        %v801 = vunpack.c.l.b16 %v561
        %v802 = vunpack.c.l.b16 %v562
        %v803 = vpack.c.b16 %v800, %v799
        %v804 = vpack.c.b16 %v802, %v801
        %807 = vmatprep.subr.bf16.mxu0 0
        %808 = vmatpush1.bf16.msra.mxu0 %v803
        %809 = vmatprep.subr.bf16.mxu0 0
        %810 = vmatpush1.bf16.msra.mxu0 %v804
        %811 = vmatprep.subr.bf16.mxu0 0
        %812 = vmatpush1.bf16.msra.mxu0 0
        %813 = vmatprep.subr.bf16.mxu0 0
        %814 = vmatpush1.bf16.msra.mxu0 0
        %815 = vmatprep.subr.bf16.mxu0 0
        %816 = vmatpush1.bf16.msra.mxu0 0
        %817 = vmatprep.subr.bf16.mxu0 0
        %818 = vmatpush1.bf16.msra.mxu0 0
        %819 = vmatprep.subr.bf16.mxu0 0
        %820 = vmatpush1.bf16.msra.mxu0 0
        %821 = vmatprep.subr.bf16.mxu0 0
        %822 = vmatpush1.bf16.msra.mxu0 0
        %823 = vmatprep.subr.bf16.mxu0 0
        %824 = vmatpush1.bf16.msra.mxu0 0
        %825 = vmatprep.subr.bf16.mxu0 0
        %826 = vmatpush1.bf16.msra.mxu0 0
        %827 = vmatprep.subr.bf16.mxu0 0
        %828 = vmatpush1.bf16.msra.mxu0 0
        %829 = vmatprep.subr.bf16.mxu0 0
        %830 = vmatpush1.bf16.msra.mxu0 0
        %831 = vmatprep.subr.bf16.mxu0 0
        %832 = vmatpush1.bf16.msra.mxu0 0
        %833 = vmatprep.subr.bf16.mxu0 0
        %834 = vmatpush1.bf16.msra.mxu0 0
        %835 = vmatprep.subr.bf16.mxu0 0
        %836 = vmatpush1.bf16.msra.mxu0 0
        %837 = vmatprep.subr.bf16.mxu0 0
        %838 = vmatpush1.bf16.msra.mxu0 0
        %839 = vmatprep.mubr.bf16.mxu0 0
        %840 = vmatmul.mubr.bf16.gmra.mrb[0].mxu0 %v649
        %v841 = vpop.f32.mrb[0].mxu0
        %v842 = vadd.f32 %v610, %v841
        %v843 = vpop.f32.mrb[0].mxu0
        %v844 = vpop.f32.mrb[0].mxu0
        %v845 = vpop.f32.mrb[0].mxu0
        %846 = vdwg.mxu0
        %v851 = vunpack.c.l.b16 %v563
        %v852 = vunpack.c.l.b16 %v564
        %v853 = vunpack.c.l.b16 %v565
        %v854 = vunpack.c.l.b16 %v566
        %v855 = vpack.c.b16 %v852, %v851
        %v856 = vpack.c.b16 %v854, %v853
        %859 = vmatprep.subr.bf16.mxu0 0
        %860 = vmatpush1.bf16.msra.mxu0 %v855
        %861 = vmatprep.subr.bf16.mxu0 0
        %862 = vmatpush1.bf16.msra.mxu0 %v856
        %863 = vmatprep.subr.bf16.mxu0 0
        %864 = vmatpush1.bf16.msra.mxu0 0
        %865 = vmatprep.subr.bf16.mxu0 0
        %866 = vmatpush1.bf16.msra.mxu0 0
        %867 = vmatprep.subr.bf16.mxu0 0
        %868 = vmatpush1.bf16.msra.mxu0 0
        %869 = vmatprep.subr.bf16.mxu0 0
        %870 = vmatpush1.bf16.msra.mxu0 0
        %871 = vmatprep.subr.bf16.mxu0 0
        %872 = vmatpush1.bf16.msra.mxu0 0
        %873 = vmatprep.subr.bf16.mxu0 0
        %874 = vmatpush1.bf16.msra.mxu0 0
        %875 = vmatprep.subr.bf16.mxu0 0
        %876 = vmatpush1.bf16.msra.mxu0 0
        %877 = vmatprep.subr.bf16.mxu0 0
        %878 = vmatpush1.bf16.msra.mxu0 0
        %879 = vmatprep.subr.bf16.mxu0 0
        %880 = vmatpush1.bf16.msra.mxu0 0
        %881 = vmatprep.subr.bf16.mxu0 0
        %882 = vmatpush1.bf16.msra.mxu0 0
        %883 = vmatprep.subr.bf16.mxu0 0
        %884 = vmatpush1.bf16.msra.mxu0 0
        %885 = vmatprep.subr.bf16.mxu0 0
        %886 = vmatpush1.bf16.msra.mxu0 0
        %887 = vmatprep.subr.bf16.mxu0 0
        %888 = vmatpush1.bf16.msra.mxu0 0
        %889 = vmatprep.subr.bf16.mxu0 0
        %890 = vmatpush1.bf16.msra.mxu0 0
        %891 = vmatprep.mubr.bf16.mxu0 0
        %892 = vmatmul.mubr.bf16.gmra.mrb[0].mxu0 %v649
        %v893 = vpop.f32.mrb[0].mxu0
        %v894 = vadd.f32 %v614, %v893
        %v895 = vpop.f32.mrb[0].mxu0
        %v896 = vpop.f32.mrb[0].mxu0
        %v897 = vpop.f32.mrb[0].mxu0
        %898 = vdwg.mxu0
        %v903 = vunpack.c.l.b16 %v567
        %v904 = vunpack.c.l.b16 %v568
        %v905 = vunpack.c.l.b16 %v569
        %v906 = vunpack.c.l.b16 %v570
        %v907 = vpack.c.b16 %v904, %v903
        %v908 = vpack.c.b16 %v906, %v905
        %911 = vmatprep.subr.bf16.mxu0 0
        %912 = vmatpush1.bf16.msra.mxu0 %v907
        %913 = vmatprep.subr.bf16.mxu0 0
        %914 = vmatpush1.bf16.msra.mxu0 %v908
        %915 = vmatprep.subr.bf16.mxu0 0
        %916 = vmatpush1.bf16.msra.mxu0 0
        %917 = vmatprep.subr.bf16.mxu0 0
        %918 = vmatpush1.bf16.msra.mxu0 0
        %919 = vmatprep.subr.bf16.mxu0 0
        %920 = vmatpush1.bf16.msra.mxu0 0
        %921 = vmatprep.subr.bf16.mxu0 0
        %922 = vmatpush1.bf16.msra.mxu0 0
        %923 = vmatprep.subr.bf16.mxu0 0
        %924 = vmatpush1.bf16.msra.mxu0 0
        %925 = vmatprep.subr.bf16.mxu0 0
        %926 = vmatpush1.bf16.msra.mxu0 0
        %927 = vmatprep.subr.bf16.mxu0 0
        %928 = vmatpush1.bf16.msra.mxu0 0
        %929 = vmatprep.subr.bf16.mxu0 0
        %930 = vmatpush1.bf16.msra.mxu0 0
        %931 = vmatprep.subr.bf16.mxu0 0
        %932 = vmatpush1.bf16.msra.mxu0 0
        %933 = vmatprep.subr.bf16.mxu0 0
        %934 = vmatpush1.bf16.msra.mxu0 0
        %935 = vmatprep.subr.bf16.mxu0 0
        %936 = vmatpush1.bf16.msra.mxu0 0
        %937 = vmatprep.subr.bf16.mxu0 0
        %938 = vmatpush1.bf16.msra.mxu0 0
        %939 = vmatprep.subr.bf16.mxu0 0
        %940 = vmatpush1.bf16.msra.mxu0 0
        %941 = vmatprep.subr.bf16.mxu0 0
        %942 = vmatpush1.bf16.msra.mxu0 0
        %943 = vmatprep.mubr.bf16.mxu0 0
        %944 = vmatmul.mubr.bf16.gmra.mrb[0].mxu0 %v649
        %v945 = vpop.f32.mrb[0].mxu0
        %v946 = vadd.f32 %v618, %v945
        %v947 = vpop.f32.mrb[0].mxu0
        %v948 = vpop.f32.mrb[0].mxu0
        %v949 = vpop.f32.mrb[0].mxu0
        %950 = vdwg.mxu0
        %v955 = vunpack.c.l.b16 %v571
        %v956 = vunpack.c.l.b16 %v572
        %v957 = vunpack.c.l.b16 %v573
        %v958 = vunpack.c.l.b16 %v574
        %v959 = vpack.c.b16 %v956, %v955
        %v960 = vpack.c.b16 %v958, %v957
        %963 = vmatprep.subr.bf16.mxu0 0
        %964 = vmatpush1.bf16.msra.mxu0 %v959
        %965 = vmatprep.subr.bf16.mxu0 0
        %966 = vmatpush1.bf16.msra.mxu0 %v960
        %967 = vmatprep.subr.bf16.mxu0 0
        %968 = vmatpush1.bf16.msra.mxu0 0
        %969 = vmatprep.subr.bf16.mxu0 0
        %970 = vmatpush1.bf16.msra.mxu0 0
        %971 = vmatprep.subr.bf16.mxu0 0
        %972 = vmatpush1.bf16.msra.mxu0 0
        %973 = vmatprep.subr.bf16.mxu0 0
        %974 = vmatpush1.bf16.msra.mxu0 0
        %975 = vmatprep.subr.bf16.mxu0 0
        %976 = vmatpush1.bf16.msra.mxu0 0
        %977 = vmatprep.subr.bf16.mxu0 0
        %978 = vmatpush1.bf16.msra.mxu0 0
        %979 = vmatprep.subr.bf16.mxu0 0
        %980 = vmatpush1.bf16.msra.mxu0 0
        %981 = vmatprep.subr.bf16.mxu0 0
        %982 = vmatpush1.bf16.msra.mxu0 0
        %983 = vmatprep.subr.bf16.mxu0 0
        %984 = vmatpush1.bf16.msra.mxu0 0
        %985 = vmatprep.subr.bf16.mxu0 0
        %986 = vmatpush1.bf16.msra.mxu0 0
        %987 = vmatprep.subr.bf16.mxu0 0
        %988 = vmatpush1.bf16.msra.mxu0 0
        %989 = vmatprep.subr.bf16.mxu0 0
        %990 = vmatpush1.bf16.msra.mxu0 0
        %991 = vmatprep.subr.bf16.mxu0 0
        %992 = vmatpush1.bf16.msra.mxu0 0
        %993 = vmatprep.subr.bf16.mxu0 0
        %994 = vmatpush1.bf16.msra.mxu0 0
        %995 = vmatprep.mubr.bf16.mxu0 0
        %996 = vmatmul.mubr.bf16.gmra.mrb[0].mxu0 %v649
        %v997 = vpop.f32.mrb[0].mxu0
        %v998 = vadd.f32 %v622, %v997
        %v999 = vpop.f32.mrb[0].mxu0
        %v1000 = vpop.f32.mrb[0].mxu0
        %v1001 = vpop.f32.mrb[0].mxu0
        %1002 = vdwg.mxu0
        %v1007 = vunpack.c.l.b16 %v575
        %v1008 = vunpack.c.l.b16 %v576
        %v1009 = vunpack.c.l.b16 %v577
        %v1010 = vunpack.c.l.b16 %v578
        %v1011 = vpack.c.b16 %v1008, %v1007
        %v1012 = vpack.c.b16 %v1010, %v1009
        %1015 = vmatprep.subr.bf16.mxu0 0
        %1016 = vmatpush1.bf16.msra.mxu0 %v1011
        %1017 = vmatprep.subr.bf16.mxu0 0
        %1018 = vmatpush1.bf16.msra.mxu0 %v1012
        %1019 = vmatprep.subr.bf16.mxu0 0
        %1020 = vmatpush1.bf16.msra.mxu0 0
        %1021 = vmatprep.subr.bf16.mxu0 0
        %1022 = vmatpush1.bf16.msra.mxu0 0
        %1023 = vmatprep.subr.bf16.mxu0 0
        %1024 = vmatpush1.bf16.msra.mxu0 0
        %1025 = vmatprep.subr.bf16.mxu0 0
        %1026 = vmatpush1.bf16.msra.mxu0 0
        %1027 = vmatprep.subr.bf16.mxu0 0
        %1028 = vmatpush1.bf16.msra.mxu0 0
        %1029 = vmatprep.subr.bf16.mxu0 0
        %1030 = vmatpush1.bf16.msra.mxu0 0
        %1031 = vmatprep.subr.bf16.mxu0 0
        %1032 = vmatpush1.bf16.msra.mxu0 0
        %1033 = vmatprep.subr.bf16.mxu0 0
        %1034 = vmatpush1.bf16.msra.mxu0 0
        %1035 = vmatprep.subr.bf16.mxu0 0
        %1036 = vmatpush1.bf16.msra.mxu0 0
        %1037 = vmatprep.subr.bf16.mxu0 0
        %1038 = vmatpush1.bf16.msra.mxu0 0
        %1039 = vmatprep.subr.bf16.mxu0 0
        %1040 = vmatpush1.bf16.msra.mxu0 0
        %1041 = vmatprep.subr.bf16.mxu0 0
        %1042 = vmatpush1.bf16.msra.mxu0 0
        %1043 = vmatprep.subr.bf16.mxu0 0
        %1044 = vmatpush1.bf16.msra.mxu0 0
        %1045 = vmatprep.subr.bf16.mxu0 0
        %1046 = vmatpush1.bf16.msra.mxu0 0
        %1047 = vmatprep.mubr.bf16.mxu0 0
        %1048 = vmatmul.mubr.bf16.gmra.mrb[0].mxu0 %v649
        %v1049 = vpop.f32.mrb[0].mxu0
        %v1050 = vadd.f32 %v626, %v1049
        %v1051 = vpop.f32.mrb[0].mxu0
        %v1052 = vpop.f32.mrb[0].mxu0
        %v1053 = vpop.f32.mrb[0].mxu0
        %1054 = vdwg.mxu0
        %v1055 = vld [vmem:[%s3] sm:$0xf]
        %v1056 = vld [vmem:[%s3 + $0x4] sm:$0xf]
        %v1057 = vld [vmem:[%s3 + $0x8] sm:$0xf]
        %v1058 = vld [vmem:[%s3 + $0xc] sm:$0xf]
        %v1059 = vld [vmem:[%s3 + $0x10] sm:$0xf]
        %v1060 = vld [vmem:[%s3 + $0x14] sm:$0xf]
        %v1061 = vld [vmem:[%s3 + $0x18] sm:$0xf]
        %v1062 = vld [vmem:[%s3 + $0x1c] sm:$0xf]
        %v1063 = vld [vmem:[%s3 + $0x20] sm:$0xf]
        %v1064 = vld [vmem:[%s3 + $0x24] sm:$0xf]
        %v1065 = vld [vmem:[%s3 + $0x28] sm:$0xf]
        %v1066 = vld [vmem:[%s3 + $0x2c] sm:$0xf]
        %v1067 = vld [vmem:[%s3 + $0x30] sm:$0xf]
        %v1068 = vld [vmem:[%s3 + $0x34] sm:$0xf]
        %v1069 = vld [vmem:[%s3 + $0x38] sm:$0xf]
        %v1070 = vld [vmem:[%s3 + $0x3c] sm:$0xf]
        %v1071 = vld [vmem:[%s3 + $0x40] sm:$0xf]
        %v1072 = vld [vmem:[%s3 + $0x44] sm:$0xf]
        %v1073 = vld [vmem:[%s3 + $0x48] sm:$0xf]
        %v1074 = vld [vmem:[%s3 + $0x4c] sm:$0xf]
        %v1075 = vld [vmem:[%s3 + $0x50] sm:$0xf]
        %v1076 = vld [vmem:[%s3 + $0x54] sm:$0xf]
        %v1077 = vld [vmem:[%s3 + $0x58] sm:$0xf]
        %v1078 = vld [vmem:[%s3 + $0x5c] sm:$0xf]
        %v1079 = vld [vmem:[%s3 + $0x60] sm:$0xf]
        %v1080 = vld [vmem:[%s3 + $0x64] sm:$0xf]
        %v1081 = vld [vmem:[%s3 + $0x68] sm:$0xf]
        %v1082 = vld [vmem:[%s3 + $0x6c] sm:$0xf]
        %v1083 = vld [vmem:[%s3 + $0x70] sm:$0xf]
        %v1084 = vld [vmem:[%s3 + $0x74] sm:$0xf]
        %v1085 = vld [vmem:[%s3 + $0x78] sm:$0xf]
        %v1086 = vld [vmem:[%s3 + $0x7c] sm:$0xf]
        %v1087 = vld [vmem:[%s4] sm:$0x1]
        %v1088 = vld [vmem:[%s4 + $0x1] sm:$0x1]
        %v1089 = vld [vmem:[%s4 + $0x2] sm:$0x1]
        %v1090 = vld [vmem:[%s4 + $0x3] sm:$0x1]
        %v1091 = vld [vmem:[%s4 + $0x4] sm:$0x1]
        %v1092 = vld [vmem:[%s4 + $0x5] sm:$0x1]
        %v1093 = vld [vmem:[%s4 + $0x6] sm:$0x1]
        %v1094 = vld [vmem:[%s4 + $0x7] sm:$0x1]
        %v1103 = vlaneseq
        %v1104 = vshrl.u32 %v1103, 7
        %v1105 = vsub.s32 0, %v1104
        %v1106 = vrot.slane %v1087, %v1105
        %v1107 = vlaneseq
        %v1108 = vshrl.u32 %v1107, 7
        %v1109 = vsub.s32 0, %v1108
        %v1110 = vrot.slane %v1088, %v1109
        %v1111 = vlaneseq
        %v1112 = vshrl.u32 %v1111, 7
        %v1113 = vsub.s32 0, %v1112
        %v1114 = vrot.slane %v1089, %v1113
        %v1115 = vlaneseq
        %v1116 = vshrl.u32 %v1115, 7
        %v1117 = vsub.s32 0, %v1116
        %v1118 = vrot.slane %v1090, %v1117
        %v1119 = vlaneseq
        %v1120 = vshrl.u32 %v1119, 7
        %v1121 = vsub.s32 0, %v1120
        %v1122 = vrot.slane %v1091, %v1121
        %v1123 = vlaneseq
        %v1124 = vshrl.u32 %v1123, 7
        %v1125 = vsub.s32 0, %v1124
        %v1126 = vrot.slane %v1092, %v1125
        %v1127 = vlaneseq
        %v1128 = vshrl.u32 %v1127, 7
        %v1129 = vsub.s32 0, %v1128
        %v1130 = vrot.slane %v1093, %v1129
        %v1131 = vlaneseq
        %v1132 = vshrl.u32 %v1131, 7
        %v1133 = vsub.s32 0, %v1132
        %v1134 = vrot.slane %v1094, %v1133
        %v1147 = vunpack.c.l.b16 %v1055
        %v1148 = vunpack.c.l.b16 %v1056
        %v1149 = vunpack.c.l.b16 %v1057
        %v1150 = vunpack.c.l.b16 %v1058
        %v1151 = vpack.c.b16 %v1148, %v1147
        %v1152 = vpack.c.b16 %v1150, %v1149
        %1155 = vmatprep.subr.bf16.mxu0 0
        %1156 = vmatpush1.bf16.msra.mxu0 %v1151
        %1157 = vmatprep.subr.bf16.mxu0 0
        %1158 = vmatpush1.bf16.msra.mxu0 %v1152
        %1159 = vmatprep.subr.bf16.mxu0 0
        %1160 = vmatpush1.bf16.msra.mxu0 0
        %1161 = vmatprep.subr.bf16.mxu0 0
        %1162 = vmatpush1.bf16.msra.mxu0 0
        %1163 = vmatprep.subr.bf16.mxu0 0
        %1164 = vmatpush1.bf16.msra.mxu0 0
        %1165 = vmatprep.subr.bf16.mxu0 0
        %1166 = vmatpush1.bf16.msra.mxu0 0
        %1167 = vmatprep.subr.bf16.mxu0 0
        %1168 = vmatpush1.bf16.msra.mxu0 0
        %1169 = vmatprep.subr.bf16.mxu0 0
        %1170 = vmatpush1.bf16.msra.mxu0 0
        %1171 = vmatprep.subr.bf16.mxu0 0
        %1172 = vmatpush1.bf16.msra.mxu0 0
        %1173 = vmatprep.subr.bf16.mxu0 0
        %1174 = vmatpush1.bf16.msra.mxu0 0
        %1175 = vmatprep.subr.bf16.mxu0 0
        %1176 = vmatpush1.bf16.msra.mxu0 0
        %1177 = vmatprep.subr.bf16.mxu0 0
        %1178 = vmatpush1.bf16.msra.mxu0 0
        %1179 = vmatprep.subr.bf16.mxu0 0
        %1180 = vmatpush1.bf16.msra.mxu0 0
        %1181 = vmatprep.subr.bf16.mxu0 0
        %1182 = vmatpush1.bf16.msra.mxu0 0
        %1183 = vmatprep.subr.bf16.mxu0 0
        %1184 = vmatpush1.bf16.msra.mxu0 0
        %1185 = vmatprep.subr.bf16.mxu0 0
        %1186 = vmatpush1.bf16.msra.mxu0 0
        %1187 = vmatprep.mubr.bf16.mxu0 0
        %1188 = vmatmul.mubr.bf16.gmra.mrb[0].mxu0 %v649
        %v1189 = vpop.f32.mrb[0].mxu0
        %v1190 = vadd.f32 %v1106, %v1189
        %v1191 = vpop.f32.mrb[0].mxu0
        %v1192 = vpop.f32.mrb[0].mxu0
        %v1193 = vpop.f32.mrb[0].mxu0
        %1194 = vdwg.mxu0
        %v1199 = vunpack.c.l.b16 %v1059
        %v1200 = vunpack.c.l.b16 %v1060
        %v1201 = vunpack.c.l.b16 %v1061
        %v1202 = vunpack.c.l.b16 %v1062
        %v1203 = vpack.c.b16 %v1200, %v1199
        %v1204 = vpack.c.b16 %v1202, %v1201
        %1207 = vmatprep.subr.bf16.mxu0 0
        %1208 = vmatpush1.bf16.msra.mxu0 %v1203
        %1209 = vmatprep.subr.bf16.mxu0 0
        %1210 = vmatpush1.bf16.msra.mxu0 %v1204
        %1211 = vmatprep.subr.bf16.mxu0 0
        %1212 = vmatpush1.bf16.msra.mxu0 0
        %1213 = vmatprep.subr.bf16.mxu0 0
        %1214 = vmatpush1.bf16.msra.mxu0 0
        %1215 = vmatprep.subr.bf16.mxu0 0
        %1216 = vmatpush1.bf16.msra.mxu0 0
        %1217 = vmatprep.subr.bf16.mxu0 0
        %1218 = vmatpush1.bf16.msra.mxu0 0
        %1219 = vmatprep.subr.bf16.mxu0 0
        %1220 = vmatpush1.bf16.msra.mxu0 0
        %1221 = vmatprep.subr.bf16.mxu0 0
        %1222 = vmatpush1.bf16.msra.mxu0 0
        %1223 = vmatprep.subr.bf16.mxu0 0
        %1224 = vmatpush1.bf16.msra.mxu0 0
        %1225 = vmatprep.subr.bf16.mxu0 0
        %1226 = vmatpush1.bf16.msra.mxu0 0
        %1227 = vmatprep.subr.bf16.mxu0 0
        %1228 = vmatpush1.bf16.msra.mxu0 0
        %1229 = vmatprep.subr.bf16.mxu0 0
        %1230 = vmatpush1.bf16.msra.mxu0 0
        %1231 = vmatprep.subr.bf16.mxu0 0
        %1232 = vmatpush1.bf16.msra.mxu0 0
        %1233 = vmatprep.subr.bf16.mxu0 0
        %1234 = vmatpush1.bf16.msra.mxu0 0
        %1235 = vmatprep.subr.bf16.mxu0 0
        %1236 = vmatpush1.bf16.msra.mxu0 0
        %1237 = vmatprep.subr.bf16.mxu0 0
        %1238 = vmatpush1.bf16.msra.mxu0 0
        %1239 = vmatprep.mubr.bf16.mxu0 0
        %1240 = vmatmul.mubr.bf16.gmra.mrb[0].mxu0 %v649
        %v1241 = vpop.f32.mrb[0].mxu0
        %v1242 = vadd.f32 %v1110, %v1241
        %v1243 = vpop.f32.mrb[0].mxu0
        %v1244 = vpop.f32.mrb[0].mxu0
        %v1245 = vpop.f32.mrb[0].mxu0
        %1246 = vdwg.mxu0
        %v1251 = vunpack.c.l.b16 %v1063
        %v1252 = vunpack.c.l.b16 %v1064
        %v1253 = vunpack.c.l.b16 %v1065
        %v1254 = vunpack.c.l.b16 %v1066
        %v1255 = vpack.c.b16 %v1252, %v1251
        %v1256 = vpack.c.b16 %v1254, %v1253
        %1259 = vmatprep.subr.bf16.mxu0 0
        %1260 = vmatpush1.bf16.msra.mxu0 %v1255
        %1261 = vmatprep.subr.bf16.mxu0 0
        %1262 = vmatpush1.bf16.msra.mxu0 %v1256
        %1263 = vmatprep.subr.bf16.mxu0 0
        %1264 = vmatpush1.bf16.msra.mxu0 0
        %1265 = vmatprep.subr.bf16.mxu0 0
        %1266 = vmatpush1.bf16.msra.mxu0 0
        %1267 = vmatprep.subr.bf16.mxu0 0
        %1268 = vmatpush1.bf16.msra.mxu0 0
        %1269 = vmatprep.subr.bf16.mxu0 0
        %1270 = vmatpush1.bf16.msra.mxu0 0
        %1271 = vmatprep.subr.bf16.mxu0 0
        %1272 = vmatpush1.bf16.msra.mxu0 0
        %1273 = vmatprep.subr.bf16.mxu0 0
        %1274 = vmatpush1.bf16.msra.mxu0 0
        %1275 = vmatprep.subr.bf16.mxu0 0
        %1276 = vmatpush1.bf16.msra.mxu0 0
        %1277 = vmatprep.subr.bf16.mxu0 0
        %1278 = vmatpush1.bf16.msra.mxu0 0
        %1279 = vmatprep.subr.bf16.mxu0 0
        %1280 = vmatpush1.bf16.msra.mxu0 0
        %1281 = vmatprep.subr.bf16.mxu0 0
        %1282 = vmatpush1.bf16.msra.mxu0 0
        %1283 = vmatprep.subr.bf16.mxu0 0
        %1284 = vmatpush1.bf16.msra.mxu0 0
        %1285 = vmatprep.subr.bf16.mxu0 0
        %1286 = vmatpush1.bf16.msra.mxu0 0
        %1287 = vmatprep.subr.bf16.mxu0 0
        %1288 = vmatpush1.bf16.msra.mxu0 0
        %1289 = vmatprep.subr.bf16.mxu0 0
        %1290 = vmatpush1.bf16.msra.mxu0 0
        %1291 = vmatprep.mubr.bf16.mxu0 0
        %1292 = vmatmul.mubr.bf16.gmra.mrb[0].mxu0 %v649
        %v1293 = vpop.f32.mrb[0].mxu0
        %v1294 = vadd.f32 %v1114, %v1293
        %v1295 = vpop.f32.mrb[0].mxu0
        %v1296 = vpop.f32.mrb[0].mxu0
        %v1297 = vpop.f32.mrb[0].mxu0
        %1298 = vdwg.mxu0
        %v1303 = vunpack.c.l.b16 %v1067
        %v1304 = vunpack.c.l.b16 %v1068
        %v1305 = vunpack.c.l.b16 %v1069
        %v1306 = vunpack.c.l.b16 %v1070
        %v1307 = vpack.c.b16 %v1304, %v1303
        %v1308 = vpack.c.b16 %v1306, %v1305
        %1311 = vmatprep.subr.bf16.mxu0 0
        %1312 = vmatpush1.bf16.msra.mxu0 %v1307
        %1313 = vmatprep.subr.bf16.mxu0 0
        %1314 = vmatpush1.bf16.msra.mxu0 %v1308
        %1315 = vmatprep.subr.bf16.mxu0 0
        %1316 = vmatpush1.bf16.msra.mxu0 0
        %1317 = vmatprep.subr.bf16.mxu0 0
        %1318 = vmatpush1.bf16.msra.mxu0 0
        %1319 = vmatprep.subr.bf16.mxu0 0
        %1320 = vmatpush1.bf16.msra.mxu0 0
        %1321 = vmatprep.subr.bf16.mxu0 0
        %1322 = vmatpush1.bf16.msra.mxu0 0
        %1323 = vmatprep.subr.bf16.mxu0 0
        %1324 = vmatpush1.bf16.msra.mxu0 0
        %1325 = vmatprep.subr.bf16.mxu0 0
        %1326 = vmatpush1.bf16.msra.mxu0 0
        %1327 = vmatprep.subr.bf16.mxu0 0
        %1328 = vmatpush1.bf16.msra.mxu0 0
        %1329 = vmatprep.subr.bf16.mxu0 0
        %1330 = vmatpush1.bf16.msra.mxu0 0
        %1331 = vmatprep.subr.bf16.mxu0 0
        %1332 = vmatpush1.bf16.msra.mxu0 0
        %1333 = vmatprep.subr.bf16.mxu0 0
        %1334 = vmatpush1.bf16.msra.mxu0 0
        %1335 = vmatprep.subr.bf16.mxu0 0
        %1336 = vmatpush1.bf16.msra.mxu0 0
        %1337 = vmatprep.subr.bf16.mxu0 0
        %1338 = vmatpush1.bf16.msra.mxu0 0
        %1339 = vmatprep.subr.bf16.mxu0 0
        %1340 = vmatpush1.bf16.msra.mxu0 0
        %1341 = vmatprep.subr.bf16.mxu0 0
        %1342 = vmatpush1.bf16.msra.mxu0 0
        %1343 = vmatprep.mubr.bf16.mxu0 0
        %1344 = vmatmul.mubr.bf16.gmra.mrb[0].mxu0 %v649
        %v1345 = vpop.f32.mrb[0].mxu0
        %v1346 = vadd.f32 %v1118, %v1345
        %v1347 = vpop.f32.mrb[0].mxu0
        %v1348 = vpop.f32.mrb[0].mxu0
        %v1349 = vpop.f32.mrb[0].mxu0
        %1350 = vdwg.mxu0
        %v1355 = vunpack.c.l.b16 %v1071
        %v1356 = vunpack.c.l.b16 %v1072
        %v1357 = vunpack.c.l.b16 %v1073
        %v1358 = vunpack.c.l.b16 %v1074
        %v1359 = vpack.c.b16 %v1356, %v1355
        %v1360 = vpack.c.b16 %v1358, %v1357
        %1363 = vmatprep.subr.bf16.mxu0 0
        %1364 = vmatpush1.bf16.msra.mxu0 %v1359
        %1365 = vmatprep.subr.bf16.mxu0 0
        %1366 = vmatpush1.bf16.msra.mxu0 %v1360
        %1367 = vmatprep.subr.bf16.mxu0 0
        %1368 = vmatpush1.bf16.msra.mxu0 0
        %1369 = vmatprep.subr.bf16.mxu0 0
        %1370 = vmatpush1.bf16.msra.mxu0 0
        %1371 = vmatprep.subr.bf16.mxu0 0
        %1372 = vmatpush1.bf16.msra.mxu0 0
        %1373 = vmatprep.subr.bf16.mxu0 0
        %1374 = vmatpush1.bf16.msra.mxu0 0
        %1375 = vmatprep.subr.bf16.mxu0 0
        %1376 = vmatpush1.bf16.msra.mxu0 0
        %1377 = vmatprep.subr.bf16.mxu0 0
        %1378 = vmatpush1.bf16.msra.mxu0 0
        %1379 = vmatprep.subr.bf16.mxu0 0
        %1380 = vmatpush1.bf16.msra.mxu0 0
        %1381 = vmatprep.subr.bf16.mxu0 0
        %1382 = vmatpush1.bf16.msra.mxu0 0
        %1383 = vmatprep.subr.bf16.mxu0 0
        %1384 = vmatpush1.bf16.msra.mxu0 0
        %1385 = vmatprep.subr.bf16.mxu0 0
        %1386 = vmatpush1.bf16.msra.mxu0 0
        %1387 = vmatprep.subr.bf16.mxu0 0
        %1388 = vmatpush1.bf16.msra.mxu0 0
        %1389 = vmatprep.subr.bf16.mxu0 0
        %1390 = vmatpush1.bf16.msra.mxu0 0
        %1391 = vmatprep.subr.bf16.mxu0 0
        %1392 = vmatpush1.bf16.msra.mxu0 0
        %1393 = vmatprep.subr.bf16.mxu0 0
        %1394 = vmatpush1.bf16.msra.mxu0 0
        %1395 = vmatprep.mubr.bf16.mxu0 0
        %1396 = vmatmul.mubr.bf16.gmra.mrb[0].mxu0 %v649
        %v1397 = vpop.f32.mrb[0].mxu0
        %v1398 = vadd.f32 %v1122, %v1397
        %v1399 = vpop.f32.mrb[0].mxu0
        %v1400 = vpop.f32.mrb[0].mxu0
        %v1401 = vpop.f32.mrb[0].mxu0
        %1402 = vdwg.mxu0
        %v1407 = vunpack.c.l.b16 %v1075
        %v1408 = vunpack.c.l.b16 %v1076
        %v1409 = vunpack.c.l.b16 %v1077
        %v1410 = vunpack.c.l.b16 %v1078
        %v1411 = vpack.c.b16 %v1408, %v1407
        %v1412 = vpack.c.b16 %v1410, %v1409
        %1415 = vmatprep.subr.bf16.mxu0 0
        %1416 = vmatpush1.bf16.msra.mxu0 %v1411
        %1417 = vmatprep.subr.bf16.mxu0 0
        %1418 = vmatpush1.bf16.msra.mxu0 %v1412
        %1419 = vmatprep.subr.bf16.mxu0 0
        %1420 = vmatpush1.bf16.msra.mxu0 0
        %1421 = vmatprep.subr.bf16.mxu0 0
        %1422 = vmatpush1.bf16.msra.mxu0 0
        %1423 = vmatprep.subr.bf16.mxu0 0
        %1424 = vmatpush1.bf16.msra.mxu0 0
        %1425 = vmatprep.subr.bf16.mxu0 0
        %1426 = vmatpush1.bf16.msra.mxu0 0
        %1427 = vmatprep.subr.bf16.mxu0 0
        %1428 = vmatpush1.bf16.msra.mxu0 0
        %1429 = vmatprep.subr.bf16.mxu0 0
        %1430 = vmatpush1.bf16.msra.mxu0 0
        %1431 = vmatprep.subr.bf16.mxu0 0
        %1432 = vmatpush1.bf16.msra.mxu0 0
        %1433 = vmatprep.subr.bf16.mxu0 0
        %1434 = vmatpush1.bf16.msra.mxu0 0
        %1435 = vmatprep.subr.bf16.mxu0 0
        %1436 = vmatpush1.bf16.msra.mxu0 0
        %1437 = vmatprep.subr.bf16.mxu0 0
        %1438 = vmatpush1.bf16.msra.mxu0 0
        %1439 = vmatprep.subr.bf16.mxu0 0
        %1440 = vmatpush1.bf16.msra.mxu0 0
        %1441 = vmatprep.subr.bf16.mxu0 0
        %1442 = vmatpush1.bf16.msra.mxu0 0
        %1443 = vmatprep.subr.bf16.mxu0 0
        %1444 = vmatpush1.bf16.msra.mxu0 0
        %1445 = vmatprep.subr.bf16.mxu0 0
        %1446 = vmatpush1.bf16.msra.mxu0 0
        %1447 = vmatprep.mubr.bf16.mxu0 0
        %1448 = vmatmul.mubr.bf16.gmra.mrb[0].mxu0 %v649
        %v1449 = vpop.f32.mrb[0].mxu0
        %v1450 = vadd.f32 %v1126, %v1449
        %v1451 = vpop.f32.mrb[0].mxu0
        %v1452 = vpop.f32.mrb[0].mxu0
        %v1453 = vpop.f32.mrb[0].mxu0
        %1454 = vdwg.mxu0
        %v1459 = vunpack.c.l.b16 %v1079
        %v1460 = vunpack.c.l.b16 %v1080
        %v1461 = vunpack.c.l.b16 %v1081
        %v1462 = vunpack.c.l.b16 %v1082
        %v1463 = vpack.c.b16 %v1460, %v1459
        %v1464 = vpack.c.b16 %v1462, %v1461
        %1467 = vmatprep.subr.bf16.mxu0 0
        %1468 = vmatpush1.bf16.msra.mxu0 %v1463
        %1469 = vmatprep.subr.bf16.mxu0 0
        %1470 = vmatpush1.bf16.msra.mxu0 %v1464
        %1471 = vmatprep.subr.bf16.mxu0 0
        %1472 = vmatpush1.bf16.msra.mxu0 0
        %1473 = vmatprep.subr.bf16.mxu0 0
        %1474 = vmatpush1.bf16.msra.mxu0 0
        %1475 = vmatprep.subr.bf16.mxu0 0
        %1476 = vmatpush1.bf16.msra.mxu0 0
        %1477 = vmatprep.subr.bf16.mxu0 0
        %1478 = vmatpush1.bf16.msra.mxu0 0
        %1479 = vmatprep.subr.bf16.mxu0 0
        %1480 = vmatpush1.bf16.msra.mxu0 0
        %1481 = vmatprep.subr.bf16.mxu0 0
        %1482 = vmatpush1.bf16.msra.mxu0 0
        %1483 = vmatprep.subr.bf16.mxu0 0
        %1484 = vmatpush1.bf16.msra.mxu0 0
        %1485 = vmatprep.subr.bf16.mxu0 0
        %1486 = vmatpush1.bf16.msra.mxu0 0
        %1487 = vmatprep.subr.bf16.mxu0 0
        %1488 = vmatpush1.bf16.msra.mxu0 0
        %1489 = vmatprep.subr.bf16.mxu0 0
        %1490 = vmatpush1.bf16.msra.mxu0 0
        %1491 = vmatprep.subr.bf16.mxu0 0
        %1492 = vmatpush1.bf16.msra.mxu0 0
        %1493 = vmatprep.subr.bf16.mxu0 0
        %1494 = vmatpush1.bf16.msra.mxu0 0
        %1495 = vmatprep.subr.bf16.mxu0 0
        %1496 = vmatpush1.bf16.msra.mxu0 0
        %1497 = vmatprep.subr.bf16.mxu0 0
        %1498 = vmatpush1.bf16.msra.mxu0 0
        %1499 = vmatprep.mubr.bf16.mxu0 0
        %1500 = vmatmul.mubr.bf16.gmra.mrb[0].mxu0 %v649
        %v1501 = vpop.f32.mrb[0].mxu0
        %v1502 = vadd.f32 %v1130, %v1501
        %v1503 = vpop.f32.mrb[0].mxu0
        %v1504 = vpop.f32.mrb[0].mxu0
        %v1505 = vpop.f32.mrb[0].mxu0
        %1506 = vdwg.mxu0
        %v1511 = vunpack.c.l.b16 %v1083
        %v1512 = vunpack.c.l.b16 %v1084
        %v1513 = vunpack.c.l.b16 %v1085
        %v1514 = vunpack.c.l.b16 %v1086
        %v1515 = vpack.c.b16 %v1512, %v1511
        %v1516 = vpack.c.b16 %v1514, %v1513
        %1519 = vmatprep.subr.bf16.mxu0 0
        %1520 = vmatpush1.bf16.msra.mxu0 %v1515
        %1521 = vmatprep.subr.bf16.mxu0 0
        %1522 = vmatpush1.bf16.msra.mxu0 %v1516
        %1523 = vmatprep.subr.bf16.mxu0 0
        %1524 = vmatpush1.bf16.msra.mxu0 0
        %1525 = vmatprep.subr.bf16.mxu0 0
        %1526 = vmatpush1.bf16.msra.mxu0 0
        %1527 = vmatprep.subr.bf16.mxu0 0
        %1528 = vmatpush1.bf16.msra.mxu0 0
        %1529 = vmatprep.subr.bf16.mxu0 0
        %1530 = vmatpush1.bf16.msra.mxu0 0
        %1531 = vmatprep.subr.bf16.mxu0 0
        %1532 = vmatpush1.bf16.msra.mxu0 0
        %1533 = vmatprep.subr.bf16.mxu0 0
        %1534 = vmatpush1.bf16.msra.mxu0 0
        %1535 = vmatprep.subr.bf16.mxu0 0
        %1536 = vmatpush1.bf16.msra.mxu0 0
        %1537 = vmatprep.subr.bf16.mxu0 0
        %1538 = vmatpush1.bf16.msra.mxu0 0
        %1539 = vmatprep.subr.bf16.mxu0 0
        %1540 = vmatpush1.bf16.msra.mxu0 0
        %1541 = vmatprep.subr.bf16.mxu0 0
        %1542 = vmatpush1.bf16.msra.mxu0 0
        %1543 = vmatprep.subr.bf16.mxu0 0
        %1544 = vmatpush1.bf16.msra.mxu0 0
        %1545 = vmatprep.subr.bf16.mxu0 0
        %1546 = vmatpush1.bf16.msra.mxu0 0
        %1547 = vmatprep.subr.bf16.mxu0 0
        %1548 = vmatpush1.bf16.msra.mxu0 0
        %1549 = vmatprep.subr.bf16.mxu0 0
        %1550 = vmatpush1.bf16.msra.mxu0 0
        %1551 = vmatprep.mubr.bf16.mxu0 0
        %1552 = vmatmul.mubr.bf16.gmra.mrb[0].mxu0 %v649
        %v1553 = vpop.f32.mrb[0].mxu0
        %v1554 = vadd.f32 %v1134, %v1553
        %v1555 = vpop.f32.mrb[0].mxu0
        %v1556 = vpop.f32.mrb[0].mxu0
        %v1557 = vpop.f32.mrb[0].mxu0
        %1558 = vdwg.mxu0
        %v1559 = vld [vmem:[%s5] sm:$0xf]
        %v1560 = vld [vmem:[%s5 + $0x4] sm:$0xf]
        %v1561 = vld [vmem:[%s5 + $0x8] sm:$0xf]
        %v1562 = vld [vmem:[%s5 + $0xc] sm:$0xf]
        %v1563 = vld [vmem:[%s5 + $0x10] sm:$0xf]
        %v1564 = vld [vmem:[%s5 + $0x14] sm:$0xf]
        %v1565 = vld [vmem:[%s5 + $0x18] sm:$0xf]
        %v1566 = vld [vmem:[%s5 + $0x1c] sm:$0xf]
        %v1567 = vld [vmem:[%s5 + $0x20] sm:$0xf]
        %v1568 = vld [vmem:[%s5 + $0x24] sm:$0xf]
        %v1569 = vld [vmem:[%s5 + $0x28] sm:$0xf]
        %v1570 = vld [vmem:[%s5 + $0x2c] sm:$0xf]
        %v1571 = vld [vmem:[%s5 + $0x30] sm:$0xf]
        %v1572 = vld [vmem:[%s5 + $0x34] sm:$0xf]
        %v1573 = vld [vmem:[%s5 + $0x38] sm:$0xf]
        %v1574 = vld [vmem:[%s5 + $0x3c] sm:$0xf]
        %v1575 = vld [vmem:[%s5 + $0x40] sm:$0xf]
        %v1576 = vld [vmem:[%s5 + $0x44] sm:$0xf]
        %v1577 = vld [vmem:[%s5 + $0x48] sm:$0xf]
        %v1578 = vld [vmem:[%s5 + $0x4c] sm:$0xf]
        %v1579 = vld [vmem:[%s5 + $0x50] sm:$0xf]
        %v1580 = vld [vmem:[%s5 + $0x54] sm:$0xf]
        %v1581 = vld [vmem:[%s5 + $0x58] sm:$0xf]
        %v1582 = vld [vmem:[%s5 + $0x5c] sm:$0xf]
        %v1583 = vld [vmem:[%s5 + $0x60] sm:$0xf]
        %v1584 = vld [vmem:[%s5 + $0x64] sm:$0xf]
        %v1585 = vld [vmem:[%s5 + $0x68] sm:$0xf]
        %v1586 = vld [vmem:[%s5 + $0x6c] sm:$0xf]
        %v1587 = vld [vmem:[%s5 + $0x70] sm:$0xf]
        %v1588 = vld [vmem:[%s5 + $0x74] sm:$0xf]
        %v1589 = vld [vmem:[%s5 + $0x78] sm:$0xf]
        %v1590 = vld [vmem:[%s5 + $0x7c] sm:$0xf]
        %v1591 = vld [vmem:[%s6] sm:$0x1]
        %v1592 = vld [vmem:[%s6 + $0x1] sm:$0x1]
        %v1593 = vld [vmem:[%s6 + $0x2] sm:$0x1]
        %v1594 = vld [vmem:[%s6 + $0x3] sm:$0x1]
        %v1595 = vld [vmem:[%s6 + $0x4] sm:$0x1]
        %v1596 = vld [vmem:[%s6 + $0x5] sm:$0x1]
        %v1597 = vld [vmem:[%s6 + $0x6] sm:$0x1]
        %v1598 = vld [vmem:[%s6 + $0x7] sm:$0x1]
        %v1607 = vlaneseq
        %v1608 = vshrl.u32 %v1607, 7
        %v1609 = vsub.s32 0, %v1608
        %v1610 = vrot.slane %v1591, %v1609
        %v1611 = vlaneseq
        %v1612 = vshrl.u32 %v1611, 7
        %v1613 = vsub.s32 0, %v1612
        %v1614 = vrot.slane %v1592, %v1613
        %v1615 = vlaneseq
        %v1616 = vshrl.u32 %v1615, 7
        %v1617 = vsub.s32 0, %v1616
        %v1618 = vrot.slane %v1593, %v1617
        %v1619 = vlaneseq
        %v1620 = vshrl.u32 %v1619, 7
        %v1621 = vsub.s32 0, %v1620
        %v1622 = vrot.slane %v1594, %v1621
        %v1623 = vlaneseq
        %v1624 = vshrl.u32 %v1623, 7
        %v1625 = vsub.s32 0, %v1624
        %v1626 = vrot.slane %v1595, %v1625
        %v1627 = vlaneseq
        %v1628 = vshrl.u32 %v1627, 7
        %v1629 = vsub.s32 0, %v1628
        %v1630 = vrot.slane %v1596, %v1629
        %v1631 = vlaneseq
        %v1632 = vshrl.u32 %v1631, 7
        %v1633 = vsub.s32 0, %v1632
        %v1634 = vrot.slane %v1597, %v1633
        %v1635 = vlaneseq
        %v1636 = vshrl.u32 %v1635, 7
        %v1637 = vsub.s32 0, %v1636
        %v1638 = vrot.slane %v1598, %v1637
        %v1651 = vunpack.c.l.b16 %v1559
        %v1652 = vunpack.c.l.b16 %v1560
        %v1653 = vunpack.c.l.b16 %v1561
        %v1654 = vunpack.c.l.b16 %v1562
        %v1655 = vpack.c.b16 %v1652, %v1651
        %v1656 = vpack.c.b16 %v1654, %v1653
        %1659 = vmatprep.subr.bf16.mxu0 0
        %1660 = vmatpush1.bf16.msra.mxu0 %v1655
        %1661 = vmatprep.subr.bf16.mxu0 0
        %1662 = vmatpush1.bf16.msra.mxu0 %v1656
        %1663 = vmatprep.subr.bf16.mxu0 0
        %1664 = vmatpush1.bf16.msra.mxu0 0
        %1665 = vmatprep.subr.bf16.mxu0 0
        %1666 = vmatpush1.bf16.msra.mxu0 0
        %1667 = vmatprep.subr.bf16.mxu0 0
        %1668 = vmatpush1.bf16.msra.mxu0 0
        %1669 = vmatprep.subr.bf16.mxu0 0
        %1670 = vmatpush1.bf16.msra.mxu0 0
        %1671 = vmatprep.subr.bf16.mxu0 0
        %1672 = vmatpush1.bf16.msra.mxu0 0
        %1673 = vmatprep.subr.bf16.mxu0 0
        %1674 = vmatpush1.bf16.msra.mxu0 0
        %1675 = vmatprep.subr.bf16.mxu0 0
        %1676 = vmatpush1.bf16.msra.mxu0 0
        %1677 = vmatprep.subr.bf16.mxu0 0
        %1678 = vmatpush1.bf16.msra.mxu0 0
        %1679 = vmatprep.subr.bf16.mxu0 0
        %1680 = vmatpush1.bf16.msra.mxu0 0
        %1681 = vmatprep.subr.bf16.mxu0 0
        %1682 = vmatpush1.bf16.msra.mxu0 0
        %1683 = vmatprep.subr.bf16.mxu0 0
        %1684 = vmatpush1.bf16.msra.mxu0 0
        %1685 = vmatprep.subr.bf16.mxu0 0
        %1686 = vmatpush1.bf16.msra.mxu0 0
        %1687 = vmatprep.subr.bf16.mxu0 0
        %1688 = vmatpush1.bf16.msra.mxu0 0
        %1689 = vmatprep.subr.bf16.mxu0 0
        %1690 = vmatpush1.bf16.msra.mxu0 0
        %1691 = vmatprep.mubr.bf16.mxu0 0
        %1692 = vmatmul.mubr.bf16.gmra.mrb[0].mxu0 %v649
        %v1693 = vpop.f32.mrb[0].mxu0
        %v1694 = vadd.f32 %v1610, %v1693
        %v1695 = vpop.f32.mrb[0].mxu0
        %v1696 = vpop.f32.mrb[0].mxu0
        %v1697 = vpop.f32.mrb[0].mxu0
        %1698 = vdwg.mxu0
        %v1703 = vunpack.c.l.b16 %v1563
        %v1704 = vunpack.c.l.b16 %v1564
        %v1705 = vunpack.c.l.b16 %v1565
        %v1706 = vunpack.c.l.b16 %v1566
        %v1707 = vpack.c.b16 %v1704, %v1703
        %v1708 = vpack.c.b16 %v1706, %v1705
        %1711 = vmatprep.subr.bf16.mxu0 0
        %1712 = vmatpush1.bf16.msra.mxu0 %v1707
        %1713 = vmatprep.subr.bf16.mxu0 0
        %1714 = vmatpush1.bf16.msra.mxu0 %v1708
        %1715 = vmatprep.subr.bf16.mxu0 0
        %1716 = vmatpush1.bf16.msra.mxu0 0
        %1717 = vmatprep.subr.bf16.mxu0 0
        %1718 = vmatpush1.bf16.msra.mxu0 0
        %1719 = vmatprep.subr.bf16.mxu0 0
        %1720 = vmatpush1.bf16.msra.mxu0 0
        %1721 = vmatprep.subr.bf16.mxu0 0
        %1722 = vmatpush1.bf16.msra.mxu0 0
        %1723 = vmatprep.subr.bf16.mxu0 0
        %1724 = vmatpush1.bf16.msra.mxu0 0
        %1725 = vmatprep.subr.bf16.mxu0 0
        %1726 = vmatpush1.bf16.msra.mxu0 0
        %1727 = vmatprep.subr.bf16.mxu0 0
        %1728 = vmatpush1.bf16.msra.mxu0 0
        %1729 = vmatprep.subr.bf16.mxu0 0
        %1730 = vmatpush1.bf16.msra.mxu0 0
        %1731 = vmatprep.subr.bf16.mxu0 0
        %1732 = vmatpush1.bf16.msra.mxu0 0
        %1733 = vmatprep.subr.bf16.mxu0 0
        %1734 = vmatpush1.bf16.msra.mxu0 0
        %1735 = vmatprep.subr.bf16.mxu0 0
        %1736 = vmatpush1.bf16.msra.mxu0 0
        %1737 = vmatprep.subr.bf16.mxu0 0
        %1738 = vmatpush1.bf16.msra.mxu0 0
        %1739 = vmatprep.subr.bf16.mxu0 0
        %1740 = vmatpush1.bf16.msra.mxu0 0
        %1741 = vmatprep.subr.bf16.mxu0 0
        %1742 = vmatpush1.bf16.msra.mxu0 0
        %1743 = vmatprep.mubr.bf16.mxu0 0
        %1744 = vmatmul.mubr.bf16.gmra.mrb[0].mxu0 %v649
        %v1745 = vpop.f32.mrb[0].mxu0
        %v1746 = vadd.f32 %v1614, %v1745
        %v1747 = vpop.f32.mrb[0].mxu0
        %v1748 = vpop.f32.mrb[0].mxu0
        %v1749 = vpop.f32.mrb[0].mxu0
        %1750 = vdwg.mxu0
        %v1755 = vunpack.c.l.b16 %v1567
        %v1756 = vunpack.c.l.b16 %v1568
        %v1757 = vunpack.c.l.b16 %v1569
        %v1758 = vunpack.c.l.b16 %v1570
        %v1759 = vpack.c.b16 %v1756, %v1755
        %v1760 = vpack.c.b16 %v1758, %v1757
        %1763 = vmatprep.subr.bf16.mxu0 0
        %1764 = vmatpush1.bf16.msra.mxu0 %v1759
        %1765 = vmatprep.subr.bf16.mxu0 0
        %1766 = vmatpush1.bf16.msra.mxu0 %v1760
        %1767 = vmatprep.subr.bf16.mxu0 0
        %1768 = vmatpush1.bf16.msra.mxu0 0
        %1769 = vmatprep.subr.bf16.mxu0 0
        %1770 = vmatpush1.bf16.msra.mxu0 0
        %1771 = vmatprep.subr.bf16.mxu0 0
        %1772 = vmatpush1.bf16.msra.mxu0 0
        %1773 = vmatprep.subr.bf16.mxu0 0
        %1774 = vmatpush1.bf16.msra.mxu0 0
        %1775 = vmatprep.subr.bf16.mxu0 0
        %1776 = vmatpush1.bf16.msra.mxu0 0
        %1777 = vmatprep.subr.bf16.mxu0 0
        %1778 = vmatpush1.bf16.msra.mxu0 0
        %1779 = vmatprep.subr.bf16.mxu0 0
        %1780 = vmatpush1.bf16.msra.mxu0 0
        %1781 = vmatprep.subr.bf16.mxu0 0
        %1782 = vmatpush1.bf16.msra.mxu0 0
        %1783 = vmatprep.subr.bf16.mxu0 0
        %1784 = vmatpush1.bf16.msra.mxu0 0
        %1785 = vmatprep.subr.bf16.mxu0 0
        %1786 = vmatpush1.bf16.msra.mxu0 0
        %1787 = vmatprep.subr.bf16.mxu0 0
        %1788 = vmatpush1.bf16.msra.mxu0 0
        %1789 = vmatprep.subr.bf16.mxu0 0
        %1790 = vmatpush1.bf16.msra.mxu0 0
        %1791 = vmatprep.subr.bf16.mxu0 0
        %1792 = vmatpush1.bf16.msra.mxu0 0
        %1793 = vmatprep.subr.bf16.mxu0 0
        %1794 = vmatpush1.bf16.msra.mxu0 0
        %1795 = vmatprep.mubr.bf16.mxu0 0
        %1796 = vmatmul.mubr.bf16.gmra.mrb[0].mxu0 %v649
        %v1797 = vpop.f32.mrb[0].mxu0
        %v1798 = vadd.f32 %v1618, %v1797
        %v1799 = vpop.f32.mrb[0].mxu0
        %v1800 = vpop.f32.mrb[0].mxu0
        %v1801 = vpop.f32.mrb[0].mxu0
        %1802 = vdwg.mxu0
        %v1807 = vunpack.c.l.b16 %v1571
        %v1808 = vunpack.c.l.b16 %v1572
        %v1809 = vunpack.c.l.b16 %v1573
        %v1810 = vunpack.c.l.b16 %v1574
        %v1811 = vpack.c.b16 %v1808, %v1807
        %v1812 = vpack.c.b16 %v1810, %v1809
        %1815 = vmatprep.subr.bf16.mxu0 0
        %1816 = vmatpush1.bf16.msra.mxu0 %v1811
        %1817 = vmatprep.subr.bf16.mxu0 0
        %1818 = vmatpush1.bf16.msra.mxu0 %v1812
        %1819 = vmatprep.subr.bf16.mxu0 0
        %1820 = vmatpush1.bf16.msra.mxu0 0
        %1821 = vmatprep.subr.bf16.mxu0 0
        %1822 = vmatpush1.bf16.msra.mxu0 0
        %1823 = vmatprep.subr.bf16.mxu0 0
        %1824 = vmatpush1.bf16.msra.mxu0 0
        %1825 = vmatprep.subr.bf16.mxu0 0
        %1826 = vmatpush1.bf16.msra.mxu0 0
        %1827 = vmatprep.subr.bf16.mxu0 0
        %1828 = vmatpush1.bf16.msra.mxu0 0
        %1829 = vmatprep.subr.bf16.mxu0 0
        %1830 = vmatpush1.bf16.msra.mxu0 0
        %1831 = vmatprep.subr.bf16.mxu0 0
        %1832 = vmatpush1.bf16.msra.mxu0 0
        %1833 = vmatprep.subr.bf16.mxu0 0
        %1834 = vmatpush1.bf16.msra.mxu0 0
        %1835 = vmatprep.subr.bf16.mxu0 0
        %1836 = vmatpush1.bf16.msra.mxu0 0
        %1837 = vmatprep.subr.bf16.mxu0 0
        %1838 = vmatpush1.bf16.msra.mxu0 0
        %1839 = vmatprep.subr.bf16.mxu0 0
        %1840 = vmatpush1.bf16.msra.mxu0 0
        %1841 = vmatprep.subr.bf16.mxu0 0
        %1842 = vmatpush1.bf16.msra.mxu0 0
        %1843 = vmatprep.subr.bf16.mxu0 0
        %1844 = vmatpush1.bf16.msra.mxu0 0
        %1845 = vmatprep.subr.bf16.mxu0 0
        %1846 = vmatpush1.bf16.msra.mxu0 0
        %1847 = vmatprep.mubr.bf16.mxu0 0
        %1848 = vmatmul.mubr.bf16.gmra.mrb[0].mxu0 %v649
        %v1849 = vpop.f32.mrb[0].mxu0
        %v1850 = vadd.f32 %v1622, %v1849
        %v1851 = vpop.f32.mrb[0].mxu0
        %v1852 = vpop.f32.mrb[0].mxu0
        %v1853 = vpop.f32.mrb[0].mxu0
        %1854 = vdwg.mxu0
        %v1859 = vunpack.c.l.b16 %v1575
        %v1860 = vunpack.c.l.b16 %v1576
        %v1861 = vunpack.c.l.b16 %v1577
        %v1862 = vunpack.c.l.b16 %v1578
        %v1863 = vpack.c.b16 %v1860, %v1859
        %v1864 = vpack.c.b16 %v1862, %v1861
        %1867 = vmatprep.subr.bf16.mxu0 0
        %1868 = vmatpush1.bf16.msra.mxu0 %v1863
        %1869 = vmatprep.subr.bf16.mxu0 0
        %1870 = vmatpush1.bf16.msra.mxu0 %v1864
        %1871 = vmatprep.subr.bf16.mxu0 0
        %1872 = vmatpush1.bf16.msra.mxu0 0
        %1873 = vmatprep.subr.bf16.mxu0 0
        %1874 = vmatpush1.bf16.msra.mxu0 0
        %1875 = vmatprep.subr.bf16.mxu0 0
        %1876 = vmatpush1.bf16.msra.mxu0 0
        %1877 = vmatprep.subr.bf16.mxu0 0
        %1878 = vmatpush1.bf16.msra.mxu0 0
        %1879 = vmatprep.subr.bf16.mxu0 0
        %1880 = vmatpush1.bf16.msra.mxu0 0
        %1881 = vmatprep.subr.bf16.mxu0 0
        %1882 = vmatpush1.bf16.msra.mxu0 0
        %1883 = vmatprep.subr.bf16.mxu0 0
        %1884 = vmatpush1.bf16.msra.mxu0 0
        %1885 = vmatprep.subr.bf16.mxu0 0
        %1886 = vmatpush1.bf16.msra.mxu0 0
        %1887 = vmatprep.subr.bf16.mxu0 0
        %1888 = vmatpush1.bf16.msra.mxu0 0
        %1889 = vmatprep.subr.bf16.mxu0 0
        %1890 = vmatpush1.bf16.msra.mxu0 0
        %1891 = vmatprep.subr.bf16.mxu0 0
        %1892 = vmatpush1.bf16.msra.mxu0 0
        %1893 = vmatprep.subr.bf16.mxu0 0
        %1894 = vmatpush1.bf16.msra.mxu0 0
        %1895 = vmatprep.subr.bf16.mxu0 0
        %1896 = vmatpush1.bf16.msra.mxu0 0
        %1897 = vmatprep.subr.bf16.mxu0 0
        %1898 = vmatpush1.bf16.msra.mxu0 0
        %1899 = vmatprep.mubr.bf16.mxu0 0
        %1900 = vmatmul.mubr.bf16.gmra.mrb[0].mxu0 %v649
        %v1901 = vpop.f32.mrb[0].mxu0
        %v1902 = vadd.f32 %v1626, %v1901
        %v1903 = vpop.f32.mrb[0].mxu0
        %v1904 = vpop.f32.mrb[0].mxu0
        %v1905 = vpop.f32.mrb[0].mxu0
        %1906 = vdwg.mxu0
        %v1911 = vunpack.c.l.b16 %v1579
        %v1912 = vunpack.c.l.b16 %v1580
        %v1913 = vunpack.c.l.b16 %v1581
        %v1914 = vunpack.c.l.b16 %v1582
        %v1915 = vpack.c.b16 %v1912, %v1911
        %v1916 = vpack.c.b16 %v1914, %v1913
        %1919 = vmatprep.subr.bf16.mxu0 0
        %1920 = vmatpush1.bf16.msra.mxu0 %v1915
        %1921 = vmatprep.subr.bf16.mxu0 0
        %1922 = vmatpush1.bf16.msra.mxu0 %v1916
        %1923 = vmatprep.subr.bf16.mxu0 0
        %1924 = vmatpush1.bf16.msra.mxu0 0
        %1925 = vmatprep.subr.bf16.mxu0 0
        %1926 = vmatpush1.bf16.msra.mxu0 0
        %1927 = vmatprep.subr.bf16.mxu0 0
        %1928 = vmatpush1.bf16.msra.mxu0 0
        %1929 = vmatprep.subr.bf16.mxu0 0
        %1930 = vmatpush1.bf16.msra.mxu0 0
        %1931 = vmatprep.subr.bf16.mxu0 0
        %1932 = vmatpush1.bf16.msra.mxu0 0
        %1933 = vmatprep.subr.bf16.mxu0 0
        %1934 = vmatpush1.bf16.msra.mxu0 0
        %1935 = vmatprep.subr.bf16.mxu0 0
        %1936 = vmatpush1.bf16.msra.mxu0 0
        %1937 = vmatprep.subr.bf16.mxu0 0
        %1938 = vmatpush1.bf16.msra.mxu0 0
        %1939 = vmatprep.subr.bf16.mxu0 0
        %1940 = vmatpush1.bf16.msra.mxu0 0
        %1941 = vmatprep.subr.bf16.mxu0 0
        %1942 = vmatpush1.bf16.msra.mxu0 0
        %1943 = vmatprep.subr.bf16.mxu0 0
        %1944 = vmatpush1.bf16.msra.mxu0 0
        %1945 = vmatprep.subr.bf16.mxu0 0
        %1946 = vmatpush1.bf16.msra.mxu0 0
        %1947 = vmatprep.subr.bf16.mxu0 0
        %1948 = vmatpush1.bf16.msra.mxu0 0
        %1949 = vmatprep.subr.bf16.mxu0 0
        %1950 = vmatpush1.bf16.msra.mxu0 0
        %1951 = vmatprep.mubr.bf16.mxu0 0
        %1952 = vmatmul.mubr.bf16.gmra.mrb[0].mxu0 %v649
        %v1953 = vpop.f32.mrb[0].mxu0
        %v1954 = vadd.f32 %v1630, %v1953
        %v1955 = vpop.f32.mrb[0].mxu0
        %v1956 = vpop.f32.mrb[0].mxu0
        %v1957 = vpop.f32.mrb[0].mxu0
        %1958 = vdwg.mxu0
        %v1963 = vunpack.c.l.b16 %v1583
        %v1964 = vunpack.c.l.b16 %v1584
        %v1965 = vunpack.c.l.b16 %v1585
        %v1966 = vunpack.c.l.b16 %v1586
        %v1967 = vpack.c.b16 %v1964, %v1963
        %v1968 = vpack.c.b16 %v1966, %v1965
        %1971 = vmatprep.subr.bf16.mxu0 0
        %1972 = vmatpush1.bf16.msra.mxu0 %v1967
        %1973 = vmatprep.subr.bf16.mxu0 0
        %1974 = vmatpush1.bf16.msra.mxu0 %v1968
        %1975 = vmatprep.subr.bf16.mxu0 0
        %1976 = vmatpush1.bf16.msra.mxu0 0
        %1977 = vmatprep.subr.bf16.mxu0 0
        %1978 = vmatpush1.bf16.msra.mxu0 0
        %1979 = vmatprep.subr.bf16.mxu0 0
        %1980 = vmatpush1.bf16.msra.mxu0 0
        %1981 = vmatprep.subr.bf16.mxu0 0
        %1982 = vmatpush1.bf16.msra.mxu0 0
        %1983 = vmatprep.subr.bf16.mxu0 0
        %1984 = vmatpush1.bf16.msra.mxu0 0
        %1985 = vmatprep.subr.bf16.mxu0 0
        %1986 = vmatpush1.bf16.msra.mxu0 0
        %1987 = vmatprep.subr.bf16.mxu0 0
        %1988 = vmatpush1.bf16.msra.mxu0 0
        %1989 = vmatprep.subr.bf16.mxu0 0
        %1990 = vmatpush1.bf16.msra.mxu0 0
        %1991 = vmatprep.subr.bf16.mxu0 0
        %1992 = vmatpush1.bf16.msra.mxu0 0
        %1993 = vmatprep.subr.bf16.mxu0 0
        %1994 = vmatpush1.bf16.msra.mxu0 0
        %1995 = vmatprep.subr.bf16.mxu0 0
        %1996 = vmatpush1.bf16.msra.mxu0 0
        %1997 = vmatprep.subr.bf16.mxu0 0
        %1998 = vmatpush1.bf16.msra.mxu0 0
        %1999 = vmatprep.subr.bf16.mxu0 0
        %2000 = vmatpush1.bf16.msra.mxu0 0
        %2001 = vmatprep.subr.bf16.mxu0 0
        %2002 = vmatpush1.bf16.msra.mxu0 0
        %2003 = vmatprep.mubr.bf16.mxu0 0
        %2004 = vmatmul.mubr.bf16.gmra.mrb[0].mxu0 %v649
        %v2005 = vpop.f32.mrb[0].mxu0
        %v2006 = vadd.f32 %v1634, %v2005
        %v2007 = vpop.f32.mrb[0].mxu0
        %v2008 = vpop.f32.mrb[0].mxu0
        %v2009 = vpop.f32.mrb[0].mxu0
        %2010 = vdwg.mxu0
        %v2015 = vunpack.c.l.b16 %v1587
        %v2016 = vunpack.c.l.b16 %v1588
        %v2017 = vunpack.c.l.b16 %v1589
        %v2018 = vunpack.c.l.b16 %v1590
        %v2019 = vpack.c.b16 %v2016, %v2015
        %v2020 = vpack.c.b16 %v2018, %v2017
        %2023 = vmatprep.subr.bf16.mxu0 0
        %2024 = vmatpush1.bf16.msra.mxu0 %v2019
        %2025 = vmatprep.subr.bf16.mxu0 0
        %2026 = vmatpush1.bf16.msra.mxu0 %v2020
        %2027 = vmatprep.subr.bf16.mxu0 0
        %2028 = vmatpush1.bf16.msra.mxu0 0
        %2029 = vmatprep.subr.bf16.mxu0 0
        %2030 = vmatpush1.bf16.msra.mxu0 0
        %2031 = vmatprep.subr.bf16.mxu0 0
        %2032 = vmatpush1.bf16.msra.mxu0 0
        %2033 = vmatprep.subr.bf16.mxu0 0
        %2034 = vmatpush1.bf16.msra.mxu0 0
        %2035 = vmatprep.subr.bf16.mxu0 0
        %2036 = vmatpush1.bf16.msra.mxu0 0
        %2037 = vmatprep.subr.bf16.mxu0 0
        %2038 = vmatpush1.bf16.msra.mxu0 0
        %2039 = vmatprep.subr.bf16.mxu0 0
        %2040 = vmatpush1.bf16.msra.mxu0 0
        %2041 = vmatprep.subr.bf16.mxu0 0
        %2042 = vmatpush1.bf16.msra.mxu0 0
        %2043 = vmatprep.subr.bf16.mxu0 0
        %2044 = vmatpush1.bf16.msra.mxu0 0
        %2045 = vmatprep.subr.bf16.mxu0 0
        %2046 = vmatpush1.bf16.msra.mxu0 0
        %2047 = vmatprep.subr.bf16.mxu0 0
        %2048 = vmatpush1.bf16.msra.mxu0 0
        %2049 = vmatprep.subr.bf16.mxu0 0
        %2050 = vmatpush1.bf16.msra.mxu0 0
        %2051 = vmatprep.subr.bf16.mxu0 0
        %2052 = vmatpush1.bf16.msra.mxu0 0
        %2053 = vmatprep.subr.bf16.mxu0 0
        %2054 = vmatpush1.bf16.msra.mxu0 0
        %2055 = vmatprep.mubr.bf16.mxu0 0
        %2056 = vmatmul.mubr.bf16.gmra.mrb[0].mxu0 %v649
        %v2057 = vpop.f32.mrb[0].mxu0
        %v2058 = vadd.f32 %v1638, %v2057
        %v2059 = vpop.f32.mrb[0].mxu0
        %v2060 = vpop.f32.mrb[0].mxu0
        %v2061 = vpop.f32.mrb[0].mxu0
        %2062 = vdwg.mxu0
        %v2063 = vpack.c.bf16 %v686, %v686
        %v2064 = vpack.c.bf16 %v738, %v738
        %v2065 = vpack.c.bf16 %v790, %v790
        %v2066 = vpack.c.bf16 %v842, %v842
        %v2067 = vpack.c.bf16 %v894, %v894
        %v2068 = vpack.c.bf16 %v946, %v946
        %v2069 = vpack.c.bf16 %v998, %v998
        %v2070 = vpack.c.bf16 %v1050, %v1050
        %v2071 = vpack.c.bf16 %v1190, %v1190
        %v2072 = vpack.c.bf16 %v1242, %v1242
        %v2073 = vpack.c.bf16 %v1294, %v1294
        %v2074 = vpack.c.bf16 %v1346, %v1346
        %v2075 = vpack.c.bf16 %v1398, %v1398
        %v2076 = vpack.c.bf16 %v1450, %v1450
        %v2077 = vpack.c.bf16 %v1502, %v1502
        %v2078 = vpack.c.bf16 %v1554, %v1554
        %vm2079 = vcmask 31744
        %v2081 = vsel %vm2079, %v2063, 0
        %v2084 = vsel %vm2079, %v2071, 0
        %2086 = vmatprep.subr.bf16.mxu0 0
        %2087 = vmatpush1.bf16.xpose.msra.mxu0 %v2084
        %2088 = vmatprep.subr.bf16.mxu0 0
        %2089 = vmatpush1.bf16.xpose.msra.mxu0 0
        %2090 = vmatprep.subr.bf16.mxu0 0
        %2091 = vmatpush1.bf16.xpose.msra.mxu0 0
        %2092 = vmatprep.subr.bf16.mxu0 0
        %2093 = vmatpush1.bf16.xpose.msra.mxu0 0
        %2094 = vmatprep.subr.bf16.mxu0 0
        %2095 = vmatpush1.bf16.xpose.msra.mxu0 0
        %2096 = vmatprep.subr.bf16.mxu0 0
        %2097 = vmatpush1.bf16.xpose.msra.mxu0 0
        %2098 = vmatprep.subr.bf16.mxu0 0
        %2099 = vmatpush1.bf16.xpose.msra.mxu0 0
        %2100 = vmatprep.subr.bf16.mxu0 0
        %2101 = vmatpush1.bf16.xpose.msra.mxu0 0
        %2102 = vmatprep.subr.bf16.mxu0 0
        %2103 = vmatpush1.bf16.xpose.msra.mxu0 0
        %2104 = vmatprep.subr.bf16.mxu0 0
        %2105 = vmatpush1.bf16.xpose.msra.mxu0 0
        %2106 = vmatprep.subr.bf16.mxu0 0
        %2107 = vmatpush1.bf16.xpose.msra.mxu0 0
        %2108 = vmatprep.subr.bf16.mxu0 0
        %2109 = vmatpush1.bf16.xpose.msra.mxu0 0
        %2110 = vmatprep.subr.bf16.mxu0 0
        %2111 = vmatpush1.bf16.xpose.msra.mxu0 0
        %2112 = vmatprep.subr.bf16.mxu0 0
        %2113 = vmatpush1.bf16.xpose.msra.mxu0 0
        %2114 = vmatprep.subr.bf16.mxu0 0
        %2115 = vmatpush1.bf16.xpose.msra.mxu0 0
        %2116 = vmatprep.subr.bf16.mxu0 0
        %2117 = vmatpush1.bf16.xpose.msra.mxu0 0
        %2118 = vmatprep.mubr.bf16.mxu0 0
        %2119 = vmatmul.mubr.bf16.gmra.mrb[0].mxu0 %v2081
        %v2120 = vpop.f32.mrb[0].mxu0
        %v2121 = vadd.f32 0.0, %v2120
        %v2122 = vpop.f32.mrb[0].mxu0
        %v2123 = vpop.f32.mrb[0].mxu0
        %v2124 = vpop.f32.mrb[0].mxu0
        %2125 = vdwg.mxu0
        %v2127 = vsel %vm2079, %v2064, 0
        %v2130 = vsel %vm2079, %v2072, 0
        %2132 = vmatprep.subr.bf16.mxu0 0
        %2133 = vmatpush1.bf16.xpose.msra.mxu0 %v2130
        %2134 = vmatprep.subr.bf16.mxu0 0
        %2135 = vmatpush1.bf16.xpose.msra.mxu0 0
        %2136 = vmatprep.subr.bf16.mxu0 0
        %2137 = vmatpush1.bf16.xpose.msra.mxu0 0
        %2138 = vmatprep.subr.bf16.mxu0 0
        %2139 = vmatpush1.bf16.xpose.msra.mxu0 0
        %2140 = vmatprep.subr.bf16.mxu0 0
        %2141 = vmatpush1.bf16.xpose.msra.mxu0 0
        %2142 = vmatprep.subr.bf16.mxu0 0
        %2143 = vmatpush1.bf16.xpose.msra.mxu0 0
        %2144 = vmatprep.subr.bf16.mxu0 0
        %2145 = vmatpush1.bf16.xpose.msra.mxu0 0
        %2146 = vmatprep.subr.bf16.mxu0 0
        %2147 = vmatpush1.bf16.xpose.msra.mxu0 0
        %2148 = vmatprep.subr.bf16.mxu0 0
        %2149 = vmatpush1.bf16.xpose.msra.mxu0 0
        %2150 = vmatprep.subr.bf16.mxu0 0
        %2151 = vmatpush1.bf16.xpose.msra.mxu0 0
        %2152 = vmatprep.subr.bf16.mxu0 0
        %2153 = vmatpush1.bf16.xpose.msra.mxu0 0
        %2154 = vmatprep.subr.bf16.mxu0 0
        %2155 = vmatpush1.bf16.xpose.msra.mxu0 0
        %2156 = vmatprep.subr.bf16.mxu0 0
        %2157 = vmatpush1.bf16.xpose.msra.mxu0 0
        %2158 = vmatprep.subr.bf16.mxu0 0
        %2159 = vmatpush1.bf16.xpose.msra.mxu0 0
        %2160 = vmatprep.subr.bf16.mxu0 0
        %2161 = vmatpush1.bf16.xpose.msra.mxu0 0
        %2162 = vmatprep.subr.bf16.mxu0 0
        %2163 = vmatpush1.bf16.xpose.msra.mxu0 0
        %2164 = vmatprep.mubr.bf16.mxu0 0
        %2165 = vmatmul.mubr.bf16.gmra.mrb[0].mxu0 %v2127
        %v2166 = vpop.f32.mrb[0].mxu0
        %v2167 = vadd.f32 0.0, %v2166
        %v2168 = vpop.f32.mrb[0].mxu0
        %v2169 = vpop.f32.mrb[0].mxu0
        %v2170 = vpop.f32.mrb[0].mxu0
        %2171 = vdwg.mxu0
        %v2173 = vsel %vm2079, %v2065, 0
        %v2176 = vsel %vm2079, %v2073, 0
        %2178 = vmatprep.subr.bf16.mxu0 0
        %2179 = vmatpush1.bf16.xpose.msra.mxu0 %v2176
        %2180 = vmatprep.subr.bf16.mxu0 0
        %2181 = vmatpush1.bf16.xpose.msra.mxu0 0
        %2182 = vmatprep.subr.bf16.mxu0 0
        %2183 = vmatpush1.bf16.xpose.msra.mxu0 0
        %2184 = vmatprep.subr.bf16.mxu0 0
        %2185 = vmatpush1.bf16.xpose.msra.mxu0 0
        %2186 = vmatprep.subr.bf16.mxu0 0
        %2187 = vmatpush1.bf16.xpose.msra.mxu0 0
        %2188 = vmatprep.subr.bf16.mxu0 0
        %2189 = vmatpush1.bf16.xpose.msra.mxu0 0
        %2190 = vmatprep.subr.bf16.mxu0 0
        %2191 = vmatpush1.bf16.xpose.msra.mxu0 0
        %2192 = vmatprep.subr.bf16.mxu0 0
        %2193 = vmatpush1.bf16.xpose.msra.mxu0 0
        %2194 = vmatprep.subr.bf16.mxu0 0
        %2195 = vmatpush1.bf16.xpose.msra.mxu0 0
        %2196 = vmatprep.subr.bf16.mxu0 0
        %2197 = vmatpush1.bf16.xpose.msra.mxu0 0
        %2198 = vmatprep.subr.bf16.mxu0 0
        %2199 = vmatpush1.bf16.xpose.msra.mxu0 0
        %2200 = vmatprep.subr.bf16.mxu0 0
        %2201 = vmatpush1.bf16.xpose.msra.mxu0 0
        %2202 = vmatprep.subr.bf16.mxu0 0
        %2203 = vmatpush1.bf16.xpose.msra.mxu0 0
        %2204 = vmatprep.subr.bf16.mxu0 0
        %2205 = vmatpush1.bf16.xpose.msra.mxu0 0
        %2206 = vmatprep.subr.bf16.mxu0 0
        %2207 = vmatpush1.bf16.xpose.msra.mxu0 0
        %2208 = vmatprep.subr.bf16.mxu0 0
        %2209 = vmatpush1.bf16.xpose.msra.mxu0 0
        %2210 = vmatprep.mubr.bf16.mxu0 0
        %2211 = vmatmul.mubr.bf16.gmra.mrb[0].mxu0 %v2173
        %v2212 = vpop.f32.mrb[0].mxu0
        %v2213 = vadd.f32 0.0, %v2212
        %v2214 = vpop.f32.mrb[0].mxu0
        %v2215 = vpop.f32.mrb[0].mxu0
        %v2216 = vpop.f32.mrb[0].mxu0
        %2217 = vdwg.mxu0
        %v2219 = vsel %vm2079, %v2066, 0
        %v2222 = vsel %vm2079, %v2074, 0
        %2224 = vmatprep.subr.bf16.mxu0 0
        %2225 = vmatpush1.bf16.xpose.msra.mxu0 %v2222
        %2226 = vmatprep.subr.bf16.mxu0 0
        %2227 = vmatpush1.bf16.xpose.msra.mxu0 0
        %2228 = vmatprep.subr.bf16.mxu0 0
        %2229 = vmatpush1.bf16.xpose.msra.mxu0 0
        %2230 = vmatprep.subr.bf16.mxu0 0
        %2231 = vmatpush1.bf16.xpose.msra.mxu0 0
        %2232 = vmatprep.subr.bf16.mxu0 0
        %2233 = vmatpush1.bf16.xpose.msra.mxu0 0
        %2234 = vmatprep.subr.bf16.mxu0 0
        %2235 = vmatpush1.bf16.xpose.msra.mxu0 0
        %2236 = vmatprep.subr.bf16.mxu0 0
        %2237 = vmatpush1.bf16.xpose.msra.mxu0 0
        %2238 = vmatprep.subr.bf16.mxu0 0
        %2239 = vmatpush1.bf16.xpose.msra.mxu0 0
        %2240 = vmatprep.subr.bf16.mxu0 0
        %2241 = vmatpush1.bf16.xpose.msra.mxu0 0
        %2242 = vmatprep.subr.bf16.mxu0 0
        %2243 = vmatpush1.bf16.xpose.msra.mxu0 0
        %2244 = vmatprep.subr.bf16.mxu0 0
        %2245 = vmatpush1.bf16.xpose.msra.mxu0 0
        %2246 = vmatprep.subr.bf16.mxu0 0
        %2247 = vmatpush1.bf16.xpose.msra.mxu0 0
        %2248 = vmatprep.subr.bf16.mxu0 0
        %2249 = vmatpush1.bf16.xpose.msra.mxu0 0
        %2250 = vmatprep.subr.bf16.mxu0 0
        %2251 = vmatpush1.bf16.xpose.msra.mxu0 0
        %2252 = vmatprep.subr.bf16.mxu0 0
        %2253 = vmatpush1.bf16.xpose.msra.mxu0 0
        %2254 = vmatprep.subr.bf16.mxu0 0
        %2255 = vmatpush1.bf16.xpose.msra.mxu0 0
        %2256 = vmatprep.mubr.bf16.mxu0 0
        %2257 = vmatmul.mubr.bf16.gmra.mrb[0].mxu0 %v2219
        %v2258 = vpop.f32.mrb[0].mxu0
        %v2259 = vadd.f32 0.0, %v2258
        %v2260 = vpop.f32.mrb[0].mxu0
        %v2261 = vpop.f32.mrb[0].mxu0
        %v2262 = vpop.f32.mrb[0].mxu0
        %2263 = vdwg.mxu0
        %v2265 = vsel %vm2079, %v2067, 0
        %v2268 = vsel %vm2079, %v2075, 0
        %2270 = vmatprep.subr.bf16.mxu0 0
        %2271 = vmatpush1.bf16.xpose.msra.mxu0 %v2268
        %2272 = vmatprep.subr.bf16.mxu0 0
        %2273 = vmatpush1.bf16.xpose.msra.mxu0 0
        %2274 = vmatprep.subr.bf16.mxu0 0
        %2275 = vmatpush1.bf16.xpose.msra.mxu0 0
        %2276 = vmatprep.subr.bf16.mxu0 0
        %2277 = vmatpush1.bf16.xpose.msra.mxu0 0
        %2278 = vmatprep.subr.bf16.mxu0 0
        %2279 = vmatpush1.bf16.xpose.msra.mxu0 0
        %2280 = vmatprep.subr.bf16.mxu0 0
        %2281 = vmatpush1.bf16.xpose.msra.mxu0 0
        %2282 = vmatprep.subr.bf16.mxu0 0
        %2283 = vmatpush1.bf16.xpose.msra.mxu0 0
        %2284 = vmatprep.subr.bf16.mxu0 0
        %2285 = vmatpush1.bf16.xpose.msra.mxu0 0
        %2286 = vmatprep.subr.bf16.mxu0 0
        %2287 = vmatpush1.bf16.xpose.msra.mxu0 0
        %2288 = vmatprep.subr.bf16.mxu0 0
        %2289 = vmatpush1.bf16.xpose.msra.mxu0 0
        %2290 = vmatprep.subr.bf16.mxu0 0
        %2291 = vmatpush1.bf16.xpose.msra.mxu0 0
        %2292 = vmatprep.subr.bf16.mxu0 0
        %2293 = vmatpush1.bf16.xpose.msra.mxu0 0
        %2294 = vmatprep.subr.bf16.mxu0 0
        %2295 = vmatpush1.bf16.xpose.msra.mxu0 0
        %2296 = vmatprep.subr.bf16.mxu0 0
        %2297 = vmatpush1.bf16.xpose.msra.mxu0 0
        %2298 = vmatprep.subr.bf16.mxu0 0
        %2299 = vmatpush1.bf16.xpose.msra.mxu0 0
        %2300 = vmatprep.subr.bf16.mxu0 0
        %2301 = vmatpush1.bf16.xpose.msra.mxu0 0
        %2302 = vmatprep.mubr.bf16.mxu0 0
        %2303 = vmatmul.mubr.bf16.gmra.mrb[0].mxu0 %v2265
        %v2304 = vpop.f32.mrb[0].mxu0
        %v2305 = vadd.f32 0.0, %v2304
        %v2306 = vpop.f32.mrb[0].mxu0
        %v2307 = vpop.f32.mrb[0].mxu0
        %v2308 = vpop.f32.mrb[0].mxu0
        %2309 = vdwg.mxu0
        %v2311 = vsel %vm2079, %v2068, 0
        %v2314 = vsel %vm2079, %v2076, 0
        %2316 = vmatprep.subr.bf16.mxu0 0
        %2317 = vmatpush1.bf16.xpose.msra.mxu0 %v2314
        %2318 = vmatprep.subr.bf16.mxu0 0
        %2319 = vmatpush1.bf16.xpose.msra.mxu0 0
        %2320 = vmatprep.subr.bf16.mxu0 0
        %2321 = vmatpush1.bf16.xpose.msra.mxu0 0
        %2322 = vmatprep.subr.bf16.mxu0 0
        %2323 = vmatpush1.bf16.xpose.msra.mxu0 0
        %2324 = vmatprep.subr.bf16.mxu0 0
        %2325 = vmatpush1.bf16.xpose.msra.mxu0 0
        %2326 = vmatprep.subr.bf16.mxu0 0
        %2327 = vmatpush1.bf16.xpose.msra.mxu0 0
        %2328 = vmatprep.subr.bf16.mxu0 0
        %2329 = vmatpush1.bf16.xpose.msra.mxu0 0
        %2330 = vmatprep.subr.bf16.mxu0 0
        %2331 = vmatpush1.bf16.xpose.msra.mxu0 0
        %2332 = vmatprep.subr.bf16.mxu0 0
        %2333 = vmatpush1.bf16.xpose.msra.mxu0 0
        %2334 = vmatprep.subr.bf16.mxu0 0
        %2335 = vmatpush1.bf16.xpose.msra.mxu0 0
        %2336 = vmatprep.subr.bf16.mxu0 0
        %2337 = vmatpush1.bf16.xpose.msra.mxu0 0
        %2338 = vmatprep.subr.bf16.mxu0 0
        %2339 = vmatpush1.bf16.xpose.msra.mxu0 0
        %2340 = vmatprep.subr.bf16.mxu0 0
        %2341 = vmatpush1.bf16.xpose.msra.mxu0 0
        %2342 = vmatprep.subr.bf16.mxu0 0
        %2343 = vmatpush1.bf16.xpose.msra.mxu0 0
        %2344 = vmatprep.subr.bf16.mxu0 0
        %2345 = vmatpush1.bf16.xpose.msra.mxu0 0
        %2346 = vmatprep.subr.bf16.mxu0 0
        %2347 = vmatpush1.bf16.xpose.msra.mxu0 0
        %2348 = vmatprep.mubr.bf16.mxu0 0
        %2349 = vmatmul.mubr.bf16.gmra.mrb[0].mxu0 %v2311
        %v2350 = vpop.f32.mrb[0].mxu0
        %v2351 = vadd.f32 0.0, %v2350
        %v2352 = vpop.f32.mrb[0].mxu0
        %v2353 = vpop.f32.mrb[0].mxu0
        %v2354 = vpop.f32.mrb[0].mxu0
        %2355 = vdwg.mxu0
        %v2357 = vsel %vm2079, %v2069, 0
        %v2360 = vsel %vm2079, %v2077, 0
        %2362 = vmatprep.subr.bf16.mxu0 0
        %2363 = vmatpush1.bf16.xpose.msra.mxu0 %v2360
        %2364 = vmatprep.subr.bf16.mxu0 0
        %2365 = vmatpush1.bf16.xpose.msra.mxu0 0
        %2366 = vmatprep.subr.bf16.mxu0 0
        %2367 = vmatpush1.bf16.xpose.msra.mxu0 0
        %2368 = vmatprep.subr.bf16.mxu0 0
        %2369 = vmatpush1.bf16.xpose.msra.mxu0 0
        %2370 = vmatprep.subr.bf16.mxu0 0
        %2371 = vmatpush1.bf16.xpose.msra.mxu0 0
        %2372 = vmatprep.subr.bf16.mxu0 0
        %2373 = vmatpush1.bf16.xpose.msra.mxu0 0
        %2374 = vmatprep.subr.bf16.mxu0 0
        %2375 = vmatpush1.bf16.xpose.msra.mxu0 0
        %2376 = vmatprep.subr.bf16.mxu0 0
        %2377 = vmatpush1.bf16.xpose.msra.mxu0 0
        %2378 = vmatprep.subr.bf16.mxu0 0
        %2379 = vmatpush1.bf16.xpose.msra.mxu0 0
        %2380 = vmatprep.subr.bf16.mxu0 0
        %2381 = vmatpush1.bf16.xpose.msra.mxu0 0
        %2382 = vmatprep.subr.bf16.mxu0 0
        %2383 = vmatpush1.bf16.xpose.msra.mxu0 0
        %2384 = vmatprep.subr.bf16.mxu0 0
        %2385 = vmatpush1.bf16.xpose.msra.mxu0 0
        %2386 = vmatprep.subr.bf16.mxu0 0
        %2387 = vmatpush1.bf16.xpose.msra.mxu0 0
        %2388 = vmatprep.subr.bf16.mxu0 0
        %2389 = vmatpush1.bf16.xpose.msra.mxu0 0
        %2390 = vmatprep.subr.bf16.mxu0 0
        %2391 = vmatpush1.bf16.xpose.msra.mxu0 0
        %2392 = vmatprep.subr.bf16.mxu0 0
        %2393 = vmatpush1.bf16.xpose.msra.mxu0 0
        %2394 = vmatprep.mubr.bf16.mxu0 0
        %2395 = vmatmul.mubr.bf16.gmra.mrb[0].mxu0 %v2357
        %v2396 = vpop.f32.mrb[0].mxu0
        %v2397 = vadd.f32 0.0, %v2396
        %v2398 = vpop.f32.mrb[0].mxu0
        %v2399 = vpop.f32.mrb[0].mxu0
        %v2400 = vpop.f32.mrb[0].mxu0
        %2401 = vdwg.mxu0
        %v2403 = vsel %vm2079, %v2070, 0
        %v2406 = vsel %vm2079, %v2078, 0
        %2408 = vmatprep.subr.bf16.mxu0 0
        %2409 = vmatpush1.bf16.xpose.msra.mxu0 %v2406
        %2410 = vmatprep.subr.bf16.mxu0 0
        %2411 = vmatpush1.bf16.xpose.msra.mxu0 0
        %2412 = vmatprep.subr.bf16.mxu0 0
        %2413 = vmatpush1.bf16.xpose.msra.mxu0 0
        %2414 = vmatprep.subr.bf16.mxu0 0
        %2415 = vmatpush1.bf16.xpose.msra.mxu0 0
        %2416 = vmatprep.subr.bf16.mxu0 0
        %2417 = vmatpush1.bf16.xpose.msra.mxu0 0
        %2418 = vmatprep.subr.bf16.mxu0 0
        %2419 = vmatpush1.bf16.xpose.msra.mxu0 0
        %2420 = vmatprep.subr.bf16.mxu0 0
        %2421 = vmatpush1.bf16.xpose.msra.mxu0 0
        %2422 = vmatprep.subr.bf16.mxu0 0
        %2423 = vmatpush1.bf16.xpose.msra.mxu0 0
        %2424 = vmatprep.subr.bf16.mxu0 0
        %2425 = vmatpush1.bf16.xpose.msra.mxu0 0
        %2426 = vmatprep.subr.bf16.mxu0 0
        %2427 = vmatpush1.bf16.xpose.msra.mxu0 0
        %2428 = vmatprep.subr.bf16.mxu0 0
        %2429 = vmatpush1.bf16.xpose.msra.mxu0 0
        %2430 = vmatprep.subr.bf16.mxu0 0
        %2431 = vmatpush1.bf16.xpose.msra.mxu0 0
        %2432 = vmatprep.subr.bf16.mxu0 0
        %2433 = vmatpush1.bf16.xpose.msra.mxu0 0
        %2434 = vmatprep.subr.bf16.mxu0 0
        %2435 = vmatpush1.bf16.xpose.msra.mxu0 0
        %2436 = vmatprep.subr.bf16.mxu0 0
        %2437 = vmatpush1.bf16.xpose.msra.mxu0 0
        %2438 = vmatprep.subr.bf16.mxu0 0
        %2439 = vmatpush1.bf16.xpose.msra.mxu0 0
        %2440 = vmatprep.mubr.bf16.mxu0 0
        %2441 = vmatmul.mubr.bf16.gmra.mrb[0].mxu0 %v2403
        %v2442 = vpop.f32.mrb[0].mxu0
        %v2443 = vadd.f32 0.0, %v2442
        %v2444 = vpop.f32.mrb[0].mxu0
        %v2445 = vpop.f32.mrb[0].mxu0
        %v2446 = vpop.f32.mrb[0].mxu0
        %2447 = vdwg.mxu0
        %v2448 = vmul.f32 %v2121, 0.5
        %v2449 = vmul.f32 %v2167, 0.5
        %v2450 = vmul.f32 %v2213, 0.5
        %v2451 = vmul.f32 %v2259, 0.5
        %v2452 = vmul.f32 %v2305, 0.5
        %v2453 = vmul.f32 %v2351, 0.5
        %v2454 = vmul.f32 %v2397, 0.5
        %v2455 = vmul.f32 %v2443, 0.5
        %vm2456 = vcmask 64512
        %v2457 = vsel %vm2456, %v2448, -inf
        %2458 = vmax.xlane.f32.xlu0 %v2457
        %v2459 = vpop.xlane.xlu0 %2458
        %v2460 = vsel %vm2456, %v2449, -inf
        %2461 = vmax.xlane.f32.xlu0 %v2460
        %v2462 = vpop.xlane.xlu0 %2461
        %v2463 = vsel %vm2456, %v2450, -inf
        %2464 = vmax.xlane.f32.xlu0 %v2463
        %v2465 = vpop.xlane.xlu0 %2464
        %v2466 = vsel %vm2456, %v2451, -inf
        %2467 = vmax.xlane.f32.xlu0 %v2466
        %v2468 = vpop.xlane.xlu0 %2467
        %v2469 = vsel %vm2456, %v2452, -inf
        %2470 = vmax.xlane.f32.xlu0 %v2469
        %v2471 = vpop.xlane.xlu0 %2470
        %v2472 = vsel %vm2456, %v2453, -inf
        %2473 = vmax.xlane.f32.xlu0 %v2472
        %v2474 = vpop.xlane.xlu0 %2473
        %v2475 = vsel %vm2456, %v2454, -inf
        %2476 = vmax.xlane.f32.xlu0 %v2475
        %v2477 = vpop.xlane.xlu0 %2476
        %v2478 = vsel %vm2456, %v2455, -inf
        %2479 = vmax.xlane.f32.xlu0 %v2478
        %v2480 = vpop.xlane.xlu0 %2479
        %v2481 = vsub.f32 %v2448, %v2459
        %v2482 = vsub.f32 %v2449, %v2462
        %v2483 = vsub.f32 %v2450, %v2465
        %v2484 = vsub.f32 %v2451, %v2468
        %v2485 = vsub.f32 %v2452, %v2471
        %v2486 = vsub.f32 %v2453, %v2474
        %v2487 = vsub.f32 %v2454, %v2477
        %v2488 = vsub.f32 %v2455, %v2480
        %v2489 = vmul.f32 %v2481, 1.442695
        %v2490 = vpow.pop %v2489
        %v2491 = vmul.f32 %v2482, 1.442695
        %v2492 = vpow.pop %v2491
        %v2493 = vmul.f32 %v2483, 1.442695
        %v2494 = vpow.pop %v2493
        %v2495 = vmul.f32 %v2484, 1.442695
        %v2496 = vpow.pop %v2495
        %v2497 = vmul.f32 %v2485, 1.442695
        %v2498 = vpow.pop %v2497
        %v2499 = vmul.f32 %v2486, 1.442695
        %v2500 = vpow.pop %v2499
        %v2501 = vmul.f32 %v2487, 1.442695
        %v2502 = vpow.pop %v2501
        %v2503 = vmul.f32 %v2488, 1.442695
        %v2504 = vpow.pop %v2503
        %v2505 = vsel %vm2456, %v2490, 0.0
        %2506 = vadd.xlane.f32.xlu0 %v2505
        %v2507 = vpop.xlane.xlu0 %2506
        %v2508 = vsel %vm2456, %v2492, 0.0
        %2509 = vadd.xlane.f32.xlu0 %v2508
        %v2510 = vpop.xlane.xlu0 %2509
        %v2511 = vsel %vm2456, %v2494, 0.0
        %2512 = vadd.xlane.f32.xlu0 %v2511
        %v2513 = vpop.xlane.xlu0 %2512
        %v2514 = vsel %vm2456, %v2496, 0.0
        %2515 = vadd.xlane.f32.xlu0 %v2514
        %v2516 = vpop.xlane.xlu0 %2515
        %v2517 = vsel %vm2456, %v2498, 0.0
        %2518 = vadd.xlane.f32.xlu0 %v2517
        %v2519 = vpop.xlane.xlu0 %2518
        %v2520 = vsel %vm2456, %v2500, 0.0
        %2521 = vadd.xlane.f32.xlu0 %v2520
        %v2522 = vpop.xlane.xlu0 %2521
        %v2523 = vsel %vm2456, %v2502, 0.0
        %2524 = vadd.xlane.f32.xlu0 %v2523
        %v2525 = vpop.xlane.xlu0 %2524
        %v2526 = vsel %vm2456, %v2504, 0.0
        %2527 = vadd.xlane.f32.xlu0 %v2526
        %v2528 = vpop.xlane.xlu0 %2527
        %v2529 = vrcp.pop %v2507
        %v2530 = vrcp.pop %v2510
        %v2531 = vrcp.pop %v2513
        %v2532 = vrcp.pop %v2516
        %v2533 = vrcp.pop %v2519
        %v2534 = vrcp.pop %v2522
        %v2535 = vrcp.pop %v2525
        %v2536 = vrcp.pop %v2528
        %v2537 = vmul.f32 %v2490, %v2529
        %v2538 = vmul.f32 %v2492, %v2530
        %v2539 = vmul.f32 %v2494, %v2531
        %v2540 = vmul.f32 %v2496, %v2532
        %v2541 = vmul.f32 %v2498, %v2533
        %v2542 = vmul.f32 %v2500, %v2534
        %v2543 = vmul.f32 %v2502, %v2535
        %v2544 = vmul.f32 %v2504, %v2536
        %v2545 = vpack.c.bf16 %v2537, %v2537
        %v2546 = vpack.c.bf16 %v2538, %v2538
        %v2547 = vpack.c.bf16 %v2539, %v2539
        %v2548 = vpack.c.bf16 %v2540, %v2540
        %v2549 = vpack.c.bf16 %v2541, %v2541
        %v2550 = vpack.c.bf16 %v2542, %v2542
        %v2551 = vpack.c.bf16 %v2543, %v2543
        %v2552 = vpack.c.bf16 %v2544, %v2544
        %v2553 = vpack.c.bf16 %v1694, %v1694
        %v2554 = vpack.c.bf16 %v1746, %v1746
        %v2555 = vpack.c.bf16 %v1798, %v1798
        %v2556 = vpack.c.bf16 %v1850, %v1850
        %v2557 = vpack.c.bf16 %v1902, %v1902
        %v2558 = vpack.c.bf16 %v1954, %v1954
        %v2559 = vpack.c.bf16 %v2006, %v2006
        %v2560 = vpack.c.bf16 %v2058, %v2058
        %v2562 = vsel %vm2456, %v2545, 0
        %vm2564 = vcmask 1043456
        %v2566 = vsel %vm2564, %v2553, 0
        %2568 = vmatprep.subr.bf16.mxu0 0
        %2569 = vmatpush1.bf16.msra.mxu0 %v2566
        %2570 = vmatprep.subr.bf16.mxu0 0
        %2571 = vmatpush1.bf16.msra.mxu0 0
        %2572 = vmatprep.subr.bf16.mxu0 0
        %2573 = vmatpush1.bf16.msra.mxu0 0
        %2574 = vmatprep.subr.bf16.mxu0 0
        %2575 = vmatpush1.bf16.msra.mxu0 0
        %2576 = vmatprep.subr.bf16.mxu0 0
        %2577 = vmatpush1.bf16.msra.mxu0 0
        %2578 = vmatprep.subr.bf16.mxu0 0
        %2579 = vmatpush1.bf16.msra.mxu0 0
        %2580 = vmatprep.subr.bf16.mxu0 0
        %2581 = vmatpush1.bf16.msra.mxu0 0
        %2582 = vmatprep.subr.bf16.mxu0 0
        %2583 = vmatpush1.bf16.msra.mxu0 0
        %2584 = vmatprep.subr.bf16.mxu0 0
        %2585 = vmatpush1.bf16.msra.mxu0 0
        %2586 = vmatprep.subr.bf16.mxu0 0
        %2587 = vmatpush1.bf16.msra.mxu0 0
        %2588 = vmatprep.subr.bf16.mxu0 0
        %2589 = vmatpush1.bf16.msra.mxu0 0
        %2590 = vmatprep.subr.bf16.mxu0 0
        %2591 = vmatpush1.bf16.msra.mxu0 0
        %2592 = vmatprep.subr.bf16.mxu0 0
        %2593 = vmatpush1.bf16.msra.mxu0 0
        %2594 = vmatprep.subr.bf16.mxu0 0
        %2595 = vmatpush1.bf16.msra.mxu0 0
        %2596 = vmatprep.subr.bf16.mxu0 0
        %2597 = vmatpush1.bf16.msra.mxu0 0
        %2598 = vmatprep.subr.bf16.mxu0 0
        %2599 = vmatpush1.bf16.msra.mxu0 0
        %2600 = vmatprep.mubr.bf16.mxu0 0
        %2601 = vmatmul.mubr.bf16.gmra.mrb[0].mxu0 %v2562
        %v2602 = vpop.f32.mrb[0].mxu0
        %v2603 = vadd.f32 0.0, %v2602
        %v2604 = vpop.f32.mrb[0].mxu0
        %v2605 = vpop.f32.mrb[0].mxu0
        %v2606 = vpop.f32.mrb[0].mxu0
        %2607 = vdwg.mxu0
        %v2609 = vsel %vm2456, %v2546, 0
        %v2612 = vsel %vm2564, %v2554, 0
        %2614 = vmatprep.subr.bf16.mxu0 0
        %2615 = vmatpush1.bf16.msra.mxu0 %v2612
        %2616 = vmatprep.subr.bf16.mxu0 0
        %2617 = vmatpush1.bf16.msra.mxu0 0
        %2618 = vmatprep.subr.bf16.mxu0 0
        %2619 = vmatpush1.bf16.msra.mxu0 0
        %2620 = vmatprep.subr.bf16.mxu0 0
        %2621 = vmatpush1.bf16.msra.mxu0 0
        %2622 = vmatprep.subr.bf16.mxu0 0
        %2623 = vmatpush1.bf16.msra.mxu0 0
        %2624 = vmatprep.subr.bf16.mxu0 0
        %2625 = vmatpush1.bf16.msra.mxu0 0
        %2626 = vmatprep.subr.bf16.mxu0 0
        %2627 = vmatpush1.bf16.msra.mxu0 0
        %2628 = vmatprep.subr.bf16.mxu0 0
        %2629 = vmatpush1.bf16.msra.mxu0 0
        %2630 = vmatprep.subr.bf16.mxu0 0
        %2631 = vmatpush1.bf16.msra.mxu0 0
        %2632 = vmatprep.subr.bf16.mxu0 0
        %2633 = vmatpush1.bf16.msra.mxu0 0
        %2634 = vmatprep.subr.bf16.mxu0 0
        %2635 = vmatpush1.bf16.msra.mxu0 0
        %2636 = vmatprep.subr.bf16.mxu0 0
        %2637 = vmatpush1.bf16.msra.mxu0 0
        %2638 = vmatprep.subr.bf16.mxu0 0
        %2639 = vmatpush1.bf16.msra.mxu0 0
        %2640 = vmatprep.subr.bf16.mxu0 0
        %2641 = vmatpush1.bf16.msra.mxu0 0
        %2642 = vmatprep.subr.bf16.mxu0 0
        %2643 = vmatpush1.bf16.msra.mxu0 0
        %2644 = vmatprep.subr.bf16.mxu0 0
        %2645 = vmatpush1.bf16.msra.mxu0 0
        %2646 = vmatprep.mubr.bf16.mxu0 0
        %2647 = vmatmul.mubr.bf16.gmra.mrb[0].mxu0 %v2609
        %v2648 = vpop.f32.mrb[0].mxu0
        %v2649 = vadd.f32 0.0, %v2648
        %v2650 = vpop.f32.mrb[0].mxu0
        %v2651 = vpop.f32.mrb[0].mxu0
        %v2652 = vpop.f32.mrb[0].mxu0
        %2653 = vdwg.mxu0
        %v2655 = vsel %vm2456, %v2547, 0
        %v2658 = vsel %vm2564, %v2555, 0
        %2660 = vmatprep.subr.bf16.mxu0 0
        %2661 = vmatpush1.bf16.msra.mxu0 %v2658
        %2662 = vmatprep.subr.bf16.mxu0 0
        %2663 = vmatpush1.bf16.msra.mxu0 0
        %2664 = vmatprep.subr.bf16.mxu0 0
        %2665 = vmatpush1.bf16.msra.mxu0 0
        %2666 = vmatprep.subr.bf16.mxu0 0
        %2667 = vmatpush1.bf16.msra.mxu0 0
        %2668 = vmatprep.subr.bf16.mxu0 0
        %2669 = vmatpush1.bf16.msra.mxu0 0
        %2670 = vmatprep.subr.bf16.mxu0 0
        %2671 = vmatpush1.bf16.msra.mxu0 0
        %2672 = vmatprep.subr.bf16.mxu0 0
        %2673 = vmatpush1.bf16.msra.mxu0 0
        %2674 = vmatprep.subr.bf16.mxu0 0
        %2675 = vmatpush1.bf16.msra.mxu0 0
        %2676 = vmatprep.subr.bf16.mxu0 0
        %2677 = vmatpush1.bf16.msra.mxu0 0
        %2678 = vmatprep.subr.bf16.mxu0 0
        %2679 = vmatpush1.bf16.msra.mxu0 0
        %2680 = vmatprep.subr.bf16.mxu0 0
        %2681 = vmatpush1.bf16.msra.mxu0 0
        %2682 = vmatprep.subr.bf16.mxu0 0
        %2683 = vmatpush1.bf16.msra.mxu0 0
        %2684 = vmatprep.subr.bf16.mxu0 0
        %2685 = vmatpush1.bf16.msra.mxu0 0
        %2686 = vmatprep.subr.bf16.mxu0 0
        %2687 = vmatpush1.bf16.msra.mxu0 0
        %2688 = vmatprep.subr.bf16.mxu0 0
        %2689 = vmatpush1.bf16.msra.mxu0 0
        %2690 = vmatprep.subr.bf16.mxu0 0
        %2691 = vmatpush1.bf16.msra.mxu0 0
        %2692 = vmatprep.mubr.bf16.mxu0 0
        %2693 = vmatmul.mubr.bf16.gmra.mrb[0].mxu0 %v2655
        %v2694 = vpop.f32.mrb[0].mxu0
        %v2695 = vadd.f32 0.0, %v2694
        %v2696 = vpop.f32.mrb[0].mxu0
        %v2697 = vpop.f32.mrb[0].mxu0
        %v2698 = vpop.f32.mrb[0].mxu0
        %2699 = vdwg.mxu0
        %v2701 = vsel %vm2456, %v2548, 0
        %v2704 = vsel %vm2564, %v2556, 0
        %2706 = vmatprep.subr.bf16.mxu0 0
        %2707 = vmatpush1.bf16.msra.mxu0 %v2704
        %2708 = vmatprep.subr.bf16.mxu0 0
        %2709 = vmatpush1.bf16.msra.mxu0 0
        %2710 = vmatprep.subr.bf16.mxu0 0
        %2711 = vmatpush1.bf16.msra.mxu0 0
        %2712 = vmatprep.subr.bf16.mxu0 0
        %2713 = vmatpush1.bf16.msra.mxu0 0
        %2714 = vmatprep.subr.bf16.mxu0 0
        %2715 = vmatpush1.bf16.msra.mxu0 0
        %2716 = vmatprep.subr.bf16.mxu0 0
        %2717 = vmatpush1.bf16.msra.mxu0 0
        %2718 = vmatprep.subr.bf16.mxu0 0
        %2719 = vmatpush1.bf16.msra.mxu0 0
        %2720 = vmatprep.subr.bf16.mxu0 0
        %2721 = vmatpush1.bf16.msra.mxu0 0
        %2722 = vmatprep.subr.bf16.mxu0 0
        %2723 = vmatpush1.bf16.msra.mxu0 0
        %2724 = vmatprep.subr.bf16.mxu0 0
        %2725 = vmatpush1.bf16.msra.mxu0 0
        %2726 = vmatprep.subr.bf16.mxu0 0
        %2727 = vmatpush1.bf16.msra.mxu0 0
        %2728 = vmatprep.subr.bf16.mxu0 0
        %2729 = vmatpush1.bf16.msra.mxu0 0
        %2730 = vmatprep.subr.bf16.mxu0 0
        %2731 = vmatpush1.bf16.msra.mxu0 0
        %2732 = vmatprep.subr.bf16.mxu0 0
        %2733 = vmatpush1.bf16.msra.mxu0 0
        %2734 = vmatprep.subr.bf16.mxu0 0
        %2735 = vmatpush1.bf16.msra.mxu0 0
        %2736 = vmatprep.subr.bf16.mxu0 0
        %2737 = vmatpush1.bf16.msra.mxu0 0
        %2738 = vmatprep.mubr.bf16.mxu0 0
        %2739 = vmatmul.mubr.bf16.gmra.mrb[0].mxu0 %v2701
        %v2740 = vpop.f32.mrb[0].mxu0
        %v2741 = vadd.f32 0.0, %v2740
        %v2742 = vpop.f32.mrb[0].mxu0
        %v2743 = vpop.f32.mrb[0].mxu0
        %v2744 = vpop.f32.mrb[0].mxu0
        %2745 = vdwg.mxu0
        %v2747 = vsel %vm2456, %v2549, 0
        %v2750 = vsel %vm2564, %v2557, 0
        %2752 = vmatprep.subr.bf16.mxu0 0
        %2753 = vmatpush1.bf16.msra.mxu0 %v2750
        %2754 = vmatprep.subr.bf16.mxu0 0
        %2755 = vmatpush1.bf16.msra.mxu0 0
        %2756 = vmatprep.subr.bf16.mxu0 0
        %2757 = vmatpush1.bf16.msra.mxu0 0
        %2758 = vmatprep.subr.bf16.mxu0 0
        %2759 = vmatpush1.bf16.msra.mxu0 0
        %2760 = vmatprep.subr.bf16.mxu0 0
        %2761 = vmatpush1.bf16.msra.mxu0 0
        %2762 = vmatprep.subr.bf16.mxu0 0
        %2763 = vmatpush1.bf16.msra.mxu0 0
        %2764 = vmatprep.subr.bf16.mxu0 0
        %2765 = vmatpush1.bf16.msra.mxu0 0
        %2766 = vmatprep.subr.bf16.mxu0 0
        %2767 = vmatpush1.bf16.msra.mxu0 0
        %2768 = vmatprep.subr.bf16.mxu0 0
        %2769 = vmatpush1.bf16.msra.mxu0 0
        %2770 = vmatprep.subr.bf16.mxu0 0
        %2771 = vmatpush1.bf16.msra.mxu0 0
        %2772 = vmatprep.subr.bf16.mxu0 0
        %2773 = vmatpush1.bf16.msra.mxu0 0
        %2774 = vmatprep.subr.bf16.mxu0 0
        %2775 = vmatpush1.bf16.msra.mxu0 0
        %2776 = vmatprep.subr.bf16.mxu0 0
        %2777 = vmatpush1.bf16.msra.mxu0 0
        %2778 = vmatprep.subr.bf16.mxu0 0
        %2779 = vmatpush1.bf16.msra.mxu0 0
        %2780 = vmatprep.subr.bf16.mxu0 0
        %2781 = vmatpush1.bf16.msra.mxu0 0
        %2782 = vmatprep.subr.bf16.mxu0 0
        %2783 = vmatpush1.bf16.msra.mxu0 0
        %2784 = vmatprep.mubr.bf16.mxu0 0
        %2785 = vmatmul.mubr.bf16.gmra.mrb[0].mxu0 %v2747
        %v2786 = vpop.f32.mrb[0].mxu0
        %v2787 = vadd.f32 0.0, %v2786
        %v2788 = vpop.f32.mrb[0].mxu0
        %v2789 = vpop.f32.mrb[0].mxu0
        %v2790 = vpop.f32.mrb[0].mxu0
        %2791 = vdwg.mxu0
        %v2793 = vsel %vm2456, %v2550, 0
        %v2796 = vsel %vm2564, %v2558, 0
        %2798 = vmatprep.subr.bf16.mxu0 0
        %2799 = vmatpush1.bf16.msra.mxu0 %v2796
        %2800 = vmatprep.subr.bf16.mxu0 0
        %2801 = vmatpush1.bf16.msra.mxu0 0
        %2802 = vmatprep.subr.bf16.mxu0 0
        %2803 = vmatpush1.bf16.msra.mxu0 0
        %2804 = vmatprep.subr.bf16.mxu0 0
        %2805 = vmatpush1.bf16.msra.mxu0 0
        %2806 = vmatprep.subr.bf16.mxu0 0
        %2807 = vmatpush1.bf16.msra.mxu0 0
        %2808 = vmatprep.subr.bf16.mxu0 0
        %2809 = vmatpush1.bf16.msra.mxu0 0
        %2810 = vmatprep.subr.bf16.mxu0 0
        %2811 = vmatpush1.bf16.msra.mxu0 0
        %2812 = vmatprep.subr.bf16.mxu0 0
        %2813 = vmatpush1.bf16.msra.mxu0 0
        %2814 = vmatprep.subr.bf16.mxu0 0
        %2815 = vmatpush1.bf16.msra.mxu0 0
        %2816 = vmatprep.subr.bf16.mxu0 0
        %2817 = vmatpush1.bf16.msra.mxu0 0
        %2818 = vmatprep.subr.bf16.mxu0 0
        %2819 = vmatpush1.bf16.msra.mxu0 0
        %2820 = vmatprep.subr.bf16.mxu0 0
        %2821 = vmatpush1.bf16.msra.mxu0 0
        %2822 = vmatprep.subr.bf16.mxu0 0
        %2823 = vmatpush1.bf16.msra.mxu0 0
        %2824 = vmatprep.subr.bf16.mxu0 0
        %2825 = vmatpush1.bf16.msra.mxu0 0
        %2826 = vmatprep.subr.bf16.mxu0 0
        %2827 = vmatpush1.bf16.msra.mxu0 0
        %2828 = vmatprep.subr.bf16.mxu0 0
        %2829 = vmatpush1.bf16.msra.mxu0 0
        %2830 = vmatprep.mubr.bf16.mxu0 0
        %2831 = vmatmul.mubr.bf16.gmra.mrb[0].mxu0 %v2793
        %v2832 = vpop.f32.mrb[0].mxu0
        %v2833 = vadd.f32 0.0, %v2832
        %v2834 = vpop.f32.mrb[0].mxu0
        %v2835 = vpop.f32.mrb[0].mxu0
        %v2836 = vpop.f32.mrb[0].mxu0
        %2837 = vdwg.mxu0
        %v2839 = vsel %vm2456, %v2551, 0
        %v2842 = vsel %vm2564, %v2559, 0
        %2844 = vmatprep.subr.bf16.mxu0 0
        %2845 = vmatpush1.bf16.msra.mxu0 %v2842
        %2846 = vmatprep.subr.bf16.mxu0 0
        %2847 = vmatpush1.bf16.msra.mxu0 0
        %2848 = vmatprep.subr.bf16.mxu0 0
        %2849 = vmatpush1.bf16.msra.mxu0 0
        %2850 = vmatprep.subr.bf16.mxu0 0
        %2851 = vmatpush1.bf16.msra.mxu0 0
        %2852 = vmatprep.subr.bf16.mxu0 0
        %2853 = vmatpush1.bf16.msra.mxu0 0
        %2854 = vmatprep.subr.bf16.mxu0 0
        %2855 = vmatpush1.bf16.msra.mxu0 0
        %2856 = vmatprep.subr.bf16.mxu0 0
        %2857 = vmatpush1.bf16.msra.mxu0 0
        %2858 = vmatprep.subr.bf16.mxu0 0
        %2859 = vmatpush1.bf16.msra.mxu0 0
        %2860 = vmatprep.subr.bf16.mxu0 0
        %2861 = vmatpush1.bf16.msra.mxu0 0
        %2862 = vmatprep.subr.bf16.mxu0 0
        %2863 = vmatpush1.bf16.msra.mxu0 0
        %2864 = vmatprep.subr.bf16.mxu0 0
        %2865 = vmatpush1.bf16.msra.mxu0 0
        %2866 = vmatprep.subr.bf16.mxu0 0
        %2867 = vmatpush1.bf16.msra.mxu0 0
        %2868 = vmatprep.subr.bf16.mxu0 0
        %2869 = vmatpush1.bf16.msra.mxu0 0
        %2870 = vmatprep.subr.bf16.mxu0 0
        %2871 = vmatpush1.bf16.msra.mxu0 0
        %2872 = vmatprep.subr.bf16.mxu0 0
        %2873 = vmatpush1.bf16.msra.mxu0 0
        %2874 = vmatprep.subr.bf16.mxu0 0
        %2875 = vmatpush1.bf16.msra.mxu0 0
        %2876 = vmatprep.mubr.bf16.mxu0 0
        %2877 = vmatmul.mubr.bf16.gmra.mrb[0].mxu0 %v2839
        %v2878 = vpop.f32.mrb[0].mxu0
        %v2879 = vadd.f32 0.0, %v2878
        %v2880 = vpop.f32.mrb[0].mxu0
        %v2881 = vpop.f32.mrb[0].mxu0
        %v2882 = vpop.f32.mrb[0].mxu0
        %2883 = vdwg.mxu0
        %v2885 = vsel %vm2456, %v2552, 0
        %v2888 = vsel %vm2564, %v2560, 0
        %2890 = vmatprep.subr.bf16.mxu0 0
        %2891 = vmatpush1.bf16.msra.mxu0 %v2888
        %2892 = vmatprep.subr.bf16.mxu0 0
        %2893 = vmatpush1.bf16.msra.mxu0 0
        %2894 = vmatprep.subr.bf16.mxu0 0
        %2895 = vmatpush1.bf16.msra.mxu0 0
        %2896 = vmatprep.subr.bf16.mxu0 0
        %2897 = vmatpush1.bf16.msra.mxu0 0
        %2898 = vmatprep.subr.bf16.mxu0 0
        %2899 = vmatpush1.bf16.msra.mxu0 0
        %2900 = vmatprep.subr.bf16.mxu0 0
        %2901 = vmatpush1.bf16.msra.mxu0 0
        %2902 = vmatprep.subr.bf16.mxu0 0
        %2903 = vmatpush1.bf16.msra.mxu0 0
        %2904 = vmatprep.subr.bf16.mxu0 0
        %2905 = vmatpush1.bf16.msra.mxu0 0
        %2906 = vmatprep.subr.bf16.mxu0 0
        %2907 = vmatpush1.bf16.msra.mxu0 0
        %2908 = vmatprep.subr.bf16.mxu0 0
        %2909 = vmatpush1.bf16.msra.mxu0 0
        %2910 = vmatprep.subr.bf16.mxu0 0
        %2911 = vmatpush1.bf16.msra.mxu0 0
        %2912 = vmatprep.subr.bf16.mxu0 0
        %2913 = vmatpush1.bf16.msra.mxu0 0
        %2914 = vmatprep.subr.bf16.mxu0 0
        %2915 = vmatpush1.bf16.msra.mxu0 0
        %2916 = vmatprep.subr.bf16.mxu0 0
        %2917 = vmatpush1.bf16.msra.mxu0 0
        %2918 = vmatprep.subr.bf16.mxu0 0
        %2919 = vmatpush1.bf16.msra.mxu0 0
        %2920 = vmatprep.subr.bf16.mxu0 0
        %2921 = vmatpush1.bf16.msra.mxu0 0
        %2922 = vmatprep.mubr.bf16.mxu0 0
        %2923 = vmatmul.mubr.bf16.gmra.mrb[0].mxu0 %v2885
        %v2924 = vpop.f32.mrb[0].mxu0
        %v2925 = vadd.f32 0.0, %v2924
        %v2926 = vpop.f32.mrb[0].mxu0
        %v2927 = vpop.f32.mrb[0].mxu0
        %v2928 = vpop.f32.mrb[0].mxu0
        %2929 = vdwg.mxu0
        %v2930 = vpack.c.bf16 %v2603, %v2603
        %v2931 = vpack.c.bf16 %v2649, %v2649
        %v2932 = vpack.c.bf16 %v2695, %v2695
        %v2933 = vpack.c.bf16 %v2741, %v2741
        %v2934 = vpack.c.bf16 %v2787, %v2787
        %v2935 = vpack.c.bf16 %v2833, %v2833
        %v2936 = vpack.c.bf16 %v2879, %v2879
        %v2937 = vpack.c.bf16 %v2925, %v2925
        %v2938 = vld [vmem:[%s7] sm:$0x3]
        %v2939 = vld [vmem:[%s7 + $0x2] sm:$0x3]
        %v2940 = vld [vmem:[%s7 + $0x4] sm:$0x3]
        %v2941 = vld [vmem:[%s7 + $0x6] sm:$0x3]
        %v2942 = vld [vmem:[%s7 + $0x8] sm:$0x3]
        %v2943 = vld [vmem:[%s7 + $0xa] sm:$0x3]
        %v2944 = vld [vmem:[%s7 + $0xc] sm:$0x3]
        %v2945 = vld [vmem:[%s7 + $0xe] sm:$0x3]
        %v2947 = vsel %vm2079, %v2930, 0
        %vm2949 = vcmask 1041408
        %v2951 = vsel %vm2949, %v2938, 0
        %2953 = vmatprep.subr.bf16.mxu0 0
        %2954 = vmatpush1.bf16.msra.mxu0 %v2951
        %2955 = vmatprep.subr.bf16.mxu0 0
        %2956 = vmatpush1.bf16.msra.mxu0 0
        %2957 = vmatprep.subr.bf16.mxu0 0
        %2958 = vmatpush1.bf16.msra.mxu0 0
        %2959 = vmatprep.subr.bf16.mxu0 0
        %2960 = vmatpush1.bf16.msra.mxu0 0
        %2961 = vmatprep.subr.bf16.mxu0 0
        %2962 = vmatpush1.bf16.msra.mxu0 0
        %2963 = vmatprep.subr.bf16.mxu0 0
        %2964 = vmatpush1.bf16.msra.mxu0 0
        %2965 = vmatprep.subr.bf16.mxu0 0
        %2966 = vmatpush1.bf16.msra.mxu0 0
        %2967 = vmatprep.subr.bf16.mxu0 0
        %2968 = vmatpush1.bf16.msra.mxu0 0
        %2969 = vmatprep.subr.bf16.mxu0 0
        %2970 = vmatpush1.bf16.msra.mxu0 0
        %2971 = vmatprep.subr.bf16.mxu0 0
        %2972 = vmatpush1.bf16.msra.mxu0 0
        %2973 = vmatprep.subr.bf16.mxu0 0
        %2974 = vmatpush1.bf16.msra.mxu0 0
        %2975 = vmatprep.subr.bf16.mxu0 0
        %2976 = vmatpush1.bf16.msra.mxu0 0
        %2977 = vmatprep.subr.bf16.mxu0 0
        %2978 = vmatpush1.bf16.msra.mxu0 0
        %2979 = vmatprep.subr.bf16.mxu0 0
        %2980 = vmatpush1.bf16.msra.mxu0 0
        %2981 = vmatprep.subr.bf16.mxu0 0
        %2982 = vmatpush1.bf16.msra.mxu0 0
        %2983 = vmatprep.subr.bf16.mxu0 0
        %2984 = vmatpush1.bf16.msra.mxu0 0
        %2985 = vmatprep.mubr.bf16.mxu0 0
        %2986 = vmatmul.mubr.bf16.gmra.mrb[0].mxu0 %v2947
        %v2987 = vpop.f32.mrb[0].mxu0
        %v2988 = vadd.f32 0.0, %v2987
        %v2989 = vpop.f32.mrb[0].mxu0
        %v2990 = vpop.f32.mrb[0].mxu0
        %v2991 = vpop.f32.mrb[0].mxu0
        %2992 = vdwg.mxu0
        %v2994 = vsel %vm2079, %v2931, 0
        %v2997 = vsel %vm2949, %v2939, 0
        %2999 = vmatprep.subr.bf16.mxu0 0
        %3000 = vmatpush1.bf16.msra.mxu0 %v2997
        %3001 = vmatprep.subr.bf16.mxu0 0
        %3002 = vmatpush1.bf16.msra.mxu0 0
        %3003 = vmatprep.subr.bf16.mxu0 0
        %3004 = vmatpush1.bf16.msra.mxu0 0
        %3005 = vmatprep.subr.bf16.mxu0 0
        %3006 = vmatpush1.bf16.msra.mxu0 0
        %3007 = vmatprep.subr.bf16.mxu0 0
        %3008 = vmatpush1.bf16.msra.mxu0 0
        %3009 = vmatprep.subr.bf16.mxu0 0
        %3010 = vmatpush1.bf16.msra.mxu0 0
        %3011 = vmatprep.subr.bf16.mxu0 0
        %3012 = vmatpush1.bf16.msra.mxu0 0
        %3013 = vmatprep.subr.bf16.mxu0 0
        %3014 = vmatpush1.bf16.msra.mxu0 0
        %3015 = vmatprep.subr.bf16.mxu0 0
        %3016 = vmatpush1.bf16.msra.mxu0 0
        %3017 = vmatprep.subr.bf16.mxu0 0
        %3018 = vmatpush1.bf16.msra.mxu0 0
        %3019 = vmatprep.subr.bf16.mxu0 0
        %3020 = vmatpush1.bf16.msra.mxu0 0
        %3021 = vmatprep.subr.bf16.mxu0 0
        %3022 = vmatpush1.bf16.msra.mxu0 0
        %3023 = vmatprep.subr.bf16.mxu0 0
        %3024 = vmatpush1.bf16.msra.mxu0 0
        %3025 = vmatprep.subr.bf16.mxu0 0
        %3026 = vmatpush1.bf16.msra.mxu0 0
        %3027 = vmatprep.subr.bf16.mxu0 0
        %3028 = vmatpush1.bf16.msra.mxu0 0
        %3029 = vmatprep.subr.bf16.mxu0 0
        %3030 = vmatpush1.bf16.msra.mxu0 0
        %3031 = vmatprep.mubr.bf16.mxu0 0
        %3032 = vmatmul.mubr.bf16.gmra.mrb[0].mxu0 %v2994
        %v3033 = vpop.f32.mrb[0].mxu0
        %v3034 = vadd.f32 0.0, %v3033
        %v3035 = vpop.f32.mrb[0].mxu0
        %v3036 = vpop.f32.mrb[0].mxu0
        %v3037 = vpop.f32.mrb[0].mxu0
        %3038 = vdwg.mxu0
        %v3040 = vsel %vm2079, %v2932, 0
        %v3043 = vsel %vm2949, %v2940, 0
        %3045 = vmatprep.subr.bf16.mxu0 0
        %3046 = vmatpush1.bf16.msra.mxu0 %v3043
        %3047 = vmatprep.subr.bf16.mxu0 0
        %3048 = vmatpush1.bf16.msra.mxu0 0
        %3049 = vmatprep.subr.bf16.mxu0 0
        %3050 = vmatpush1.bf16.msra.mxu0 0
        %3051 = vmatprep.subr.bf16.mxu0 0
        %3052 = vmatpush1.bf16.msra.mxu0 0
        %3053 = vmatprep.subr.bf16.mxu0 0
        %3054 = vmatpush1.bf16.msra.mxu0 0
        %3055 = vmatprep.subr.bf16.mxu0 0
        %3056 = vmatpush1.bf16.msra.mxu0 0
        %3057 = vmatprep.subr.bf16.mxu0 0
        %3058 = vmatpush1.bf16.msra.mxu0 0
        %3059 = vmatprep.subr.bf16.mxu0 0
        %3060 = vmatpush1.bf16.msra.mxu0 0
        %3061 = vmatprep.subr.bf16.mxu0 0
        %3062 = vmatpush1.bf16.msra.mxu0 0
        %3063 = vmatprep.subr.bf16.mxu0 0
        %3064 = vmatpush1.bf16.msra.mxu0 0
        %3065 = vmatprep.subr.bf16.mxu0 0
        %3066 = vmatpush1.bf16.msra.mxu0 0
        %3067 = vmatprep.subr.bf16.mxu0 0
        %3068 = vmatpush1.bf16.msra.mxu0 0
        %3069 = vmatprep.subr.bf16.mxu0 0
        %3070 = vmatpush1.bf16.msra.mxu0 0
        %3071 = vmatprep.subr.bf16.mxu0 0
        %3072 = vmatpush1.bf16.msra.mxu0 0
        %3073 = vmatprep.subr.bf16.mxu0 0
        %3074 = vmatpush1.bf16.msra.mxu0 0
        %3075 = vmatprep.subr.bf16.mxu0 0
        %3076 = vmatpush1.bf16.msra.mxu0 0
        %3077 = vmatprep.mubr.bf16.mxu0 0
        %3078 = vmatmul.mubr.bf16.gmra.mrb[0].mxu0 %v3040
        %v3079 = vpop.f32.mrb[0].mxu0
        %v3080 = vadd.f32 0.0, %v3079
        %v3081 = vpop.f32.mrb[0].mxu0
        %v3082 = vpop.f32.mrb[0].mxu0
        %v3083 = vpop.f32.mrb[0].mxu0
        %3084 = vdwg.mxu0
        %v3086 = vsel %vm2079, %v2933, 0
        %v3089 = vsel %vm2949, %v2941, 0
        %3091 = vmatprep.subr.bf16.mxu0 0
        %3092 = vmatpush1.bf16.msra.mxu0 %v3089
        %3093 = vmatprep.subr.bf16.mxu0 0
        %3094 = vmatpush1.bf16.msra.mxu0 0
        %3095 = vmatprep.subr.bf16.mxu0 0
        %3096 = vmatpush1.bf16.msra.mxu0 0
        %3097 = vmatprep.subr.bf16.mxu0 0
        %3098 = vmatpush1.bf16.msra.mxu0 0
        %3099 = vmatprep.subr.bf16.mxu0 0
        %3100 = vmatpush1.bf16.msra.mxu0 0
        %3101 = vmatprep.subr.bf16.mxu0 0
        %3102 = vmatpush1.bf16.msra.mxu0 0
        %3103 = vmatprep.subr.bf16.mxu0 0
        %3104 = vmatpush1.bf16.msra.mxu0 0
        %3105 = vmatprep.subr.bf16.mxu0 0
        %3106 = vmatpush1.bf16.msra.mxu0 0
        %3107 = vmatprep.subr.bf16.mxu0 0
        %3108 = vmatpush1.bf16.msra.mxu0 0
        %3109 = vmatprep.subr.bf16.mxu0 0
        %3110 = vmatpush1.bf16.msra.mxu0 0
        %3111 = vmatprep.subr.bf16.mxu0 0
        %3112 = vmatpush1.bf16.msra.mxu0 0
        %3113 = vmatprep.subr.bf16.mxu0 0
        %3114 = vmatpush1.bf16.msra.mxu0 0
        %3115 = vmatprep.subr.bf16.mxu0 0
        %3116 = vmatpush1.bf16.msra.mxu0 0
        %3117 = vmatprep.subr.bf16.mxu0 0
        %3118 = vmatpush1.bf16.msra.mxu0 0
        %3119 = vmatprep.subr.bf16.mxu0 0
        %3120 = vmatpush1.bf16.msra.mxu0 0
        %3121 = vmatprep.subr.bf16.mxu0 0
        %3122 = vmatpush1.bf16.msra.mxu0 0
        %3123 = vmatprep.mubr.bf16.mxu0 0
        %3124 = vmatmul.mubr.bf16.gmra.mrb[0].mxu0 %v3086
        %v3125 = vpop.f32.mrb[0].mxu0
        %v3126 = vadd.f32 0.0, %v3125
        %v3127 = vpop.f32.mrb[0].mxu0
        %v3128 = vpop.f32.mrb[0].mxu0
        %v3129 = vpop.f32.mrb[0].mxu0
        %3130 = vdwg.mxu0
        %v3132 = vsel %vm2079, %v2934, 0
        %v3135 = vsel %vm2949, %v2942, 0
        %3137 = vmatprep.subr.bf16.mxu0 0
        %3138 = vmatpush1.bf16.msra.mxu0 %v3135
        %3139 = vmatprep.subr.bf16.mxu0 0
        %3140 = vmatpush1.bf16.msra.mxu0 0
        %3141 = vmatprep.subr.bf16.mxu0 0
        %3142 = vmatpush1.bf16.msra.mxu0 0
        %3143 = vmatprep.subr.bf16.mxu0 0
        %3144 = vmatpush1.bf16.msra.mxu0 0
        %3145 = vmatprep.subr.bf16.mxu0 0
        %3146 = vmatpush1.bf16.msra.mxu0 0
        %3147 = vmatprep.subr.bf16.mxu0 0
        %3148 = vmatpush1.bf16.msra.mxu0 0
        %3149 = vmatprep.subr.bf16.mxu0 0
        %3150 = vmatpush1.bf16.msra.mxu0 0
        %3151 = vmatprep.subr.bf16.mxu0 0
        %3152 = vmatpush1.bf16.msra.mxu0 0
        %3153 = vmatprep.subr.bf16.mxu0 0
        %3154 = vmatpush1.bf16.msra.mxu0 0
        %3155 = vmatprep.subr.bf16.mxu0 0
        %3156 = vmatpush1.bf16.msra.mxu0 0
        %3157 = vmatprep.subr.bf16.mxu0 0
        %3158 = vmatpush1.bf16.msra.mxu0 0
        %3159 = vmatprep.subr.bf16.mxu0 0
        %3160 = vmatpush1.bf16.msra.mxu0 0
        %3161 = vmatprep.subr.bf16.mxu0 0
        %3162 = vmatpush1.bf16.msra.mxu0 0
        %3163 = vmatprep.subr.bf16.mxu0 0
        %3164 = vmatpush1.bf16.msra.mxu0 0
        %3165 = vmatprep.subr.bf16.mxu0 0
        %3166 = vmatpush1.bf16.msra.mxu0 0
        %3167 = vmatprep.subr.bf16.mxu0 0
        %3168 = vmatpush1.bf16.msra.mxu0 0
        %3169 = vmatprep.mubr.bf16.mxu0 0
        %3170 = vmatmul.mubr.bf16.gmra.mrb[0].mxu0 %v3132
        %v3171 = vpop.f32.mrb[0].mxu0
        %v3172 = vadd.f32 0.0, %v3171
        %v3173 = vpop.f32.mrb[0].mxu0
        %v3174 = vpop.f32.mrb[0].mxu0
        %v3175 = vpop.f32.mrb[0].mxu0
        %3176 = vdwg.mxu0
        %v3178 = vsel %vm2079, %v2935, 0
        %v3181 = vsel %vm2949, %v2943, 0
        %3183 = vmatprep.subr.bf16.mxu0 0
        %3184 = vmatpush1.bf16.msra.mxu0 %v3181
        %3185 = vmatprep.subr.bf16.mxu0 0
        %3186 = vmatpush1.bf16.msra.mxu0 0
        %3187 = vmatprep.subr.bf16.mxu0 0
        %3188 = vmatpush1.bf16.msra.mxu0 0
        %3189 = vmatprep.subr.bf16.mxu0 0
        %3190 = vmatpush1.bf16.msra.mxu0 0
        %3191 = vmatprep.subr.bf16.mxu0 0
        %3192 = vmatpush1.bf16.msra.mxu0 0
        %3193 = vmatprep.subr.bf16.mxu0 0
        %3194 = vmatpush1.bf16.msra.mxu0 0
        %3195 = vmatprep.subr.bf16.mxu0 0
        %3196 = vmatpush1.bf16.msra.mxu0 0
        %3197 = vmatprep.subr.bf16.mxu0 0
        %3198 = vmatpush1.bf16.msra.mxu0 0
        %3199 = vmatprep.subr.bf16.mxu0 0
        %3200 = vmatpush1.bf16.msra.mxu0 0
        %3201 = vmatprep.subr.bf16.mxu0 0
        %3202 = vmatpush1.bf16.msra.mxu0 0
        %3203 = vmatprep.subr.bf16.mxu0 0
        %3204 = vmatpush1.bf16.msra.mxu0 0
        %3205 = vmatprep.subr.bf16.mxu0 0
        %3206 = vmatpush1.bf16.msra.mxu0 0
        %3207 = vmatprep.subr.bf16.mxu0 0
        %3208 = vmatpush1.bf16.msra.mxu0 0
        %3209 = vmatprep.subr.bf16.mxu0 0
        %3210 = vmatpush1.bf16.msra.mxu0 0
        %3211 = vmatprep.subr.bf16.mxu0 0
        %3212 = vmatpush1.bf16.msra.mxu0 0
        %3213 = vmatprep.subr.bf16.mxu0 0
        %3214 = vmatpush1.bf16.msra.mxu0 0
        %3215 = vmatprep.mubr.bf16.mxu0 0
        %3216 = vmatmul.mubr.bf16.gmra.mrb[0].mxu0 %v3178
        %v3217 = vpop.f32.mrb[0].mxu0
        %v3218 = vadd.f32 0.0, %v3217
        %v3219 = vpop.f32.mrb[0].mxu0
        %v3220 = vpop.f32.mrb[0].mxu0
        %v3221 = vpop.f32.mrb[0].mxu0
        %3222 = vdwg.mxu0
        %v3224 = vsel %vm2079, %v2936, 0
        %v3227 = vsel %vm2949, %v2944, 0
        %3229 = vmatprep.subr.bf16.mxu0 0
        %3230 = vmatpush1.bf16.msra.mxu0 %v3227
        %3231 = vmatprep.subr.bf16.mxu0 0
        %3232 = vmatpush1.bf16.msra.mxu0 0
        %3233 = vmatprep.subr.bf16.mxu0 0
        %3234 = vmatpush1.bf16.msra.mxu0 0
        %3235 = vmatprep.subr.bf16.mxu0 0
        %3236 = vmatpush1.bf16.msra.mxu0 0
        %3237 = vmatprep.subr.bf16.mxu0 0
        %3238 = vmatpush1.bf16.msra.mxu0 0
        %3239 = vmatprep.subr.bf16.mxu0 0
        %3240 = vmatpush1.bf16.msra.mxu0 0
        %3241 = vmatprep.subr.bf16.mxu0 0
        %3242 = vmatpush1.bf16.msra.mxu0 0
        %3243 = vmatprep.subr.bf16.mxu0 0
        %3244 = vmatpush1.bf16.msra.mxu0 0
        %3245 = vmatprep.subr.bf16.mxu0 0
        %3246 = vmatpush1.bf16.msra.mxu0 0
        %3247 = vmatprep.subr.bf16.mxu0 0
        %3248 = vmatpush1.bf16.msra.mxu0 0
        %3249 = vmatprep.subr.bf16.mxu0 0
        %3250 = vmatpush1.bf16.msra.mxu0 0
        %3251 = vmatprep.subr.bf16.mxu0 0
        %3252 = vmatpush1.bf16.msra.mxu0 0
        %3253 = vmatprep.subr.bf16.mxu0 0
        %3254 = vmatpush1.bf16.msra.mxu0 0
        %3255 = vmatprep.subr.bf16.mxu0 0
        %3256 = vmatpush1.bf16.msra.mxu0 0
        %3257 = vmatprep.subr.bf16.mxu0 0
        %3258 = vmatpush1.bf16.msra.mxu0 0
        %3259 = vmatprep.subr.bf16.mxu0 0
        %3260 = vmatpush1.bf16.msra.mxu0 0
        %3261 = vmatprep.mubr.bf16.mxu0 0
        %3262 = vmatmul.mubr.bf16.gmra.mrb[0].mxu0 %v3224
        %v3263 = vpop.f32.mrb[0].mxu0
        %v3264 = vadd.f32 0.0, %v3263
        %v3265 = vpop.f32.mrb[0].mxu0
        %v3266 = vpop.f32.mrb[0].mxu0
        %v3267 = vpop.f32.mrb[0].mxu0
        %3268 = vdwg.mxu0
        %v3270 = vsel %vm2079, %v2937, 0
        %v3273 = vsel %vm2949, %v2945, 0
        %3275 = vmatprep.subr.bf16.mxu0 0
        %3276 = vmatpush1.bf16.msra.mxu0 %v3273
        %3277 = vmatprep.subr.bf16.mxu0 0
        %3278 = vmatpush1.bf16.msra.mxu0 0
        %3279 = vmatprep.subr.bf16.mxu0 0
        %3280 = vmatpush1.bf16.msra.mxu0 0
        %3281 = vmatprep.subr.bf16.mxu0 0
        %3282 = vmatpush1.bf16.msra.mxu0 0
        %3283 = vmatprep.subr.bf16.mxu0 0
        %3284 = vmatpush1.bf16.msra.mxu0 0
        %3285 = vmatprep.subr.bf16.mxu0 0
        %3286 = vmatpush1.bf16.msra.mxu0 0
        %3287 = vmatprep.subr.bf16.mxu0 0
        %3288 = vmatpush1.bf16.msra.mxu0 0
        %3289 = vmatprep.subr.bf16.mxu0 0
        %3290 = vmatpush1.bf16.msra.mxu0 0
        %3291 = vmatprep.subr.bf16.mxu0 0
        %3292 = vmatpush1.bf16.msra.mxu0 0
        %3293 = vmatprep.subr.bf16.mxu0 0
        %3294 = vmatpush1.bf16.msra.mxu0 0
        %3295 = vmatprep.subr.bf16.mxu0 0
        %3296 = vmatpush1.bf16.msra.mxu0 0
        %3297 = vmatprep.subr.bf16.mxu0 0
        %3298 = vmatpush1.bf16.msra.mxu0 0
        %3299 = vmatprep.subr.bf16.mxu0 0
        %3300 = vmatpush1.bf16.msra.mxu0 0
        %3301 = vmatprep.subr.bf16.mxu0 0
        %3302 = vmatpush1.bf16.msra.mxu0 0
        %3303 = vmatprep.subr.bf16.mxu0 0
        %3304 = vmatpush1.bf16.msra.mxu0 0
        %3305 = vmatprep.subr.bf16.mxu0 0
        %3306 = vmatpush1.bf16.msra.mxu0 0
        %3307 = vmatprep.mubr.bf16.mxu0 0
        %3308 = vmatmul.mubr.bf16.gmra.mrb[0].mxu0 %v3270
        %v3309 = vpop.f32.mrb[0].mxu0
        %v3310 = vadd.f32 0.0, %v3309
        %v3311 = vpop.f32.mrb[0].mxu0
        %v3312 = vpop.f32.mrb[0].mxu0
        %v3313 = vpop.f32.mrb[0].mxu0
        %3314 = vdwg.mxu0
        %v3315 = vsel %vm647, %v2988, 0.0
        %v3316 = vsel %vm647, %v3034, 0.0
        %v3317 = vadd.f32 %v3315, %v3316
        %v3318 = vsel %vm647, %v3080, 0.0
        %v3319 = vadd.f32 %v3317, %v3318
        %v3320 = vsel %vm647, %v3126, 0.0
        %v3321 = vadd.f32 %v3319, %v3320
        %v3322 = vsel %vm647, %v3172, 0.0
        %v3323 = vadd.f32 %v3321, %v3322
        %v3324 = vsel %vm647, %v3218, 0.0
        %v3325 = vadd.f32 %v3323, %v3324
        %v3326 = vsel %vm647, %v3264, 0.0
        %v3327 = vadd.f32 %v3325, %v3326
        %v3328 = vsel %vm647, %v3310, 0.0
        %v3329 = vadd.f32 %v3327, %v3328
        %v3330 = vld [vmem:[%s8] sm:$0x1]
        %v3332 = vlaneseq
        %v3333 = vshrl.u32 %v3332, 7
        %v3334 = vsub.s32 0, %v3333
        %v3335 = vrot.slane %v3330, %v3334
        %v3337 = vadd.f32 %v3329, %v3335
        %v3338 = vadd.f32 %v545, %v3337
        %v3339 = vld [vmem:[%s9] sm:$0x1]
        %v3340 = vld [vmem:[%s10] sm:$0x1]
        %v3341 = vsel %vm647, %v3338, 0.0
        %3342 = vadd.xlane.f32.xlu0 %v3341
        %v3343 = vpop.xlane.xlu0 %3342
        %v3344 = vrcp.pop 32.0
        %v3345 = vmul.f32 %v3343, %v3344
        %v3346 = vsub.f32 %v3338, %v3345
        %v3347 = vmul.f32 %v3346, %v3346
        %v3348 = vsel %vm647, %v3347, 0.0
        %3349 = vadd.xlane.f32.xlu0 %v3348
        %v3350 = vpop.xlane.xlu0 %3349
        %v3351 = vmul.f32 %v3350, %v3344
        %v3352 = vadd.f32 %v3351, 1e-05
        %v3353 = vrsqrt.pop %v3352
        %v3354 = vmul.f32 %v3346, %v3353
        %v3356 = vlaneseq
        %v3357 = vshrl.u32 %v3356, 7
        %v3358 = vsub.s32 0, %v3357
        %v3359 = vrot.slane %v3339, %v3358
        %v3361 = vmul.f32 %v3354, %v3359
        %v3363 = vlaneseq
        %v3364 = vshrl.u32 %v3363, 7
        %v3365 = vsub.s32 0, %v3364
        %v3366 = vrot.slane %v3340, %v3365
        %v3368 = vadd.f32 %v3361, %v3366
        %v3369 = vpack.c.bf16 %v3368, %v3368
        %v3370 = vld [vmem:[%s11] sm:$0xf]
        %v3371 = vld [vmem:[%s11 + $0x4] sm:$0xf]
        %v3372 = vld [vmem:[%s11 + $0x8] sm:$0xf]
        %v3373 = vld [vmem:[%s11 + $0xc] sm:$0xf]
        %v3374 = vld [vmem:[%s12] sm:$0x1]
        %v3376 = vlaneseq
        %v3377 = vshrl.u32 %v3376, 7
        %v3378 = vsub.s32 0, %v3377
        %v3379 = vrot.slane %v3374, %v3378
        %v3385 = vunpack.c.l.b16 %v3370
        %v3386 = vunpack.c.l.b16 %v3371
        %v3387 = vunpack.c.l.b16 %v3372
        %v3388 = vunpack.c.l.b16 %v3373
        %v3389 = vpack.c.b16 %v3386, %v3385
        %v3390 = vpack.c.b16 %v3388, %v3387
        %v3394 = vsel %vm647, %v3369, 0
        %3396 = vmatprep.subr.bf16.mxu0 0
        %3397 = vmatpush1.bf16.msra.mxu0 %v3389
        %3398 = vmatprep.subr.bf16.mxu0 0
        %3399 = vmatpush1.bf16.msra.mxu0 %v3390
        %3400 = vmatprep.subr.bf16.mxu0 0
        %3401 = vmatpush1.bf16.msra.mxu0 0
        %3402 = vmatprep.subr.bf16.mxu0 0
        %3403 = vmatpush1.bf16.msra.mxu0 0
        %3404 = vmatprep.subr.bf16.mxu0 0
        %3405 = vmatpush1.bf16.msra.mxu0 0
        %3406 = vmatprep.subr.bf16.mxu0 0
        %3407 = vmatpush1.bf16.msra.mxu0 0
        %3408 = vmatprep.subr.bf16.mxu0 0
        %3409 = vmatpush1.bf16.msra.mxu0 0
        %3410 = vmatprep.subr.bf16.mxu0 0
        %3411 = vmatpush1.bf16.msra.mxu0 0
        %3412 = vmatprep.subr.bf16.mxu0 0
        %3413 = vmatpush1.bf16.msra.mxu0 0
        %3414 = vmatprep.subr.bf16.mxu0 0
        %3415 = vmatpush1.bf16.msra.mxu0 0
        %3416 = vmatprep.subr.bf16.mxu0 0
        %3417 = vmatpush1.bf16.msra.mxu0 0
        %3418 = vmatprep.subr.bf16.mxu0 0
        %3419 = vmatpush1.bf16.msra.mxu0 0
        %3420 = vmatprep.subr.bf16.mxu0 0
        %3421 = vmatpush1.bf16.msra.mxu0 0
        %3422 = vmatprep.subr.bf16.mxu0 0
        %3423 = vmatpush1.bf16.msra.mxu0 0
        %3424 = vmatprep.subr.bf16.mxu0 0
        %3425 = vmatpush1.bf16.msra.mxu0 0
        %3426 = vmatprep.subr.bf16.mxu0 0
        %3427 = vmatpush1.bf16.msra.mxu0 0
        %3428 = vmatprep.mubr.bf16.mxu0 0
        %3429 = vmatmul.mubr.bf16.gmra.mrb[0].mxu0 %v3394
        %v3430 = vpop.f32.mrb[0].mxu0
        %v3431 = vadd.f32 %v3379, %v3430
        %v3432 = vpop.f32.mrb[0].mxu0
        %v3433 = vpop.f32.mrb[0].mxu0
        %v3434 = vpop.f32.mrb[0].mxu0
        %3435 = vdwg.mxu0
        %v3436 = vmax.f32 %v3431, 0.0
        %v3437 = vpack.c.bf16 %v3436, %v3436
        %v3438 = vld [vmem:[%s13] sm:$0xf]
        %v3439 = vld [vmem:[%s13 + $0x4] sm:$0xf]
        %v3440 = vld [vmem:[%s13 + $0x8] sm:$0xf]
        %v3441 = vld [vmem:[%s13 + $0xc] sm:$0xf]
        %v3442 = vld [vmem:[%s13 + $0x10] sm:$0xf]
        %v3443 = vld [vmem:[%s13 + $0x14] sm:$0xf]
        %v3444 = vld [vmem:[%s13 + $0x18] sm:$0xf]
        %v3445 = vld [vmem:[%s13 + $0x1c] sm:$0xf]
        %v3446 = vld [vmem:[%s14] sm:$0x1]
        %v3448 = vlaneseq
        %v3449 = vshrl.u32 %v3448, 7
        %v3450 = vsub.s32 0, %v3449
        %v3451 = vrot.slane %v3446, %v3450
        %v3461 = vunpack.c.l.b16 %v3438
        %v3462 = vunpack.c.l.b16 %v3439
        %v3463 = vunpack.c.l.b16 %v3440
        %v3464 = vunpack.c.l.b16 %v3441
        %v3465 = vunpack.c.l.b16 %v3442
        %v3466 = vunpack.c.l.b16 %v3443
        %v3467 = vunpack.c.l.b16 %v3444
        %v3468 = vunpack.c.l.b16 %v3445
        %v3469 = vpack.c.b16 %v3462, %v3461
        %v3470 = vpack.c.b16 %v3464, %v3463
        %v3471 = vpack.c.b16 %v3466, %v3465
        %v3472 = vpack.c.b16 %v3468, %v3467
        %vm3477 = vcmask 523264
        %v3479 = vsel %vm3477, %v3437, 0
        %3481 = vmatprep.subr.bf16.mxu0 0
        %3482 = vmatpush1.bf16.msra.mxu0 %v3469
        %3483 = vmatprep.subr.bf16.mxu0 0
        %3484 = vmatpush1.bf16.msra.mxu0 %v3470
        %3485 = vmatprep.subr.bf16.mxu0 0
        %3486 = vmatpush1.bf16.msra.mxu0 %v3471
        %3487 = vmatprep.subr.bf16.mxu0 0
        %3488 = vmatpush1.bf16.msra.mxu0 %v3472
        %3489 = vmatprep.subr.bf16.mxu0 0
        %3490 = vmatpush1.bf16.msra.mxu0 0
        %3491 = vmatprep.subr.bf16.mxu0 0
        %3492 = vmatpush1.bf16.msra.mxu0 0
        %3493 = vmatprep.subr.bf16.mxu0 0
        %3494 = vmatpush1.bf16.msra.mxu0 0
        %3495 = vmatprep.subr.bf16.mxu0 0
        %3496 = vmatpush1.bf16.msra.mxu0 0
        %3497 = vmatprep.subr.bf16.mxu0 0
        %3498 = vmatpush1.bf16.msra.mxu0 0
        %3499 = vmatprep.subr.bf16.mxu0 0
        %3500 = vmatpush1.bf16.msra.mxu0 0
        %3501 = vmatprep.subr.bf16.mxu0 0
        %3502 = vmatpush1.bf16.msra.mxu0 0
        %3503 = vmatprep.subr.bf16.mxu0 0
        %3504 = vmatpush1.bf16.msra.mxu0 0
        %3505 = vmatprep.subr.bf16.mxu0 0
        %3506 = vmatpush1.bf16.msra.mxu0 0
        %3507 = vmatprep.subr.bf16.mxu0 0
        %3508 = vmatpush1.bf16.msra.mxu0 0
        %3509 = vmatprep.subr.bf16.mxu0 0
        %3510 = vmatpush1.bf16.msra.mxu0 0
        %3511 = vmatprep.subr.bf16.mxu0 0
        %3512 = vmatpush1.bf16.msra.mxu0 0
        %3513 = vmatprep.mubr.bf16.mxu0 0
        %3514 = vmatmul.mubr.bf16.gmra.mrb[0].mxu0 %v3479
        %v3515 = vpop.f32.mrb[0].mxu0
        %v3516 = vadd.f32 %v3451, %v3515
        %v3517 = vpop.f32.mrb[0].mxu0
        %v3518 = vpop.f32.mrb[0].mxu0
        %v3519 = vpop.f32.mrb[0].mxu0
        %3520 = vdwg.mxu0
        %v3521 = vadd.f32 %v3368, %v3516
        %v3522 = vld [vmem:[%s15] sm:$0x1]
        %v3523 = vld [vmem:[%s16] sm:$0x1]
        %v3524 = vsel %vm647, %v3521, 0.0
        %3525 = vadd.xlane.f32.xlu0 %v3524
        %v3526 = vpop.xlane.xlu0 %3525
        %v3527 = vmul.f32 %v3526, %v3344
        %v3528 = vsub.f32 %v3521, %v3527
        %v3529 = vmul.f32 %v3528, %v3528
        %v3530 = vsel %vm647, %v3529, 0.0
        %3531 = vadd.xlane.f32.xlu0 %v3530
        %v3532 = vpop.xlane.xlu0 %3531
        %v3533 = vmul.f32 %v3532, %v3344
        %v3534 = vadd.f32 %v3533, 1e-05
        %v3535 = vrsqrt.pop %v3534
        %v3536 = vmul.f32 %v3528, %v3535
        %v3538 = vlaneseq
        %v3539 = vshrl.u32 %v3538, 7
        %v3540 = vsub.s32 0, %v3539
        %v3541 = vrot.slane %v3522, %v3540
        %v3543 = vmul.f32 %v3536, %v3541
        %v3545 = vlaneseq
        %v3546 = vshrl.u32 %v3545, 7
        %v3547 = vsub.s32 0, %v3546
        %v3548 = vrot.slane %v3523, %v3547
        %v3550 = vadd.f32 %v3543, %v3548
        %3551 = vst.msk [vmem:[%s539] sm:$0xff] %vm647, %v3550
        %s3552 = sand.u32 %s401, 1
        %s3553 = scalar_lea.sflag [#allocation3], %s3552
        %s3554 = sand.u32 %s401, 1
        %s3555 = smul.addr %s3554, 8
        %s3556 = scalar_lea.vmem [#allocation2], %s3555
        // Predicated region
        $region89: #{tpu_custom_call.1} parent=87 // pred_check
          %p3557 = pneg %p411
        $region90: #{tpu_custom_call.1} parent=87 // pred_check_branch
          %3559 = sbr.rel (%p3557) target = $region92
        $region91: #{tpu_custom_call.1} parent=87 // pred_region
          %s3561 = ssub.s32 128, 128
          %3562 = vsyncadd %s3553, %s3561
          %s3563 = smul.addr %s31, 128
          %s3564 = scalar_lea.hbm %s17, %s3563
          %s3566 = sshll.u32 %s3556, 4
          %s3567 = int_to_ptr.vmem [resolvable:$true] %s3566
          %3569 = dma.vmem_to_hbm [thread:$0]  %s3567, 128, %s3564, %s3553
        $region92: #{tpu_custom_call.1} parent=87 // pred_fallthru
          _
      $region88: #{tpu_custom_call.1} parent=5 // pred_fallthru
        _
      %p3570 = scmp.le.s32.totalorder 2, %s26
      // Predicated region
      $region93: #{tpu_custom_call.1} parent=5 // pred_check
        %p3571 = pneg %p3570
      $region94: #{tpu_custom_call.1} parent=5 // pred_check_branch
        %3573 = sbr.rel (%p3571) target = $region96
      $region95: #{tpu_custom_call.1} parent=5 // pred_region
        %s3574 = ssub.s32 %s26, 2
        // Predicated region
        $region97: #{tpu_custom_call.1} parent=95 // pred_check
          %p3575 = pneg %p417
        $region98: #{tpu_custom_call.1} parent=95 // pred_check_branch
          %3577 = sbr.rel (%p3575) target = $region100
        $region99: #{tpu_custom_call.1} parent=95 // pred_region
          %s3578 = sand.u32 %s402, 1
          %s3579 = scalar_lea.sflag [#allocation3], %s3578
          %s3580 = sand.u32 %s402, 1
          %s3581 = smul.addr %s3580, 8
          %s3582 = scalar_lea.vmem [#allocation2], %s3581
          %3583 = dma.done %s3579, 128
        $region100: #{tpu_custom_call.1} parent=95 // pred_fallthru
          _
      $region96: #{tpu_custom_call.1} parent=5 // pred_fallthru
        _
    $region6: #{tpu_custom_call.1} parent=1 // loop_footer
      %s30 = sadd.s32 1, %s26
    $region7: #{tpu_custom_call.1} parent=1 // loop_footer_branch
      %25 = sbr.rel target = $region3
    $region8: #{tpu_custom_call.1} parent=1 // loop_exit
      _
    %3584 = vsyncpa [#allocation3], 1
    %s3585 = scalar_lea.sflag [#allocation3], 1
    %3586 = vsyncpa %s3585, 1

</llo_original>
